<compile_context>
chip_gen: v6e
topology: v6e:2x2x1
jax: 0.10.0
libtpu: 0.0.40
codegen_flags: <defaults>
</compile_context>

<pallas_src>
import functools

import numpy as np
import jax
import jax.numpy as jnp
from jax.experimental import pallas as pl
from jax.experimental.pallas import tpu as pltpu


# ----------------------------- Pallas kernel --------------------------------

def _bigru_kernel(gi_f_ref, gi_b_ref, lens_ref, h0_ref,
                  whh_f_ref, whh_b_ref, bhn_f_ref, bhn_b_ref,
                  out_f_ref, out_b_ref, hn_ref,
                  hf_sc, hb_sc, *, tile_t):
    """One time-tile of the fused bidirectional GRU recurrence.

    Per grid step g (serial, "arbitrary"):
      gi_f_ref : (Tt, 3, B, H) input gates for fwd tile g            (streamed)
      gi_b_ref : (Tt, 3, B, H) input gates for bwd tile nT-1-g       (streamed, reversed)
      lens_ref : (B, 1) int32 valid lengths                           (resident)
      h0_ref   : (2, B, H) initial hidden states                      (resident)
      whh_*    : (3, H, H) recurrent weights, gate-stacked            (resident)
      bhn_*    : (1, H) recurrent bias of the n gate                  (resident)
    Outputs:
      out_f/out_b : (Tt, B, H) per-direction outputs for this tile (pure stores)
      hn          : (2, B, H) final hidden state (written on the last tile)
    Scratch (persists across grid steps): hf_sc, hb_sc = (B, H) f32 carries.
    """
    g = pl.program_id(0)
    n_tiles = pl.num_programs(0)

    @pl.when(g == 0)
    def _():
        hf_sc[...] = h0_ref[0]
        hb_sc[...] = h0_ref[1]

    lens = lens_ref[...]                          # (B, 1) int32
    b_hn_f = bhn_f_ref[...].astype(jnp.float32)   # (1, H)
    b_hn_b = bhn_b_ref[...].astype(jnp.float32)

    t0_f = g * tile_t                   # first global timestep of the fwd tile
    t0_b = (n_tiles - 1 - g) * tile_t   # first global timestep of the bwd tile

    def cell(gi, h, w_ref, b_hn):
        # Weight-stationary: read the (resident) VMEM weight ref inside the
        # cell; gate selection indexes the leading (size-3) axis.
        hc = h.astype(w_ref.dtype)
        gh_r = jnp.dot(hc, w_ref[0], preferred_element_type=jnp.float32)
        gh_z = jnp.dot(hc, w_ref[1], preferred_element_type=jnp.float32)
        gh_n = jnp.dot(hc, w_ref[2], preferred_element_type=jnp.float32) + b_hn
        # b_hh_r / b_hh_z were pre-folded into gi; b_hh_n stays inside r*(.)
        r = jax.nn.sigmoid(gi[0].astype(jnp.float32) + gh_r)
        z = jax.nn.sigmoid(gi[1].astype(jnp.float32) + gh_z)
        n = jnp.tanh(gi[2].astype(jnp.float32) + r * gh_n)
        return (1.0 - z) * n + z * h

    def body(i, carry):
        # -------- forward direction, global time t0_f + i -------------------
        mask_f = (t0_f + i) < lens                              # (B, 1) bool
        h_f = hf_sc[...]
        h_f = jnp.where(mask_f, cell(gi_f_ref[i], h_f, whh_f_ref, b_hn_f), h_f)
        hf_sc[...] = h_f
        out_f_ref[i] = jnp.where(mask_f, h_f, 0.0)              # pure store

        # -------- backward direction, walks its tile top-down ---------------
        li = tile_t - 1 - i
        mask_b = (t0_b + li) < lens
        h_b = hb_sc[...]
        h_b = jnp.where(mask_b, cell(gi_b_ref[li], h_b, whh_b_ref, b_hn_b), h_b)
        hb_sc[...] = h_b
        out_b_ref[li] = jnp.where(mask_b, h_b, 0.0)             # pure store
        return carry

    # Bounded unroll: only the (small) time tile is unrolled, so the
    # independent fwd/bwd chains interleave without instruction-memory blowup.
    jax.lax.fori_loop(0, tile_t, body, 0, unroll=True)

    @pl.when(g == n_tiles - 1)
    def _():
        hn_ref[0] = hf_sc[...]
        hn_ref[1] = hb_sc[...]


# ----------------------------- module forward -------------------------------

def _gate_inputs(x_tbh, w_ih, b_ih, b_hh, compute_dtype):
    """Precompute input gates off the critical path.

    One large (T*B,H)@(H,3H) matmul; b_ih plus the r/z recurrent biases are
    folded in (NOT b_hh_n, which must be multiplied by r in the kernel).
    Returned layout is (T, 3, B, H) so gate selection in the kernel is a
    leading-axis index.
    """
    T, B, H = x_tbh.shape
    rz_fold = jnp.concatenate(
        [b_hh[:, :2 * H], jnp.zeros((1, H), jnp.float32)], axis=1)  # (1, 3H)
    gi = x_tbh.reshape(T * B, H) @ w_ih + b_ih + rz_fold            # (T*B, 3H)
    gi = gi.reshape(T, B, 3, H).transpose(0, 2, 1, 3)               # (T, 3, B, H)
    return gi.astype(compute_dtype)


def encoder_rnn_forward(params, input_seq, input_length, hidden=None, *,
                        tile_t=8, compute_dtype=jnp.bfloat16):
    """Equivalent of EncoderRNN.forward (n_layers=1, bidirectional)."""
    B, T = input_seq.shape
    emb = params["embedding"].astype(jnp.float32)
    H = emb.shape[1]

    # Gather embeddings, then one big input-gate matmul per direction.
    x_tbh = jnp.transpose(emb[input_seq], (1, 0, 2))                # (T, B, H)
    gi_f = _gate_inputs(x_tbh, params["w_ih_f"], params["b_ih_f"],
                        params["b_hh_f"], compute_dtype)
    gi_b = _gate_inputs(x_tbh, params["w_ih_b"], params["b_ih_b"],
                        params["b_hh_b"], compute_dtype)

    tile_t = max(1, min(tile_t, T))
    T_pad = ((T + tile_t - 1) // tile_t) * tile_t
    n_tiles = T_pad // tile_t
    if T_pad != T:   # padded steps are masked out (t >= len for every batch)
        pad = [(0, T_pad - T), (0, 0), (0, 0), (0, 0)]
        gi_f = jnp.pad(gi_f, pad)
        gi_b = jnp.pad(gi_b, pad)

    # Recurrent weights, gate-stacked as (3, H, H); biases: only the n gate.
    def w_stack(w):  # (H, 3H) -> (3, H, H)
        return jnp.transpose(w.reshape(H, 3, H), (1, 0, 2)).astype(compute_dtype)

    whh_f = w_stack(params["w_hh_f"])
    whh_b = w_stack(params["w_hh_b"])
    bhn_f = params["b_hh_f"][:, 2 * H:].astype(jnp.float32)         # (1, H)
    bhn_b = params["b_hh_b"][:, 2 * H:].astype(jnp.float32)

    lens = input_length.astype(jnp.int32).reshape(B, 1)
    if hidden is None:
        hidden = jnp.zeros((2, B, H), jnp.float32)
    hidden = hidden.astype(jnp.float32)

    # Size scoped VMEM to the actual tiles (double-buffered streams + residents).
    cbytes = jnp.dtype(compute_dtype).itemsize
    gi_tile = tile_t * 3 * B * H * cbytes
    out_tile = tile_t * B * H * 4
    resident = (2 * 3 * H * H * cbytes      # W_hh fwd/bwd
                + 2 * H * 4 + B * 4         # b_hn fwd/bwd, lens
                + 4 * 2 * B * H * 4)        # h0, hn, 2x scratch
    vmem_need = 2 * 2 * gi_tile + 2 * 2 * out_tile + 2 * resident
    vmem_limit = int(min(max(4 * vmem_need, 16 * 2 ** 20), 60 * 2 ** 20))

    kernel = functools.partial(_bigru_kernel, tile_t=tile_t)
    out_f, out_b, hn = pl.pallas_call(
        kernel,
        out_shape=(jax.ShapeDtypeStruct((T_pad, B, H), jnp.float32),
                   jax.ShapeDtypeStruct((T_pad, B, H), jnp.float32),
                   jax.ShapeDtypeStruct((2, B, H), jnp.float32)),
        grid=(n_tiles,),
        in_specs=[
            # streamed (double-buffered) input-gate tiles
            pl.BlockSpec((tile_t, 3, B, H), lambda g: (g, 0, 0, 0)),
            pl.BlockSpec((tile_t, 3, B, H), lambda g: (n_tiles - 1 - g, 0, 0, 0)),
            # resident small operands (constant index -> fetched once)
            pl.BlockSpec((B, 1), lambda g: (0, 0)),
            pl.BlockSpec((2, B, H), lambda g: (0, 0, 0)),
            pl.BlockSpec((3, H, H), lambda g: (0, 0, 0)),
            pl.BlockSpec((3, H, H), lambda g: (0, 0, 0)),
            pl.BlockSpec((1, H), lambda g: (0, 0)),
            pl.BlockSpec((1, H), lambda g: (0, 0)),
        ],
        out_specs=(pl.BlockSpec((tile_t, B, H), lambda g: (g, 0, 0)),
                   pl.BlockSpec((tile_t, B, H), lambda g: (n_tiles - 1 - g, 0, 0)),
                   pl.BlockSpec((2, B, H), lambda g: (0, 0, 0))),
        scratch_shapes=[pltpu.VMEM((B, H), jnp.float32),   # fwd hidden carry
                        pltpu.VMEM((B, H), jnp.float32)],  # bwd hidden carry
        compiler_params=pltpu.CompilerParams(
            dimension_semantics=("arbitrary",),
            vmem_limit_bytes=vmem_limit),
    )(gi_f, gi_b, lens, hidden, whh_f, whh_b, bhn_f, bhn_b)

    outputs = jnp.transpose(out_f[:T] + out_b[:T], (1, 0, 2))       # (B, T, H)
    return outputs, hn


# --------------------------- pure-JAX reference ------------------------------

def _gru_dir_ref(gi_tbg, lens_b1, h0, w_hh, b_hh, reverse):
    T, _, G = gi_tbg.shape
    H = G // 3

    def step(h, i):
        t = (T - 1 - i) if reverse else i
        gi = gi_tbg[t]
        gh = h @ w_hh + b_hh
        r = jax.nn.sigmoid(gi[:, :H] + gh[:, :H])
        z = jax.nn.sigmoid(gi[:, H:2 * H] + gh[:, H:2 * H])
        n = jnp.tanh(gi[:, 2 * H:] + r * gh[:, 2 * H:])
        h_new = (1.0 - z) * n + z * h
        mask = t < lens_b1
        h_upd = jnp.where(mask, h_new, h)
        out_t = jnp.where(mask, h_upd, 0.0)
        return h_upd, out_t

    hN, outs = jax.lax.scan(step, h0, jnp.arange(T))
    if reverse:
        outs = outs[::-1]
    return outs, hN


def encoder_rnn_ref(params, input_seq, input_length, hidden=None):
    emb = params["embedding"][input_seq].astype(jnp.float32)        # (B, T, H)
    B, T, H = emb.shape
    x_tbh = jnp.transpose(emb, (1, 0, 2))                           # (T, B, H)
    gi_f = x_tbh @ params["w_ih_f"] + params["b_ih_f"]              # (T, B, 3H)
    gi_b = x_tbh @ params["w_ih_b"] + params["b_ih_b"]
    lens = input_length.astype(jnp.int32).reshape(B, 1)
    if hidden is None:
        hidden = jnp.zeros((2, B, H), jnp.float32)
    out_f, hn_f = _gru_dir_ref(gi_f, lens, hidden[0],
                               params["w_hh_f"], params["b_hh_f"], False)
    out_b, hn_b = _gru_dir_ref(gi_b, lens, hidden[1],
                               params["w_hh_b"], params["b_hh_b"], True)
    return jnp.transpose(out_f + out_b, (1, 0, 2)), jnp.stack([hn_f, hn_b], 0)


# ------------------------------ param init ----------------------------------

def init_params(key, vocab_size, hidden_size):
    ks = jax.random.split(key, 9)
    H = hidden_size
    bound = 1.0 / np.sqrt(H)

    def u(k, shape):
        return jax.random.uniform(k, shape, jnp.float32, -bound, bound)

    # Gate weights stored pre-transposed and gate-concatenated (r|z|n) as
    # (H, 3H); biases as (1, 3H). The wrapper restacks W_hh as (3, H, H) and
    # folds b_ih / b_hh_{r,z} into the precomputed input-gate stream.
    return dict(
        embedding=jax.random.normal(ks[0], (vocab_size, H), jnp.float32),
        w_ih_f=u(ks[1], (H, 3 * H)),
        w_hh_f=u(ks[2], (H, 3 * H)),
        b_ih_f=u(ks[3], (1, 3 * H)),
        b_hh_f=u(ks[4], (1, 3 * H)),
        w_ih_b=u(ks[5], (H, 3 * H)),
        w_hh_b=u(ks[6], (H, 3 * H)),
        b_ih_b=u(ks[7], (1, 3 * H)),
        b_hh_b=u(ks[8], (1, 3 * H)),
    )


# --------------------------------- main --------------------------------------

if __name__ == "__main__":
    vocab_size, hidden_size, batch, seq = 20, 32, 2, 8

    key = jax.random.PRNGKey(0)
    pkey, dkey = jax.random.split(key)
    params = init_params(pkey, vocab_size, hidden_size)

    input_seq = jax.random.randint(dkey, (batch, seq), 0, vocab_size,
                                   dtype=jnp.int32)
    # pack_padded_sequence expects lengths sorted in decreasing order
    input_length = jnp.array([seq, 5], dtype=jnp.int32)

    # pad_packed_sequence trims to max(input_length)
    t_out = int(np.max(np.asarray(input_length)))
    ref_out, ref_hid = encoder_rnn_ref(params, input_seq, input_length)
    ref_out = ref_out[:, :t_out, :]

    # f32 path (tile_t=4 -> 2 time tiles: exercises the streamed/reversed grid)
    outputs, hidden = encoder_rnn_forward(params, input_seq, input_length,
                                          tile_t=4, compute_dtype=jnp.float32)
    outputs = outputs[:, :t_out, :]
    jax.block_until_ready((outputs, hidden))
    np.testing.assert_allclose(np.asarray(outputs), np.asarray(ref_out),
                               rtol=1e-5, atol=1e-5)
    np.testing.assert_allclose(np.asarray(hidden), np.asarray(ref_hid),
                               rtol=1e-5, atol=1e-5)

    # bf16 streaming path (bf16 gi stream + weights, f32 carry/accumulation)
    out16, hid16 = encoder_rnn_forward(params, input_seq, input_length,
                                       tile_t=4, compute_dtype=jnp.bfloat16)
    out16 = out16[:, :t_out, :]
    jax.block_until_ready((out16, hid16))
    np.testing.assert_allclose(np.asarray(out16), np.asarray(ref_out),
                               rtol=1e-1, atol=1e-1)
    np.testing.assert_allclose(np.asarray(hid16), np.asarray(ref_hid),
                               rtol=1e-1, atol=1e-1)

    print("KERNEL_OK")
</pallas_src>

<mosaic_0001>
module attributes {stable_mosaic.version = 11 : i64} {
  func.func @_bigru_kernel(%arg0: i32, %arg1: memref<4x3x2x32xf32, #tpu.memory_space<vmem>>, %arg2: memref<4x3x2x32xf32, #tpu.memory_space<vmem>>, %arg3: memref<2x1xi32, #tpu.memory_space<vmem>>, %arg4: memref<2x2x32xf32, #tpu.memory_space<vmem>>, %arg5: memref<3x32x32xf32, #tpu.memory_space<vmem>>, %arg6: memref<3x32x32xf32, #tpu.memory_space<vmem>>, %arg7: memref<1x32xf32, #tpu.memory_space<vmem>>, %arg8: memref<1x32xf32, #tpu.memory_space<vmem>>, %arg9: memref<4x2x32xf32, #tpu.memory_space<vmem>>, %arg10: memref<4x2x32xf32, #tpu.memory_space<vmem>>, %arg11: memref<2x2x32xf32, #tpu.memory_space<vmem>>, %arg12: memref<2x32xf32, #tpu.memory_space<vmem>>, %arg13: memref<2x32xf32, #tpu.memory_space<vmem>>) attributes {dimension_semantics = [#tpu.dimension_semantics<arbitrary>], iteration_bounds = array<i64: 2>, scalar_prefetch = 0 : i64, scratch_operands = 2 : i64, tpu.core_type = #tpu.core_type<tc>, window_params = [{transform_indices = @transform_0, window_bounds = array<i64: 4, 3, 2, 32>}, {transform_indices = @transform_1, window_bounds = array<i64: 4, 3, 2, 32>}, {pipeline_mode = #tpu.pipeline_mode<synchronous>, transform_indices = @transform_2, window_bounds = array<i64: 2, 1>}, {pipeline_mode = #tpu.pipeline_mode<synchronous>, transform_indices = @transform_3, window_bounds = array<i64: 2, 2, 32>}, {pipeline_mode = #tpu.pipeline_mode<synchronous>, transform_indices = @transform_4, window_bounds = array<i64: 3, 32, 32>}, {pipeline_mode = #tpu.pipeline_mode<synchronous>, transform_indices = @transform_5, window_bounds = array<i64: 3, 32, 32>}, {pipeline_mode = #tpu.pipeline_mode<synchronous>, transform_indices = @transform_6, window_bounds = array<i64: 1, 32>}, {pipeline_mode = #tpu.pipeline_mode<synchronous>, transform_indices = @transform_7, window_bounds = array<i64: 1, 32>}, {transform_indices = @transform_8, window_bounds = array<i64: 4, 2, 32>}, {transform_indices = @transform_9, window_bounds = array<i64: 4, 2, 32>}, {pipeline_mode = #tpu.pipeline_mode<synchronous>, transform_indices = @transform_10, window_bounds = array<i64: 2, 2, 32>}]} {
    %c0_i32 = arith.constant 0 : i32
    %0 = arith.cmpi eq, %arg0, %c0_i32 : i32
    %1 = arith.extui %0 : i1 to i32
    %c0_i32_0 = arith.constant 0 : i32
    %2 = arith.cmpi ne, %1, %c0_i32_0 : i32
    scf.if %2 {
      %c0_213 = arith.constant 0 : index
      %c0_214 = arith.constant 0 : index
      %c0_215 = arith.constant 0 : index
      %464 = vector.load %arg4[%c0_213, %c0_214, %c0_215] : memref<2x2x32xf32, #tpu.memory_space<vmem>>, vector<1x2x32xf32>
      %465 = vector.shape_cast %464 : vector<1x2x32xf32> to vector<2x32xf32>
      %c0_216 = arith.constant 0 : index
      %c0_217 = arith.constant 0 : index
      %466 = vector.load %arg12[%c0_216, %c0_217] : memref<2x32xf32, #tpu.memory_space<vmem>>, vector<2x32xf32>
      tpu.vector_store %arg12[%c0_216, %c0_217], %465 {strides = array<i32>} : memref<2x32xf32, #tpu.memory_space<vmem>>, vector<2x32xf32>,
      %c1_218 = arith.constant 1 : index
      %c0_219 = arith.constant 0 : index
      %c0_220 = arith.constant 0 : index
      %467 = vector.load %arg4[%c1_218, %c0_219, %c0_220] : memref<2x2x32xf32, #tpu.memory_space<vmem>>, vector<1x2x32xf32>
      %468 = vector.shape_cast %467 : vector<1x2x32xf32> to vector<2x32xf32>
      %c0_221 = arith.constant 0 : index
      %c0_222 = arith.constant 0 : index
      %469 = vector.load %arg13[%c0_221, %c0_222] : memref<2x32xf32, #tpu.memory_space<vmem>>, vector<2x32xf32>
      tpu.vector_store %arg13[%c0_221, %c0_222], %468 {strides = array<i32>} : memref<2x32xf32, #tpu.memory_space<vmem>>, vector<2x32xf32>,
    } else {
    }
    %c0 = arith.constant 0 : index
    %c0_1 = arith.constant 0 : index
    %3 = vector.load %arg3[%c0, %c0_1] : memref<2x1xi32, #tpu.memory_space<vmem>>, vector<2x1xi32>
    %c0_2 = arith.constant 0 : index
    %c0_3 = arith.constant 0 : index
    %4 = vector.load %arg7[%c0_2, %c0_3] : memref<1x32xf32, #tpu.memory_space<vmem>>, vector<1x32xf32>
    %c0_4 = arith.constant 0 : index
    %c0_5 = arith.constant 0 : index
    %5 = vector.load %arg8[%c0_4, %c0_5] : memref<1x32xf32, #tpu.memory_space<vmem>>, vector<1x32xf32>
    %c4_i32 = arith.constant 4 : i32
    %6 = arith.muli %arg0, %c4_i32 : i32
    %c1_i32 = arith.constant 1 : i32
    %7 = arith.subi %c1_i32, %arg0 : i32
    %c4_i32_6 = arith.constant 4 : i32
    %8 = arith.muli %7, %c4_i32_6 : i32
    %c0_i32_7 = arith.constant 0 : i32
    %9 = arith.addi %6, %c0_i32_7 : i32
    %10 = vector.broadcast %9 : i32 to vector<2x1xi32>
    %11 = arith.cmpi slt, %10, %3 : vector<2x1xi32>
    %c0_8 = arith.constant 0 : index
    %c0_9 = arith.constant 0 : index
    %12 = vector.load %arg12[%c0_8, %c0_9] : memref<2x32xf32, #tpu.memory_space<vmem>>, vector<2x32xf32>
    %13 = arith.index_cast %c0_i32_7 : i32 to index
    %c0_10 = arith.constant 0 : index
    %c0_11 = arith.constant 0 : index
    %c0_12 = arith.constant 0 : index
    %14 = vector.load %arg1[%13, %c0_10, %c0_11, %c0_12] : memref<4x3x2x32xf32, #tpu.memory_space<vmem>>, vector<1x3x2x32xf32>
    %15 = vector.shape_cast %14 : vector<1x3x2x32xf32> to vector<3x2x32xf32>
    %c0_13 = arith.constant 0 : index
    %c0_14 = arith.constant 0 : index
    %c0_15 = arith.constant 0 : index
    %16 = vector.load %arg5[%c0_13, %c0_14, %c0_15] : memref<3x32x32xf32, #tpu.memory_space<vmem>>, vector<1x32x32xf32>
    %17 = vector.shape_cast %16 : vector<1x32x32xf32> to vector<32x32xf32>
    %cst = arith.constant dense<0.000000e+00> : vector<2x32xf32>
    %18 = tpu.matmul %12, %17, %cst {dimension_numbers = #tpu.dot_dimension_numbers<[1], [0], [0], [1], [0, 0, 1, 1], [], []>} : vector<2x32xf32>, vector<32x32xf32>, vector<2x32xf32> -> vector<2x32xf32>
    %c1 = arith.constant 1 : index
    %c0_16 = arith.constant 0 : index
    %c0_17 = arith.constant 0 : index
    %19 = vector.load %arg5[%c1, %c0_16, %c0_17] : memref<3x32x32xf32, #tpu.memory_space<vmem>>, vector<1x32x32xf32>
    %20 = vector.shape_cast %19 : vector<1x32x32xf32> to vector<32x32xf32>
    %cst_18 = arith.constant dense<0.000000e+00> : vector<2x32xf32>
    %21 = tpu.matmul %12, %20, %cst_18 {dimension_numbers = #tpu.dot_dimension_numbers<[1], [0], [0], [1], [0, 0, 1, 1], [], []>} : vector<2x32xf32>, vector<32x32xf32>, vector<2x32xf32> -> vector<2x32xf32>
    %c2 = arith.constant 2 : index
    %c0_19 = arith.constant 0 : index
    %c0_20 = arith.constant 0 : index
    %22 = vector.load %arg5[%c2, %c0_19, %c0_20] : memref<3x32x32xf32, #tpu.memory_space<vmem>>, vector<1x32x32xf32>
    %23 = vector.shape_cast %22 : vector<1x32x32xf32> to vector<32x32xf32>
    %cst_21 = arith.constant dense<0.000000e+00> : vector<2x32xf32>
    %24 = tpu.matmul %12, %23, %cst_21 {dimension_numbers = #tpu.dot_dimension_numbers<[1], [0], [0], [1], [0, 0, 1, 1], [], []>} : vector<2x32xf32>, vector<32x32xf32>, vector<2x32xf32> -> vector<2x32xf32>
    %25 = vector.broadcast %4 : vector<1x32xf32> to vector<2x32xf32>
    %26 = arith.addf %24, %25 : vector<2x32xf32>
    %27 = vector.extract_strided_slice %15 {offsets = [0, 0, 0], sizes = [1, 2, 32], strides = [1, 1, 1]} : vector<3x2x32xf32> to vector<1x2x32xf32>
    %28 = vector.shape_cast %27 : vector<1x2x32xf32> to vector<2x32xf32>
    %29 = arith.addf %28, %18 : vector<2x32xf32>
    %30 = arith.negf %29 : vector<2x32xf32>
    %31 = math.exp %30 : vector<2x32xf32>
    %cst_22 = arith.constant 1.000000e+00 : f32
    %32 = vector.broadcast %cst_22 : f32 to vector<2x32xf32>
    %33 = arith.addf %32, %31 : vector<2x32xf32>
    %34 = arith.divf %32, %33 : vector<2x32xf32>
    %35 = vector.extract_strided_slice %15 {offsets = [1, 0, 0], sizes = [1, 2, 32], strides = [1, 1, 1]} : vector<3x2x32xf32> to vector<1x2x32xf32>
    %36 = vector.shape_cast %35 : vector<1x2x32xf32> to vector<2x32xf32>
    %37 = arith.addf %36, %21 : vector<2x32xf32>
    %38 = arith.negf %37 : vector<2x32xf32>
    %39 = math.exp %38 : vector<2x32xf32>
    %cst_23 = arith.constant 1.000000e+00 : f32
    %40 = vector.broadcast %cst_23 : f32 to vector<2x32xf32>
    %41 = arith.addf %40, %39 : vector<2x32xf32>
    %42 = arith.divf %40, %41 : vector<2x32xf32>
    %43 = vector.extract_strided_slice %15 {offsets = [2, 0, 0], sizes = [1, 2, 32], strides = [1, 1, 1]} : vector<3x2x32xf32> to vector<1x2x32xf32>
    %44 = vector.shape_cast %43 : vector<1x2x32xf32> to vector<2x32xf32>
    %45 = arith.mulf %34, %26 : vector<2x32xf32>
    %46 = arith.addf %44, %45 : vector<2x32xf32>
    %47 = math.tanh %46 : vector<2x32xf32>
    %cst_24 = arith.constant 1.000000e+00 : f32
    %48 = vector.broadcast %cst_24 : f32 to vector<2x32xf32>
    %49 = arith.subf %48, %42 : vector<2x32xf32>
    %50 = arith.mulf %49, %47 : vector<2x32xf32>
    %51 = arith.mulf %42, %12 : vector<2x32xf32>
    %52 = arith.addf %50, %51 : vector<2x32xf32>
    %53 = vector.shape_cast %11 : vector<2x1xi1> to vector<2x1xi1>
    %54 = vector.broadcast %53 : vector<2x1xi1> to vector<2x32xi1>
    %55 = arith.select %54, %52, %12 : vector<2x32xi1>, vector<2x32xf32>
    %c0_25 = arith.constant 0 : index
    %c0_26 = arith.constant 0 : index
    %56 = vector.load %arg12[%c0_25, %c0_26] : memref<2x32xf32, #tpu.memory_space<vmem>>, vector<2x32xf32>
    tpu.vector_store %arg12[%c0_25, %c0_26], %55 {strides = array<i32>} : memref<2x32xf32, #tpu.memory_space<vmem>>, vector<2x32xf32>,
    %cst_27 = arith.constant 0.000000e+00 : f32
    %57 = vector.shape_cast %11 : vector<2x1xi1> to vector<2x1xi1>
    %58 = vector.broadcast %57 : vector<2x1xi1> to vector<2x32xi1>
    %59 = vector.broadcast %cst_27 : f32 to vector<2x32xf32>
    %60 = arith.select %58, %55, %59 : vector<2x32xi1>, vector<2x32xf32>
    %61 = arith.index_cast %c0_i32_7 : i32 to index
    %c0_28 = arith.constant 0 : index
    %c0_29 = arith.constant 0 : index
    %62 = vector.load %arg9[%61, %c0_28, %c0_29] : memref<4x2x32xf32, #tpu.memory_space<vmem>>, vector<1x2x32xf32>
    %63 = vector.shape_cast %62 : vector<1x2x32xf32> to vector<2x32xf32>
    %64 = vector.shape_cast %60 : vector<2x32xf32> to vector<1x2x32xf32>
    tpu.vector_store %arg9[%61, %c0_28, %c0_29], %64 {strides = array<i32>} : memref<4x2x32xf32, #tpu.memory_space<vmem>>, vector<1x2x32xf32>,
    %c3_i32 = arith.constant 3 : i32
    %65 = arith.subi %c3_i32, %c0_i32_7 : i32
    %66 = arith.addi %8, %65 : i32
    %67 = vector.broadcast %66 : i32 to vector<2x1xi32>
    %68 = arith.cmpi slt, %67, %3 : vector<2x1xi32>
    %c0_30 = arith.constant 0 : index
    %c0_31 = arith.constant 0 : index
    %69 = vector.load %arg13[%c0_30, %c0_31] : memref<2x32xf32, #tpu.memory_space<vmem>>, vector<2x32xf32>
    %70 = arith.index_cast %65 : i32 to index
    %c0_32 = arith.constant 0 : index
    %c0_33 = arith.constant 0 : index
    %c0_34 = arith.constant 0 : index
    %71 = vector.load %arg2[%70, %c0_32, %c0_33, %c0_34] : memref<4x3x2x32xf32, #tpu.memory_space<vmem>>, vector<1x3x2x32xf32>
    %72 = vector.shape_cast %71 : vector<1x3x2x32xf32> to vector<3x2x32xf32>
    %c0_35 = arith.constant 0 : index
    %c0_36 = arith.constant 0 : index
    %c0_37 = arith.constant 0 : index
    %73 = vector.load %arg6[%c0_35, %c0_36, %c0_37] : memref<3x32x32xf32, #tpu.memory_space<vmem>>, vector<1x32x32xf32>
    %74 = vector.shape_cast %73 : vector<1x32x32xf32> to vector<32x32xf32>
    %cst_38 = arith.constant dense<0.000000e+00> : vector<2x32xf32>
    %75 = tpu.matmul %69, %74, %cst_38 {dimension_numbers = #tpu.dot_dimension_numbers<[1], [0], [0], [1], [0, 0, 1, 1], [], []>} : vector<2x32xf32>, vector<32x32xf32>, vector<2x32xf32> -> vector<2x32xf32>
    %c1_39 = arith.constant 1 : index
    %c0_40 = arith.constant 0 : index
    %c0_41 = arith.constant 0 : index
    %76 = vector.load %arg6[%c1_39, %c0_40, %c0_41] : memref<3x32x32xf32, #tpu.memory_space<vmem>>, vector<1x32x32xf32>
    %77 = vector.shape_cast %76 : vector<1x32x32xf32> to vector<32x32xf32>
    %cst_42 = arith.constant dense<0.000000e+00> : vector<2x32xf32>
    %78 = tpu.matmul %69, %77, %cst_42 {dimension_numbers = #tpu.dot_dimension_numbers<[1], [0], [0], [1], [0, 0, 1, 1], [], []>} : vector<2x32xf32>, vector<32x32xf32>, vector<2x32xf32> -> vector<2x32xf32>
    %c2_43 = arith.constant 2 : index
    %c0_44 = arith.constant 0 : index
    %c0_45 = arith.constant 0 : index
    %79 = vector.load %arg6[%c2_43, %c0_44, %c0_45] : memref<3x32x32xf32, #tpu.memory_space<vmem>>, vector<1x32x32xf32>
    %80 = vector.shape_cast %79 : vector<1x32x32xf32> to vector<32x32xf32>
    %cst_46 = arith.constant dense<0.000000e+00> : vector<2x32xf32>
    %81 = tpu.matmul %69, %80, %cst_46 {dimension_numbers = #tpu.dot_dimension_numbers<[1], [0], [0], [1], [0, 0, 1, 1], [], []>} : vector<2x32xf32>, vector<32x32xf32>, vector<2x32xf32> -> vector<2x32xf32>
    %82 = vector.broadcast %5 : vector<1x32xf32> to vector<2x32xf32>
    %83 = arith.addf %81, %82 : vector<2x32xf32>
    %84 = vector.extract_strided_slice %72 {offsets = [0, 0, 0], sizes = [1, 2, 32], strides = [1, 1, 1]} : vector<3x2x32xf32> to vector<1x2x32xf32>
    %85 = vector.shape_cast %84 : vector<1x2x32xf32> to vector<2x32xf32>
    %86 = arith.addf %85, %75 : vector<2x32xf32>
    %87 = arith.negf %86 : vector<2x32xf32>
    %88 = math.exp %87 : vector<2x32xf32>
    %cst_47 = arith.constant 1.000000e+00 : f32
    %89 = vector.broadcast %cst_47 : f32 to vector<2x32xf32>
    %90 = arith.addf %89, %88 : vector<2x32xf32>
    %91 = arith.divf %89, %90 : vector<2x32xf32>
    %92 = vector.extract_strided_slice %72 {offsets = [1, 0, 0], sizes = [1, 2, 32], strides = [1, 1, 1]} : vector<3x2x32xf32> to vector<1x2x32xf32>
    %93 = vector.shape_cast %92 : vector<1x2x32xf32> to vector<2x32xf32>
    %94 = arith.addf %93, %78 : vector<2x32xf32>
    %95 = arith.negf %94 : vector<2x32xf32>
    %96 = math.exp %95 : vector<2x32xf32>
    %cst_48 = arith.constant 1.000000e+00 : f32
    %97 = vector.broadcast %cst_48 : f32 to vector<2x32xf32>
    %98 = arith.addf %97, %96 : vector<2x32xf32>
    %99 = arith.divf %97, %98 : vector<2x32xf32>
    %100 = vector.extract_strided_slice %72 {offsets = [2, 0, 0], sizes = [1, 2, 32], strides = [1, 1, 1]} : vector<3x2x32xf32> to vector<1x2x32xf32>
    %101 = vector.shape_cast %100 : vector<1x2x32xf32> to vector<2x32xf32>
    %102 = arith.mulf %91, %83 : vector<2x32xf32>
    %103 = arith.addf %101, %102 : vector<2x32xf32>
    %104 = math.tanh %103 : vector<2x32xf32>
    %cst_49 = arith.constant 1.000000e+00 : f32
    %105 = vector.broadcast %cst_49 : f32 to vector<2x32xf32>
    %106 = arith.subf %105, %99 : vector<2x32xf32>
    %107 = arith.mulf %106, %104 : vector<2x32xf32>
    %108 = arith.mulf %99, %69 : vector<2x32xf32>
    %109 = arith.addf %107, %108 : vector<2x32xf32>
    %110 = vector.shape_cast %68 : vector<2x1xi1> to vector<2x1xi1>
    %111 = vector.broadcast %110 : vector<2x1xi1> to vector<2x32xi1>
    %112 = arith.select %111, %109, %69 : vector<2x32xi1>, vector<2x32xf32>
    %c0_50 = arith.constant 0 : index
    %c0_51 = arith.constant 0 : index
    %113 = vector.load %arg13[%c0_50, %c0_51] : memref<2x32xf32, #tpu.memory_space<vmem>>, vector<2x32xf32>
    tpu.vector_store %arg13[%c0_50, %c0_51], %112 {strides = array<i32>} : memref<2x32xf32, #tpu.memory_space<vmem>>, vector<2x32xf32>,
    %cst_52 = arith.constant 0.000000e+00 : f32
    %114 = vector.shape_cast %68 : vector<2x1xi1> to vector<2x1xi1>
    %115 = vector.broadcast %114 : vector<2x1xi1> to vector<2x32xi1>
    %116 = vector.broadcast %cst_52 : f32 to vector<2x32xf32>
    %117 = arith.select %115, %112, %116 : vector<2x32xi1>, vector<2x32xf32>
    %118 = arith.index_cast %65 : i32 to index
    %c0_53 = arith.constant 0 : index
    %c0_54 = arith.constant 0 : index
    %119 = vector.load %arg10[%118, %c0_53, %c0_54] : memref<4x2x32xf32, #tpu.memory_space<vmem>>, vector<1x2x32xf32>
    %120 = vector.shape_cast %119 : vector<1x2x32xf32> to vector<2x32xf32>
    %121 = vector.shape_cast %117 : vector<2x32xf32> to vector<1x2x32xf32>
    tpu.vector_store %arg10[%118, %c0_53, %c0_54], %121 {strides = array<i32>} : memref<4x2x32xf32, #tpu.memory_space<vmem>>, vector<1x2x32xf32>,
    %c1_i32_55 = arith.constant 1 : i32
    %122 = arith.addi %6, %c1_i32_55 : i32
    %123 = vector.broadcast %122 : i32 to vector<2x1xi32>
    %124 = arith.cmpi slt, %123, %3 : vector<2x1xi32>
    %c0_56 = arith.constant 0 : index
    %c0_57 = arith.constant 0 : index
    %125 = vector.load %arg12[%c0_56, %c0_57] : memref<2x32xf32, #tpu.memory_space<vmem>>, vector<2x32xf32>
    %126 = arith.index_cast %c1_i32_55 : i32 to index
    %c0_58 = arith.constant 0 : index
    %c0_59 = arith.constant 0 : index
    %c0_60 = arith.constant 0 : index
    %127 = vector.load %arg1[%126, %c0_58, %c0_59, %c0_60] : memref<4x3x2x32xf32, #tpu.memory_space<vmem>>, vector<1x3x2x32xf32>
    %128 = vector.shape_cast %127 : vector<1x3x2x32xf32> to vector<3x2x32xf32>
    %c0_61 = arith.constant 0 : index
    %c0_62 = arith.constant 0 : index
    %c0_63 = arith.constant 0 : index
    %129 = vector.load %arg5[%c0_61, %c0_62, %c0_63] : memref<3x32x32xf32, #tpu.memory_space<vmem>>, vector<1x32x32xf32>
    %130 = vector.shape_cast %129 : vector<1x32x32xf32> to vector<32x32xf32>
    %cst_64 = arith.constant dense<0.000000e+00> : vector<2x32xf32>
    %131 = tpu.matmul %125, %130, %cst_64 {dimension_numbers = #tpu.dot_dimension_numbers<[1], [0], [0], [1], [0, 0, 1, 1], [], []>} : vector<2x32xf32>, vector<32x32xf32>, vector<2x32xf32> -> vector<2x32xf32>
    %c1_65 = arith.constant 1 : index
    %c0_66 = arith.constant 0 : index
    %c0_67 = arith.constant 0 : index
    %132 = vector.load %arg5[%c1_65, %c0_66, %c0_67] : memref<3x32x32xf32, #tpu.memory_space<vmem>>, vector<1x32x32xf32>
    %133 = vector.shape_cast %132 : vector<1x32x32xf32> to vector<32x32xf32>
    %cst_68 = arith.constant dense<0.000000e+00> : vector<2x32xf32>
    %134 = tpu.matmul %125, %133, %cst_68 {dimension_numbers = #tpu.dot_dimension_numbers<[1], [0], [0], [1], [0, 0, 1, 1], [], []>} : vector<2x32xf32>, vector<32x32xf32>, vector<2x32xf32> -> vector<2x32xf32>
    %c2_69 = arith.constant 2 : index
    %c0_70 = arith.constant 0 : index
    %c0_71 = arith.constant 0 : index
    %135 = vector.load %arg5[%c2_69, %c0_70, %c0_71] : memref<3x32x32xf32, #tpu.memory_space<vmem>>, vector<1x32x32xf32>
    %136 = vector.shape_cast %135 : vector<1x32x32xf32> to vector<32x32xf32>
    %cst_72 = arith.constant dense<0.000000e+00> : vector<2x32xf32>
    %137 = tpu.matmul %125, %136, %cst_72 {dimension_numbers = #tpu.dot_dimension_numbers<[1], [0], [0], [1], [0, 0, 1, 1], [], []>} : vector<2x32xf32>, vector<32x32xf32>, vector<2x32xf32> -> vector<2x32xf32>
    %138 = vector.broadcast %4 : vector<1x32xf32> to vector<2x32xf32>
    %139 = arith.addf %137, %138 : vector<2x32xf32>
    %140 = vector.extract_strided_slice %128 {offsets = [0, 0, 0], sizes = [1, 2, 32], strides = [1, 1, 1]} : vector<3x2x32xf32> to vector<1x2x32xf32>
    %141 = vector.shape_cast %140 : vector<1x2x32xf32> to vector<2x32xf32>
    %142 = arith.addf %141, %131 : vector<2x32xf32>
    %143 = arith.negf %142 : vector<2x32xf32>
    %144 = math.exp %143 : vector<2x32xf32>
    %cst_73 = arith.constant 1.000000e+00 : f32
    %145 = vector.broadcast %cst_73 : f32 to vector<2x32xf32>
    %146 = arith.addf %145, %144 : vector<2x32xf32>
    %147 = arith.divf %145, %146 : vector<2x32xf32>
    %148 = vector.extract_strided_slice %128 {offsets = [1, 0, 0], sizes = [1, 2, 32], strides = [1, 1, 1]} : vector<3x2x32xf32> to vector<1x2x32xf32>
    %149 = vector.shape_cast %148 : vector<1x2x32xf32> to vector<2x32xf32>
    %150 = arith.addf %149, %134 : vector<2x32xf32>
    %151 = arith.negf %150 : vector<2x32xf32>
    %152 = math.exp %151 : vector<2x32xf32>
    %cst_74 = arith.constant 1.000000e+00 : f32
    %153 = vector.broadcast %cst_74 : f32 to vector<2x32xf32>
    %154 = arith.addf %153, %152 : vector<2x32xf32>
    %155 = arith.divf %153, %154 : vector<2x32xf32>
    %156 = vector.extract_strided_slice %128 {offsets = [2, 0, 0], sizes = [1, 2, 32], strides = [1, 1, 1]} : vector<3x2x32xf32> to vector<1x2x32xf32>
    %157 = vector.shape_cast %156 : vector<1x2x32xf32> to vector<2x32xf32>
    %158 = arith.mulf %147, %139 : vector<2x32xf32>
    %159 = arith.addf %157, %158 : vector<2x32xf32>
    %160 = math.tanh %159 : vector<2x32xf32>
    %cst_75 = arith.constant 1.000000e+00 : f32
    %161 = vector.broadcast %cst_75 : f32 to vector<2x32xf32>
    %162 = arith.subf %161, %155 : vector<2x32xf32>
    %163 = arith.mulf %162, %160 : vector<2x32xf32>
    %164 = arith.mulf %155, %125 : vector<2x32xf32>
    %165 = arith.addf %163, %164 : vector<2x32xf32>
    %166 = vector.shape_cast %124 : vector<2x1xi1> to vector<2x1xi1>
    %167 = vector.broadcast %166 : vector<2x1xi1> to vector<2x32xi1>
    %168 = arith.select %167, %165, %125 : vector<2x32xi1>, vector<2x32xf32>
    %c0_76 = arith.constant 0 : index
    %c0_77 = arith.constant 0 : index
    %169 = vector.load %arg12[%c0_76, %c0_77] : memref<2x32xf32, #tpu.memory_space<vmem>>, vector<2x32xf32>
    tpu.vector_store %arg12[%c0_76, %c0_77], %168 {strides = array<i32>} : memref<2x32xf32, #tpu.memory_space<vmem>>, vector<2x32xf32>,
    %cst_78 = arith.constant 0.000000e+00 : f32
    %170 = vector.shape_cast %124 : vector<2x1xi1> to vector<2x1xi1>
    %171 = vector.broadcast %170 : vector<2x1xi1> to vector<2x32xi1>
    %172 = vector.broadcast %cst_78 : f32 to vector<2x32xf32>
    %173 = arith.select %171, %168, %172 : vector<2x32xi1>, vector<2x32xf32>
    %174 = arith.index_cast %c1_i32_55 : i32 to index
    %c0_79 = arith.constant 0 : index
    %c0_80 = arith.constant 0 : index
    %175 = vector.load %arg9[%174, %c0_79, %c0_80] : memref<4x2x32xf32, #tpu.memory_space<vmem>>, vector<1x2x32xf32>
    %176 = vector.shape_cast %175 : vector<1x2x32xf32> to vector<2x32xf32>
    %177 = vector.shape_cast %173 : vector<2x32xf32> to vector<1x2x32xf32>
    tpu.vector_store %arg9[%174, %c0_79, %c0_80], %177 {strides = array<i32>} : memref<4x2x32xf32, #tpu.memory_space<vmem>>, vector<1x2x32xf32>,
    %c3_i32_81 = arith.constant 3 : i32
    %178 = arith.subi %c3_i32_81, %c1_i32_55 : i32
    %179 = arith.addi %8, %178 : i32
    %180 = vector.broadcast %179 : i32 to vector<2x1xi32>
    %181 = arith.cmpi slt, %180, %3 : vector<2x1xi32>
    %c0_82 = arith.constant 0 : index
    %c0_83 = arith.constant 0 : index
    %182 = vector.load %arg13[%c0_82, %c0_83] : memref<2x32xf32, #tpu.memory_space<vmem>>, vector<2x32xf32>
    %183 = arith.index_cast %178 : i32 to index
    %c0_84 = arith.constant 0 : index
    %c0_85 = arith.constant 0 : index
    %c0_86 = arith.constant 0 : index
    %184 = vector.load %arg2[%183, %c0_84, %c0_85, %c0_86] : memref<4x3x2x32xf32, #tpu.memory_space<vmem>>, vector<1x3x2x32xf32>
    %185 = vector.shape_cast %184 : vector<1x3x2x32xf32> to vector<3x2x32xf32>
    %c0_87 = arith.constant 0 : index
    %c0_88 = arith.constant 0 : index
    %c0_89 = arith.constant 0 : index
    %186 = vector.load %arg6[%c0_87, %c0_88, %c0_89] : memref<3x32x32xf32, #tpu.memory_space<vmem>>, vector<1x32x32xf32>
    %187 = vector.shape_cast %186 : vector<1x32x32xf32> to vector<32x32xf32>
    %cst_90 = arith.constant dense<0.000000e+00> : vector<2x32xf32>
    %188 = tpu.matmul %182, %187, %cst_90 {dimension_numbers = #tpu.dot_dimension_numbers<[1], [0], [0], [1], [0, 0, 1, 1], [], []>} : vector<2x32xf32>, vector<32x32xf32>, vector<2x32xf32> -> vector<2x32xf32>
    %c1_91 = arith.constant 1 : index
    %c0_92 = arith.constant 0 : index
    %c0_93 = arith.constant 0 : index
    %189 = vector.load %arg6[%c1_91, %c0_92, %c0_93] : memref<3x32x32xf32, #tpu.memory_space<vmem>>, vector<1x32x32xf32>
    %190 = vector.shape_cast %189 : vector<1x32x32xf32> to vector<32x32xf32>
    %cst_94 = arith.constant dense<0.000000e+00> : vector<2x32xf32>
    %191 = tpu.matmul %182, %190, %cst_94 {dimension_numbers = #tpu.dot_dimension_numbers<[1], [0], [0], [1], [0, 0, 1, 1], [], []>} : vector<2x32xf32>, vector<32x32xf32>, vector<2x32xf32> -> vector<2x32xf32>
    %c2_95 = arith.constant 2 : index
    %c0_96 = arith.constant 0 : index
    %c0_97 = arith.constant 0 : index
    %192 = vector.load %arg6[%c2_95, %c0_96, %c0_97] : memref<3x32x32xf32, #tpu.memory_space<vmem>>, vector<1x32x32xf32>
    %193 = vector.shape_cast %192 : vector<1x32x32xf32> to vector<32x32xf32>
    %cst_98 = arith.constant dense<0.000000e+00> : vector<2x32xf32>
    %194 = tpu.matmul %182, %193, %cst_98 {dimension_numbers = #tpu.dot_dimension_numbers<[1], [0], [0], [1], [0, 0, 1, 1], [], []>} : vector<2x32xf32>, vector<32x32xf32>, vector<2x32xf32> -> vector<2x32xf32>
    %195 = vector.broadcast %5 : vector<1x32xf32> to vector<2x32xf32>
    %196 = arith.addf %194, %195 : vector<2x32xf32>
    %197 = vector.extract_strided_slice %185 {offsets = [0, 0, 0], sizes = [1, 2, 32], strides = [1, 1, 1]} : vector<3x2x32xf32> to vector<1x2x32xf32>
    %198 = vector.shape_cast %197 : vector<1x2x32xf32> to vector<2x32xf32>
    %199 = arith.addf %198, %188 : vector<2x32xf32>
    %200 = arith.negf %199 : vector<2x32xf32>
    %201 = math.exp %200 : vector<2x32xf32>
    %cst_99 = arith.constant 1.000000e+00 : f32
    %202 = vector.broadcast %cst_99 : f32 to vector<2x32xf32>
    %203 = arith.addf %202, %201 : vector<2x32xf32>
    %204 = arith.divf %202, %203 : vector<2x32xf32>
    %205 = vector.extract_strided_slice %185 {offsets = [1, 0, 0], sizes = [1, 2, 32], strides = [1, 1, 1]} : vector<3x2x32xf32> to vector<1x2x32xf32>
    %206 = vector.shape_cast %205 : vector<1x2x32xf32> to vector<2x32xf32>
    %207 = arith.addf %206, %191 : vector<2x32xf32>
    %208 = arith.negf %207 : vector<2x32xf32>
    %209 = math.exp %208 : vector<2x32xf32>
    %cst_100 = arith.constant 1.000000e+00 : f32
    %210 = vector.broadcast %cst_100 : f32 to vector<2x32xf32>
    %211 = arith.addf %210, %209 : vector<2x32xf32>
    %212 = arith.divf %210, %211 : vector<2x32xf32>
    %213 = vector.extract_strided_slice %185 {offsets = [2, 0, 0], sizes = [1, 2, 32], strides = [1, 1, 1]} : vector<3x2x32xf32> to vector<1x2x32xf32>
    %214 = vector.shape_cast %213 : vector<1x2x32xf32> to vector<2x32xf32>
    %215 = arith.mulf %204, %196 : vector<2x32xf32>
    %216 = arith.addf %214, %215 : vector<2x32xf32>
    %217 = math.tanh %216 : vector<2x32xf32>
    %cst_101 = arith.constant 1.000000e+00 : f32
    %218 = vector.broadcast %cst_101 : f32 to vector<2x32xf32>
    %219 = arith.subf %218, %212 : vector<2x32xf32>
    %220 = arith.mulf %219, %217 : vector<2x32xf32>
    %221 = arith.mulf %212, %182 : vector<2x32xf32>
    %222 = arith.addf %220, %221 : vector<2x32xf32>
    %223 = vector.shape_cast %181 : vector<2x1xi1> to vector<2x1xi1>
    %224 = vector.broadcast %223 : vector<2x1xi1> to vector<2x32xi1>
    %225 = arith.select %224, %222, %182 : vector<2x32xi1>, vector<2x32xf32>
    %c0_102 = arith.constant 0 : index
    %c0_103 = arith.constant 0 : index
    %226 = vector.load %arg13[%c0_102, %c0_103] : memref<2x32xf32, #tpu.memory_space<vmem>>, vector<2x32xf32>
    tpu.vector_store %arg13[%c0_102, %c0_103], %225 {strides = array<i32>} : memref<2x32xf32, #tpu.memory_space<vmem>>, vector<2x32xf32>,
    %cst_104 = arith.constant 0.000000e+00 : f32
    %227 = vector.shape_cast %181 : vector<2x1xi1> to vector<2x1xi1>
    %228 = vector.broadcast %227 : vector<2x1xi1> to vector<2x32xi1>
    %229 = vector.broadcast %cst_104 : f32 to vector<2x32xf32>
    %230 = arith.select %228, %225, %229 : vector<2x32xi1>, vector<2x32xf32>
    %231 = arith.index_cast %178 : i32 to index
    %c0_105 = arith.constant 0 : index
    %c0_106 = arith.constant 0 : index
    %232 = vector.load %arg10[%231, %c0_105, %c0_106] : memref<4x2x32xf32, #tpu.memory_space<vmem>>, vector<1x2x32xf32>
    %233 = vector.shape_cast %232 : vector<1x2x32xf32> to vector<2x32xf32>
    %234 = vector.shape_cast %230 : vector<2x32xf32> to vector<1x2x32xf32>
    tpu.vector_store %arg10[%231, %c0_105, %c0_106], %234 {strides = array<i32>} : memref<4x2x32xf32, #tpu.memory_space<vmem>>, vector<1x2x32xf32>,
    %c2_i32 = arith.constant 2 : i32
    %235 = arith.addi %6, %c2_i32 : i32
    %236 = vector.broadcast %235 : i32 to vector<2x1xi32>
    %237 = arith.cmpi slt, %236, %3 : vector<2x1xi32>
    %c0_107 = arith.constant 0 : index
    %c0_108 = arith.constant 0 : index
    %238 = vector.load %arg12[%c0_107, %c0_108] : memref<2x32xf32, #tpu.memory_space<vmem>>, vector<2x32xf32>
    %239 = arith.index_cast %c2_i32 : i32 to index
    %c0_109 = arith.constant 0 : index
    %c0_110 = arith.constant 0 : index
    %c0_111 = arith.constant 0 : index
    %240 = vector.load %arg1[%239, %c0_109, %c0_110, %c0_111] : memref<4x3x2x32xf32, #tpu.memory_space<vmem>>, vector<1x3x2x32xf32>
    %241 = vector.shape_cast %240 : vector<1x3x2x32xf32> to vector<3x2x32xf32>
    %c0_112 = arith.constant 0 : index
    %c0_113 = arith.constant 0 : index
    %c0_114 = arith.constant 0 : index
    %242 = vector.load %arg5[%c0_112, %c0_113, %c0_114] : memref<3x32x32xf32, #tpu.memory_space<vmem>>, vector<1x32x32xf32>
    %243 = vector.shape_cast %242 : vector<1x32x32xf32> to vector<32x32xf32>
    %cst_115 = arith.constant dense<0.000000e+00> : vector<2x32xf32>
    %244 = tpu.matmul %238, %243, %cst_115 {dimension_numbers = #tpu.dot_dimension_numbers<[1], [0], [0], [1], [0, 0, 1, 1], [], []>} : vector<2x32xf32>, vector<32x32xf32>, vector<2x32xf32> -> vector<2x32xf32>
    %c1_116 = arith.constant 1 : index
    %c0_117 = arith.constant 0 : index
    %c0_118 = arith.constant 0 : index
    %245 = vector.load %arg5[%c1_116, %c0_117, %c0_118] : memref<3x32x32xf32, #tpu.memory_space<vmem>>, vector<1x32x32xf32>
    %246 = vector.shape_cast %245 : vector<1x32x32xf32> to vector<32x32xf32>
    %cst_119 = arith.constant dense<0.000000e+00> : vector<2x32xf32>
    %247 = tpu.matmul %238, %246, %cst_119 {dimension_numbers = #tpu.dot_dimension_numbers<[1], [0], [0], [1], [0, 0, 1, 1], [], []>} : vector<2x32xf32>, vector<32x32xf32>, vector<2x32xf32> -> vector<2x32xf32>
    %c2_120 = arith.constant 2 : index
    %c0_121 = arith.constant 0 : index
    %c0_122 = arith.constant 0 : index
    %248 = vector.load %arg5[%c2_120, %c0_121, %c0_122] : memref<3x32x32xf32, #tpu.memory_space<vmem>>, vector<1x32x32xf32>
    %249 = vector.shape_cast %248 : vector<1x32x32xf32> to vector<32x32xf32>
    %cst_123 = arith.constant dense<0.000000e+00> : vector<2x32xf32>
    %250 = tpu.matmul %238, %249, %cst_123 {dimension_numbers = #tpu.dot_dimension_numbers<[1], [0], [0], [1], [0, 0, 1, 1], [], []>} : vector<2x32xf32>, vector<32x32xf32>, vector<2x32xf32> -> vector<2x32xf32>
    %251 = vector.broadcast %4 : vector<1x32xf32> to vector<2x32xf32>
    %252 = arith.addf %250, %251 : vector<2x32xf32>
    %253 = vector.extract_strided_slice %241 {offsets = [0, 0, 0], sizes = [1, 2, 32], strides = [1, 1, 1]} : vector<3x2x32xf32> to vector<1x2x32xf32>
    %254 = vector.shape_cast %253 : vector<1x2x32xf32> to vector<2x32xf32>
    %255 = arith.addf %254, %244 : vector<2x32xf32>
    %256 = arith.negf %255 : vector<2x32xf32>
    %257 = math.exp %256 : vector<2x32xf32>
    %cst_124 = arith.constant 1.000000e+00 : f32
    %258 = vector.broadcast %cst_124 : f32 to vector<2x32xf32>
    %259 = arith.addf %258, %257 : vector<2x32xf32>
    %260 = arith.divf %258, %259 : vector<2x32xf32>
    %261 = vector.extract_strided_slice %241 {offsets = [1, 0, 0], sizes = [1, 2, 32], strides = [1, 1, 1]} : vector<3x2x32xf32> to vector<1x2x32xf32>
    %262 = vector.shape_cast %261 : vector<1x2x32xf32> to vector<2x32xf32>
    %263 = arith.addf %262, %247 : vector<2x32xf32>
    %264 = arith.negf %263 : vector<2x32xf32>
    %265 = math.exp %264 : vector<2x32xf32>
    %cst_125 = arith.constant 1.000000e+00 : f32
    %266 = vector.broadcast %cst_125 : f32 to vector<2x32xf32>
    %267 = arith.addf %266, %265 : vector<2x32xf32>
    %268 = arith.divf %266, %267 : vector<2x32xf32>
    %269 = vector.extract_strided_slice %241 {offsets = [2, 0, 0], sizes = [1, 2, 32], strides = [1, 1, 1]} : vector<3x2x32xf32> to vector<1x2x32xf32>
    %270 = vector.shape_cast %269 : vector<1x2x32xf32> to vector<2x32xf32>
    %271 = arith.mulf %260, %252 : vector<2x32xf32>
    %272 = arith.addf %270, %271 : vector<2x32xf32>
    %273 = math.tanh %272 : vector<2x32xf32>
    %cst_126 = arith.constant 1.000000e+00 : f32
    %274 = vector.broadcast %cst_126 : f32 to vector<2x32xf32>
    %275 = arith.subf %274, %268 : vector<2x32xf32>
    %276 = arith.mulf %275, %273 : vector<2x32xf32>
    %277 = arith.mulf %268, %238 : vector<2x32xf32>
    %278 = arith.addf %276, %277 : vector<2x32xf32>
    %279 = vector.shape_cast %237 : vector<2x1xi1> to vector<2x1xi1>
    %280 = vector.broadcast %279 : vector<2x1xi1> to vector<2x32xi1>
    %281 = arith.select %280, %278, %238 : vector<2x32xi1>, vector<2x32xf32>
    %c0_127 = arith.constant 0 : index
    %c0_128 = arith.constant 0 : index
    %282 = vector.load %arg12[%c0_127, %c0_128] : memref<2x32xf32, #tpu.memory_space<vmem>>, vector<2x32xf32>
    tpu.vector_store %arg12[%c0_127, %c0_128], %281 {strides = array<i32>} : memref<2x32xf32, #tpu.memory_space<vmem>>, vector<2x32xf32>,
    %cst_129 = arith.constant 0.000000e+00 : f32
    %283 = vector.shape_cast %237 : vector<2x1xi1> to vector<2x1xi1>
    %284 = vector.broadcast %283 : vector<2x1xi1> to vector<2x32xi1>
    %285 = vector.broadcast %cst_129 : f32 to vector<2x32xf32>
    %286 = arith.select %284, %281, %285 : vector<2x32xi1>, vector<2x32xf32>
    %287 = arith.index_cast %c2_i32 : i32 to index
    %c0_130 = arith.constant 0 : index
    %c0_131 = arith.constant 0 : index
    %288 = vector.load %arg9[%287, %c0_130, %c0_131] : memref<4x2x32xf32, #tpu.memory_space<vmem>>, vector<1x2x32xf32>
    %289 = vector.shape_cast %288 : vector<1x2x32xf32> to vector<2x32xf32>
    %290 = vector.shape_cast %286 : vector<2x32xf32> to vector<1x2x32xf32>
    tpu.vector_store %arg9[%287, %c0_130, %c0_131], %290 {strides = array<i32>} : memref<4x2x32xf32, #tpu.memory_space<vmem>>, vector<1x2x32xf32>,
    %c3_i32_132 = arith.constant 3 : i32
    %291 = arith.subi %c3_i32_132, %c2_i32 : i32
    %292 = arith.addi %8, %291 : i32
    %293 = vector.broadcast %292 : i32 to vector<2x1xi32>
    %294 = arith.cmpi slt, %293, %3 : vector<2x1xi32>
    %c0_133 = arith.constant 0 : index
    %c0_134 = arith.constant 0 : index
    %295 = vector.load %arg13[%c0_133, %c0_134] : memref<2x32xf32, #tpu.memory_space<vmem>>, vector<2x32xf32>
    %296 = arith.index_cast %291 : i32 to index
    %c0_135 = arith.constant 0 : index
    %c0_136 = arith.constant 0 : index
    %c0_137 = arith.constant 0 : index
    %297 = vector.load %arg2[%296, %c0_135, %c0_136, %c0_137] : memref<4x3x2x32xf32, #tpu.memory_space<vmem>>, vector<1x3x2x32xf32>
    %298 = vector.shape_cast %297 : vector<1x3x2x32xf32> to vector<3x2x32xf32>
    %c0_138 = arith.constant 0 : index
    %c0_139 = arith.constant 0 : index
    %c0_140 = arith.constant 0 : index
    %299 = vector.load %arg6[%c0_138, %c0_139, %c0_140] : memref<3x32x32xf32, #tpu.memory_space<vmem>>, vector<1x32x32xf32>
    %300 = vector.shape_cast %299 : vector<1x32x32xf32> to vector<32x32xf32>
    %cst_141 = arith.constant dense<0.000000e+00> : vector<2x32xf32>
    %301 = tpu.matmul %295, %300, %cst_141 {dimension_numbers = #tpu.dot_dimension_numbers<[1], [0], [0], [1], [0, 0, 1, 1], [], []>} : vector<2x32xf32>, vector<32x32xf32>, vector<2x32xf32> -> vector<2x32xf32>
    %c1_142 = arith.constant 1 : index
    %c0_143 = arith.constant 0 : index
    %c0_144 = arith.constant 0 : index
    %302 = vector.load %arg6[%c1_142, %c0_143, %c0_144] : memref<3x32x32xf32, #tpu.memory_space<vmem>>, vector<1x32x32xf32>
    %303 = vector.shape_cast %302 : vector<1x32x32xf32> to vector<32x32xf32>
    %cst_145 = arith.constant dense<0.000000e+00> : vector<2x32xf32>
    %304 = tpu.matmul %295, %303, %cst_145 {dimension_numbers = #tpu.dot_dimension_numbers<[1], [0], [0], [1], [0, 0, 1, 1], [], []>} : vector<2x32xf32>, vector<32x32xf32>, vector<2x32xf32> -> vector<2x32xf32>
    %c2_146 = arith.constant 2 : index
    %c0_147 = arith.constant 0 : index
    %c0_148 = arith.constant 0 : index
    %305 = vector.load %arg6[%c2_146, %c0_147, %c0_148] : memref<3x32x32xf32, #tpu.memory_space<vmem>>, vector<1x32x32xf32>
    %306 = vector.shape_cast %305 : vector<1x32x32xf32> to vector<32x32xf32>
    %cst_149 = arith.constant dense<0.000000e+00> : vector<2x32xf32>
    %307 = tpu.matmul %295, %306, %cst_149 {dimension_numbers = #tpu.dot_dimension_numbers<[1], [0], [0], [1], [0, 0, 1, 1], [], []>} : vector<2x32xf32>, vector<32x32xf32>, vector<2x32xf32> -> vector<2x32xf32>
    %308 = vector.broadcast %5 : vector<1x32xf32> to vector<2x32xf32>
    %309 = arith.addf %307, %308 : vector<2x32xf32>
    %310 = vector.extract_strided_slice %298 {offsets = [0, 0, 0], sizes = [1, 2, 32], strides = [1, 1, 1]} : vector<3x2x32xf32> to vector<1x2x32xf32>
    %311 = vector.shape_cast %310 : vector<1x2x32xf32> to vector<2x32xf32>
    %312 = arith.addf %311, %301 : vector<2x32xf32>
    %313 = arith.negf %312 : vector<2x32xf32>
    %314 = math.exp %313 : vector<2x32xf32>
    %cst_150 = arith.constant 1.000000e+00 : f32
    %315 = vector.broadcast %cst_150 : f32 to vector<2x32xf32>
    %316 = arith.addf %315, %314 : vector<2x32xf32>
    %317 = arith.divf %315, %316 : vector<2x32xf32>
    %318 = vector.extract_strided_slice %298 {offsets = [1, 0, 0], sizes = [1, 2, 32], strides = [1, 1, 1]} : vector<3x2x32xf32> to vector<1x2x32xf32>
    %319 = vector.shape_cast %318 : vector<1x2x32xf32> to vector<2x32xf32>
    %320 = arith.addf %319, %304 : vector<2x32xf32>
    %321 = arith.negf %320 : vector<2x32xf32>
    %322 = math.exp %321 : vector<2x32xf32>
    %cst_151 = arith.constant 1.000000e+00 : f32
    %323 = vector.broadcast %cst_151 : f32 to vector<2x32xf32>
    %324 = arith.addf %323, %322 : vector<2x32xf32>
    %325 = arith.divf %323, %324 : vector<2x32xf32>
    %326 = vector.extract_strided_slice %298 {offsets = [2, 0, 0], sizes = [1, 2, 32], strides = [1, 1, 1]} : vector<3x2x32xf32> to vector<1x2x32xf32>
    %327 = vector.shape_cast %326 : vector<1x2x32xf32> to vector<2x32xf32>
    %328 = arith.mulf %317, %309 : vector<2x32xf32>
    %329 = arith.addf %327, %328 : vector<2x32xf32>
    %330 = math.tanh %329 : vector<2x32xf32>
    %cst_152 = arith.constant 1.000000e+00 : f32
    %331 = vector.broadcast %cst_152 : f32 to vector<2x32xf32>
    %332 = arith.subf %331, %325 : vector<2x32xf32>
    %333 = arith.mulf %332, %330 : vector<2x32xf32>
    %334 = arith.mulf %325, %295 : vector<2x32xf32>
    %335 = arith.addf %333, %334 : vector<2x32xf32>
    %336 = vector.shape_cast %294 : vector<2x1xi1> to vector<2x1xi1>
    %337 = vector.broadcast %336 : vector<2x1xi1> to vector<2x32xi1>
    %338 = arith.select %337, %335, %295 : vector<2x32xi1>, vector<2x32xf32>
    %c0_153 = arith.constant 0 : index
    %c0_154 = arith.constant 0 : index
    %339 = vector.load %arg13[%c0_153, %c0_154] : memref<2x32xf32, #tpu.memory_space<vmem>>, vector<2x32xf32>
    tpu.vector_store %arg13[%c0_153, %c0_154], %338 {strides = array<i32>} : memref<2x32xf32, #tpu.memory_space<vmem>>, vector<2x32xf32>,
    %cst_155 = arith.constant 0.000000e+00 : f32
    %340 = vector.shape_cast %294 : vector<2x1xi1> to vector<2x1xi1>
    %341 = vector.broadcast %340 : vector<2x1xi1> to vector<2x32xi1>
    %342 = vector.broadcast %cst_155 : f32 to vector<2x32xf32>
    %343 = arith.select %341, %338, %342 : vector<2x32xi1>, vector<2x32xf32>
    %344 = arith.index_cast %291 : i32 to index
    %c0_156 = arith.constant 0 : index
    %c0_157 = arith.constant 0 : index
    %345 = vector.load %arg10[%344, %c0_156, %c0_157] : memref<4x2x32xf32, #tpu.memory_space<vmem>>, vector<1x2x32xf32>
    %346 = vector.shape_cast %345 : vector<1x2x32xf32> to vector<2x32xf32>
    %347 = vector.shape_cast %343 : vector<2x32xf32> to vector<1x2x32xf32>
    tpu.vector_store %arg10[%344, %c0_156, %c0_157], %347 {strides = array<i32>} : memref<4x2x32xf32, #tpu.memory_space<vmem>>, vector<1x2x32xf32>,
    %c3_i32_158 = arith.constant 3 : i32
    %348 = arith.addi %6, %c3_i32_158 : i32
    %349 = vector.broadcast %348 : i32 to vector<2x1xi32>
    %350 = arith.cmpi slt, %349, %3 : vector<2x1xi32>
    %c0_159 = arith.constant 0 : index
    %c0_160 = arith.constant 0 : index
    %351 = vector.load %arg12[%c0_159, %c0_160] : memref<2x32xf32, #tpu.memory_space<vmem>>, vector<2x32xf32>
    %352 = arith.index_cast %c3_i32_158 : i32 to index
    %c0_161 = arith.constant 0 : index
    %c0_162 = arith.constant 0 : index
    %c0_163 = arith.constant 0 : index
    %353 = vector.load %arg1[%352, %c0_161, %c0_162, %c0_163] : memref<4x3x2x32xf32, #tpu.memory_space<vmem>>, vector<1x3x2x32xf32>
    %354 = vector.shape_cast %353 : vector<1x3x2x32xf32> to vector<3x2x32xf32>
    %c0_164 = arith.constant 0 : index
    %c0_165 = arith.constant 0 : index
    %c0_166 = arith.constant 0 : index
    %355 = vector.load %arg5[%c0_164, %c0_165, %c0_166] : memref<3x32x32xf32, #tpu.memory_space<vmem>>, vector<1x32x32xf32>
    %356 = vector.shape_cast %355 : vector<1x32x32xf32> to vector<32x32xf32>
    %cst_167 = arith.constant dense<0.000000e+00> : vector<2x32xf32>
    %357 = tpu.matmul %351, %356, %cst_167 {dimension_numbers = #tpu.dot_dimension_numbers<[1], [0], [0], [1], [0, 0, 1, 1], [], []>} : vector<2x32xf32>, vector<32x32xf32>, vector<2x32xf32> -> vector<2x32xf32>
    %c1_168 = arith.constant 1 : index
    %c0_169 = arith.constant 0 : index
    %c0_170 = arith.constant 0 : index
    %358 = vector.load %arg5[%c1_168, %c0_169, %c0_170] : memref<3x32x32xf32, #tpu.memory_space<vmem>>, vector<1x32x32xf32>
    %359 = vector.shape_cast %358 : vector<1x32x32xf32> to vector<32x32xf32>
    %cst_171 = arith.constant dense<0.000000e+00> : vector<2x32xf32>
    %360 = tpu.matmul %351, %359, %cst_171 {dimension_numbers = #tpu.dot_dimension_numbers<[1], [0], [0], [1], [0, 0, 1, 1], [], []>} : vector<2x32xf32>, vector<32x32xf32>, vector<2x32xf32> -> vector<2x32xf32>
    %c2_172 = arith.constant 2 : index
    %c0_173 = arith.constant 0 : index
    %c0_174 = arith.constant 0 : index
    %361 = vector.load %arg5[%c2_172, %c0_173, %c0_174] : memref<3x32x32xf32, #tpu.memory_space<vmem>>, vector<1x32x32xf32>
    %362 = vector.shape_cast %361 : vector<1x32x32xf32> to vector<32x32xf32>
    %cst_175 = arith.constant dense<0.000000e+00> : vector<2x32xf32>
    %363 = tpu.matmul %351, %362, %cst_175 {dimension_numbers = #tpu.dot_dimension_numbers<[1], [0], [0], [1], [0, 0, 1, 1], [], []>} : vector<2x32xf32>, vector<32x32xf32>, vector<2x32xf32> -> vector<2x32xf32>
    %364 = vector.broadcast %4 : vector<1x32xf32> to vector<2x32xf32>
    %365 = arith.addf %363, %364 : vector<2x32xf32>
    %366 = vector.extract_strided_slice %354 {offsets = [0, 0, 0], sizes = [1, 2, 32], strides = [1, 1, 1]} : vector<3x2x32xf32> to vector<1x2x32xf32>
    %367 = vector.shape_cast %366 : vector<1x2x32xf32> to vector<2x32xf32>
    %368 = arith.addf %367, %357 : vector<2x32xf32>
    %369 = arith.negf %368 : vector<2x32xf32>
    %370 = math.exp %369 : vector<2x32xf32>
    %cst_176 = arith.constant 1.000000e+00 : f32
    %371 = vector.broadcast %cst_176 : f32 to vector<2x32xf32>
    %372 = arith.addf %371, %370 : vector<2x32xf32>
    %373 = arith.divf %371, %372 : vector<2x32xf32>
    %374 = vector.extract_strided_slice %354 {offsets = [1, 0, 0], sizes = [1, 2, 32], strides = [1, 1, 1]} : vector<3x2x32xf32> to vector<1x2x32xf32>
    %375 = vector.shape_cast %374 : vector<1x2x32xf32> to vector<2x32xf32>
    %376 = arith.addf %375, %360 : vector<2x32xf32>
    %377 = arith.negf %376 : vector<2x32xf32>
    %378 = math.exp %377 : vector<2x32xf32>
    %cst_177 = arith.constant 1.000000e+00 : f32
    %379 = vector.broadcast %cst_177 : f32 to vector<2x32xf32>
    %380 = arith.addf %379, %378 : vector<2x32xf32>
    %381 = arith.divf %379, %380 : vector<2x32xf32>
    %382 = vector.extract_strided_slice %354 {offsets = [2, 0, 0], sizes = [1, 2, 32], strides = [1, 1, 1]} : vector<3x2x32xf32> to vector<1x2x32xf32>
    %383 = vector.shape_cast %382 : vector<1x2x32xf32> to vector<2x32xf32>
    %384 = arith.mulf %373, %365 : vector<2x32xf32>
    %385 = arith.addf %383, %384 : vector<2x32xf32>
    %386 = math.tanh %385 : vector<2x32xf32>
    %cst_178 = arith.constant 1.000000e+00 : f32
    %387 = vector.broadcast %cst_178 : f32 to vector<2x32xf32>
    %388 = arith.subf %387, %381 : vector<2x32xf32>
    %389 = arith.mulf %388, %386 : vector<2x32xf32>
    %390 = arith.mulf %381, %351 : vector<2x32xf32>
    %391 = arith.addf %389, %390 : vector<2x32xf32>
    %392 = vector.shape_cast %350 : vector<2x1xi1> to vector<2x1xi1>
    %393 = vector.broadcast %392 : vector<2x1xi1> to vector<2x32xi1>
    %394 = arith.select %393, %391, %351 : vector<2x32xi1>, vector<2x32xf32>
    %c0_179 = arith.constant 0 : index
    %c0_180 = arith.constant 0 : index
    %395 = vector.load %arg12[%c0_179, %c0_180] : memref<2x32xf32, #tpu.memory_space<vmem>>, vector<2x32xf32>
    tpu.vector_store %arg12[%c0_179, %c0_180], %394 {strides = array<i32>} : memref<2x32xf32, #tpu.memory_space<vmem>>, vector<2x32xf32>,
    %cst_181 = arith.constant 0.000000e+00 : f32
    %396 = vector.shape_cast %350 : vector<2x1xi1> to vector<2x1xi1>
    %397 = vector.broadcast %396 : vector<2x1xi1> to vector<2x32xi1>
    %398 = vector.broadcast %cst_181 : f32 to vector<2x32xf32>
    %399 = arith.select %397, %394, %398 : vector<2x32xi1>, vector<2x32xf32>
    %400 = arith.index_cast %c3_i32_158 : i32 to index
    %c0_182 = arith.constant 0 : index
    %c0_183 = arith.constant 0 : index
    %401 = vector.load %arg9[%400, %c0_182, %c0_183] : memref<4x2x32xf32, #tpu.memory_space<vmem>>, vector<1x2x32xf32>
    %402 = vector.shape_cast %401 : vector<1x2x32xf32> to vector<2x32xf32>
    %403 = vector.shape_cast %399 : vector<2x32xf32> to vector<1x2x32xf32>
    tpu.vector_store %arg9[%400, %c0_182, %c0_183], %403 {strides = array<i32>} : memref<4x2x32xf32, #tpu.memory_space<vmem>>, vector<1x2x32xf32>,
    %c3_i32_184 = arith.constant 3 : i32
    %404 = arith.subi %c3_i32_184, %c3_i32_158 : i32
    %405 = arith.addi %8, %404 : i32
    %406 = vector.broadcast %405 : i32 to vector<2x1xi32>
    %407 = arith.cmpi slt, %406, %3 : vector<2x1xi32>
    %c0_185 = arith.constant 0 : index
    %c0_186 = arith.constant 0 : index
    %408 = vector.load %arg13[%c0_185, %c0_186] : memref<2x32xf32, #tpu.memory_space<vmem>>, vector<2x32xf32>
    %409 = arith.index_cast %404 : i32 to index
    %c0_187 = arith.constant 0 : index
    %c0_188 = arith.constant 0 : index
    %c0_189 = arith.constant 0 : index
    %410 = vector.load %arg2[%409, %c0_187, %c0_188, %c0_189] : memref<4x3x2x32xf32, #tpu.memory_space<vmem>>, vector<1x3x2x32xf32>
    %411 = vector.shape_cast %410 : vector<1x3x2x32xf32> to vector<3x2x32xf32>
    %c0_190 = arith.constant 0 : index
    %c0_191 = arith.constant 0 : index
    %c0_192 = arith.constant 0 : index
    %412 = vector.load %arg6[%c0_190, %c0_191, %c0_192] : memref<3x32x32xf32, #tpu.memory_space<vmem>>, vector<1x32x32xf32>
    %413 = vector.shape_cast %412 : vector<1x32x32xf32> to vector<32x32xf32>
    %cst_193 = arith.constant dense<0.000000e+00> : vector<2x32xf32>
    %414 = tpu.matmul %408, %413, %cst_193 {dimension_numbers = #tpu.dot_dimension_numbers<[1], [0], [0], [1], [0, 0, 1, 1], [], []>} : vector<2x32xf32>, vector<32x32xf32>, vector<2x32xf32> -> vector<2x32xf32>
    %c1_194 = arith.constant 1 : index
    %c0_195 = arith.constant 0 : index
    %c0_196 = arith.constant 0 : index
    %415 = vector.load %arg6[%c1_194, %c0_195, %c0_196] : memref<3x32x32xf32, #tpu.memory_space<vmem>>, vector<1x32x32xf32>
    %416 = vector.shape_cast %415 : vector<1x32x32xf32> to vector<32x32xf32>
    %cst_197 = arith.constant dense<0.000000e+00> : vector<2x32xf32>
    %417 = tpu.matmul %408, %416, %cst_197 {dimension_numbers = #tpu.dot_dimension_numbers<[1], [0], [0], [1], [0, 0, 1, 1], [], []>} : vector<2x32xf32>, vector<32x32xf32>, vector<2x32xf32> -> vector<2x32xf32>
    %c2_198 = arith.constant 2 : index
    %c0_199 = arith.constant 0 : index
    %c0_200 = arith.constant 0 : index
    %418 = vector.load %arg6[%c2_198, %c0_199, %c0_200] : memref<3x32x32xf32, #tpu.memory_space<vmem>>, vector<1x32x32xf32>
    %419 = vector.shape_cast %418 : vector<1x32x32xf32> to vector<32x32xf32>
    %cst_201 = arith.constant dense<0.000000e+00> : vector<2x32xf32>
    %420 = tpu.matmul %408, %419, %cst_201 {dimension_numbers = #tpu.dot_dimension_numbers<[1], [0], [0], [1], [0, 0, 1, 1], [], []>} : vector<2x32xf32>, vector<32x32xf32>, vector<2x32xf32> -> vector<2x32xf32>
    %421 = vector.broadcast %5 : vector<1x32xf32> to vector<2x32xf32>
    %422 = arith.addf %420, %421 : vector<2x32xf32>
    %423 = vector.extract_strided_slice %411 {offsets = [0, 0, 0], sizes = [1, 2, 32], strides = [1, 1, 1]} : vector<3x2x32xf32> to vector<1x2x32xf32>
    %424 = vector.shape_cast %423 : vector<1x2x32xf32> to vector<2x32xf32>
    %425 = arith.addf %424, %414 : vector<2x32xf32>
    %426 = arith.negf %425 : vector<2x32xf32>
    %427 = math.exp %426 : vector<2x32xf32>
    %cst_202 = arith.constant 1.000000e+00 : f32
    %428 = vector.broadcast %cst_202 : f32 to vector<2x32xf32>
    %429 = arith.addf %428, %427 : vector<2x32xf32>
    %430 = arith.divf %428, %429 : vector<2x32xf32>
    %431 = vector.extract_strided_slice %411 {offsets = [1, 0, 0], sizes = [1, 2, 32], strides = [1, 1, 1]} : vector<3x2x32xf32> to vector<1x2x32xf32>
    %432 = vector.shape_cast %431 : vector<1x2x32xf32> to vector<2x32xf32>
    %433 = arith.addf %432, %417 : vector<2x32xf32>
    %434 = arith.negf %433 : vector<2x32xf32>
    %435 = math.exp %434 : vector<2x32xf32>
    %cst_203 = arith.constant 1.000000e+00 : f32
    %436 = vector.broadcast %cst_203 : f32 to vector<2x32xf32>
    %437 = arith.addf %436, %435 : vector<2x32xf32>
    %438 = arith.divf %436, %437 : vector<2x32xf32>
    %439 = vector.extract_strided_slice %411 {offsets = [2, 0, 0], sizes = [1, 2, 32], strides = [1, 1, 1]} : vector<3x2x32xf32> to vector<1x2x32xf32>
    %440 = vector.shape_cast %439 : vector<1x2x32xf32> to vector<2x32xf32>
    %441 = arith.mulf %430, %422 : vector<2x32xf32>
    %442 = arith.addf %440, %441 : vector<2x32xf32>
    %443 = math.tanh %442 : vector<2x32xf32>
    %cst_204 = arith.constant 1.000000e+00 : f32
    %444 = vector.broadcast %cst_204 : f32 to vector<2x32xf32>
    %445 = arith.subf %444, %438 : vector<2x32xf32>
    %446 = arith.mulf %445, %443 : vector<2x32xf32>
    %447 = arith.mulf %438, %408 : vector<2x32xf32>
    %448 = arith.addf %446, %447 : vector<2x32xf32>
    %449 = vector.shape_cast %407 : vector<2x1xi1> to vector<2x1xi1>
    %450 = vector.broadcast %449 : vector<2x1xi1> to vector<2x32xi1>
    %451 = arith.select %450, %448, %408 : vector<2x32xi1>, vector<2x32xf32>
    %c0_205 = arith.constant 0 : index
    %c0_206 = arith.constant 0 : index
    %452 = vector.load %arg13[%c0_205, %c0_206] : memref<2x32xf32, #tpu.memory_space<vmem>>, vector<2x32xf32>
    tpu.vector_store %arg13[%c0_205, %c0_206], %451 {strides = array<i32>} : memref<2x32xf32, #tpu.memory_space<vmem>>, vector<2x32xf32>,
    %cst_207 = arith.constant 0.000000e+00 : f32
    %453 = vector.shape_cast %407 : vector<2x1xi1> to vector<2x1xi1>
    %454 = vector.broadcast %453 : vector<2x1xi1> to vector<2x32xi1>
    %455 = vector.broadcast %cst_207 : f32 to vector<2x32xf32>
    %456 = arith.select %454, %451, %455 : vector<2x32xi1>, vector<2x32xf32>
    %457 = arith.index_cast %404 : i32 to index
    %c0_208 = arith.constant 0 : index
    %c0_209 = arith.constant 0 : index
    %458 = vector.load %arg10[%457, %c0_208, %c0_209] : memref<4x2x32xf32, #tpu.memory_space<vmem>>, vector<1x2x32xf32>
    %459 = vector.shape_cast %458 : vector<1x2x32xf32> to vector<2x32xf32>
    %460 = vector.shape_cast %456 : vector<2x32xf32> to vector<1x2x32xf32>
    tpu.vector_store %arg10[%457, %c0_208, %c0_209], %460 {strides = array<i32>} : memref<4x2x32xf32, #tpu.memory_space<vmem>>, vector<1x2x32xf32>,
    %c4_i32_210 = arith.constant 4 : i32
    %c1_i32_211 = arith.constant 1 : i32
    %461 = arith.cmpi eq, %arg0, %c1_i32_211 : i32
    %462 = arith.extui %461 : i1 to i32
    %c0_i32_212 = arith.constant 0 : i32
    %463 = arith.cmpi ne, %462, %c0_i32_212 : i32
    scf.if %463 {
      %c0_213 = arith.constant 0 : index
      %c0_214 = arith.constant 0 : index
      %464 = vector.load %arg12[%c0_213, %c0_214] : memref<2x32xf32, #tpu.memory_space<vmem>>, vector<2x32xf32>
      %c0_215 = arith.constant 0 : index
      %c0_216 = arith.constant 0 : index
      %c0_217 = arith.constant 0 : index
      %465 = vector.load %arg11[%c0_215, %c0_216, %c0_217] : memref<2x2x32xf32, #tpu.memory_space<vmem>>, vector<1x2x32xf32>
      %466 = vector.shape_cast %465 : vector<1x2x32xf32> to vector<2x32xf32>
      %467 = vector.shape_cast %464 : vector<2x32xf32> to vector<1x2x32xf32>
      tpu.vector_store %arg11[%c0_215, %c0_216, %c0_217], %467 {strides = array<i32>} : memref<2x2x32xf32, #tpu.memory_space<vmem>>, vector<1x2x32xf32>,
      %c0_218 = arith.constant 0 : index
      %c0_219 = arith.constant 0 : index
      %468 = vector.load %arg13[%c0_218, %c0_219] : memref<2x32xf32, #tpu.memory_space<vmem>>, vector<2x32xf32>
      %c1_220 = arith.constant 1 : index
      %c0_221 = arith.constant 0 : index
      %c0_222 = arith.constant 0 : index
      %469 = vector.load %arg11[%c1_220, %c0_221, %c0_222] : memref<2x2x32xf32, #tpu.memory_space<vmem>>, vector<1x2x32xf32>
      %470 = vector.shape_cast %469 : vector<1x2x32xf32> to vector<2x32xf32>
      %471 = vector.shape_cast %468 : vector<2x32xf32> to vector<1x2x32xf32>
      tpu.vector_store %arg11[%c1_220, %c0_221, %c0_222], %471 {strides = array<i32>} : memref<2x2x32xf32, #tpu.memory_space<vmem>>, vector<1x2x32xf32>,
    } else {
    }
    return
  }
  func.func @transform_0(%arg0: i32) -> (i32, i32, i32, i32) {
    %c0_i32 = arith.constant 0 : i32
    %c0_i32_0 = arith.constant 0 : i32
    %c0_i32_1 = arith.constant 0 : i32
    %c0_i32_2 = arith.constant 0 : i32
    return %arg0, %c0_i32, %c0_i32_0, %c0_i32_1 : i32, i32, i32, i32
  }
  func.func @transform_1(%arg0: i32) -> (i32, i32, i32, i32) {
    %c1_i32 = arith.constant 1 : i32
    %0 = arith.subi %c1_i32, %arg0 : i32
    %c0_i32 = arith.constant 0 : i32
    %c0_i32_0 = arith.constant 0 : i32
    %c0_i32_1 = arith.constant 0 : i32
    %c0_i32_2 = arith.constant 0 : i32
    return %0, %c0_i32, %c0_i32_0, %c0_i32_1 : i32, i32, i32, i32
  }
  func.func @transform_2(%arg0: i32) -> (i32, i32) {
    %c0_i32 = arith.constant 0 : i32
    %c0_i32_0 = arith.constant 0 : i32
    %c0_i32_1 = arith.constant 0 : i32
    return %c0_i32, %c0_i32_0 : i32, i32
  }
  func.func @transform_3(%arg0: i32) -> (i32, i32, i32) {
    %c0_i32 = arith.constant 0 : i32
    %c0_i32_0 = arith.constant 0 : i32
    %c0_i32_1 = arith.constant 0 : i32
    %c0_i32_2 = arith.constant 0 : i32
    return %c0_i32, %c0_i32_0, %c0_i32_1 : i32, i32, i32
  }
  func.func @transform_4(%arg0: i32) -> (i32, i32, i32) {
    %c0_i32 = arith.constant 0 : i32
    %c0_i32_0 = arith.constant 0 : i32
    %c0_i32_1 = arith.constant 0 : i32
    %c0_i32_2 = arith.constant 0 : i32
    return %c0_i32, %c0_i32_0, %c0_i32_1 : i32, i32, i32
  }
  func.func @transform_5(%arg0: i32) -> (i32, i32, i32) {
    %c0_i32 = arith.constant 0 : i32
    %c0_i32_0 = arith.constant 0 : i32
    %c0_i32_1 = arith.constant 0 : i32
    %c0_i32_2 = arith.constant 0 : i32
    return %c0_i32, %c0_i32_0, %c0_i32_1 : i32, i32, i32
  }
  func.func @transform_6(%arg0: i32) -> (i32, i32) {
    %c0_i32 = arith.constant 0 : i32
    %c0_i32_0 = arith.constant 0 : i32
    %c0_i32_1 = arith.constant 0 : i32
    return %c0_i32, %c0_i32_0 : i32, i32
  }
  func.func @transform_7(%arg0: i32) -> (i32, i32) {
    %c0_i32 = arith.constant 0 : i32
    %c0_i32_0 = arith.constant 0 : i32
    %c0_i32_1 = arith.constant 0 : i32
    return %c0_i32, %c0_i32_0 : i32, i32
  }
  func.func @transform_8(%arg0: i32) -> (i32, i32, i32) {
    %c0_i32 = arith.constant 0 : i32
    %c0_i32_0 = arith.constant 0 : i32
    %c0_i32_1 = arith.constant 0 : i32
    return %arg0, %c0_i32, %c0_i32_0 : i32, i32, i32
  }
  func.func @transform_9(%arg0: i32) -> (i32, i32, i32) {
    %c1_i32 = arith.constant 1 : i32
    %0 = arith.subi %c1_i32, %arg0 : i32
    %c0_i32 = arith.constant 0 : i32
    %c0_i32_0 = arith.constant 0 : i32
    %c0_i32_1 = arith.constant 0 : i32
    return %0, %c0_i32, %c0_i32_0 : i32, i32, i32
  }
  func.func @transform_10(%arg0: i32) -> (i32, i32, i32) {
    %c0_i32 = arith.constant 0 : i32
    %c0_i32_0 = arith.constant 0 : i32
    %c0_i32_1 = arith.constant 0 : i32
    %c0_i32_2 = arith.constant 0 : i32
    return %c0_i32, %c0_i32_0, %c0_i32_1 : i32, i32, i32
  }
}

</mosaic_0001>

<llo_original>
// kernel: tpu_custom_call.1
$region0: #{tpu_custom_call.1}
  #allocation0 [shape = 'u32[]', space=smem, size = 0x4, offset = 0x4, fixed_abs, tag = 'smem constant byte address 0x4 - core index']
  #allocation1 [shape = 'u32[144,128]{1,0:T(1,128)}', space=vmem, size = 0x12000, scoped, tag = 'internal scratch']
  #allocation2 [shape = 'f32[2,32]{1,0:T(2,128)}', space=vmem, size = 0x400, scoped, tag = 'scratch operand']
  #allocation3 [shape = 'f32[2,32]{1,0:T(2,128)}', space=vmem, size = 0x400, scoped, tag = 'scratch operand']
  %s0 = inlined_call_operand.hbm [shape: f32[8,3,2,32], index: 0, kind: input, shape index: {}]
  %s1 = inlined_call_operand.hbm [shape: f32[8,3,2,32], index: 1, kind: input, shape index: {}]
  %s2 = inlined_call_operand.vmem [shape: s32[2,1], index: 2, kind: input, shape index: {}]
  %s3 = inlined_call_operand.vmem [shape: f32[2,2,32], index: 3, kind: input, shape index: {}]
  %s4 = inlined_call_operand.hbm [shape: f32[3,32,32], index: 4, kind: input, shape index: {}]
  %s5 = inlined_call_operand.hbm [shape: f32[3,32,32], index: 5, kind: input, shape index: {}]
  %s6 = inlined_call_operand.vmem [shape: f32[1,32], index: 6, kind: input, shape index: {}]
  %s7 = inlined_call_operand.vmem [shape: f32[1,32], index: 7, kind: input, shape index: {}]
  %s8 = inlined_call_operand.hbm [shape: f32[8,2,32], index: 8, kind: output, shape index: {0}]
  %s9 = inlined_call_operand.hbm [shape: f32[8,2,32], index: 9, kind: output, shape index: {1}]
  %s10 = inlined_call_operand.hbm [shape: f32[2,2,32], index: 10, kind: output, shape index: {2}]
  %11 = xla_tuple %s8, %s9, %s10
  %s12 = sld [smem:[#allocation0]]
  $region105: #{tpu_custom_call.1} parent=0
    _
  %s14 = ssub.s32 1, %s12
  %s15 = scalar_select 0, %s14, %s12
  $region1: #{tpu_custom_call.1} parent=0
    #allocation4 [shape = 'u8[24576]{0}', space=vmem, size = 0x6000, scoped, tag = 'input window, operand 0']
    #allocation5 [shape = 's32[2]{0}', space=sflag, size = 0x8, scoped, tag = 'scoped memory for tpu_custom_call.1']
    #allocation6 [shape = 's32[2]{0}', space=sflag, size = 0x8, scoped, tag = 'scoped memory for tpu_custom_call.1']
    #allocation7 [shape = 'u8[24576]{0}', space=vmem, size = 0x6000, scoped, tag = 'input window, operand 1']
    #allocation8 [shape = 's32[2]{0}', space=sflag, size = 0x8, scoped, tag = 'scoped memory for tpu_custom_call.1']
    #allocation9 [shape = 'u8[49152]{0}', space=vmem, size = 0xc000, scoped, tag = 'input window, operand 4, single buffered']
    #allocation10 [shape = 'u8[49152]{0}', space=vmem, size = 0xc000, scoped, tag = 'input window, operand 5, single buffered']
    #allocation11 [shape = 's32[1]{0}', space=sflag, size = 0x4, scoped, tag = 'scoped memory for tpu_custom_call.1']
    #allocation12 [shape = 'u8[8192]{0}', space=vmem, size = 0x2000, scoped, tag = 'output window, operand 0']
    #allocation13 [shape = 'u8[8192]{0}', space=vmem, size = 0x2000, scoped, tag = 'output window, operand 1']
    #allocation14 [shape = 's32[2]{0}', space=sflag, size = 0x8, scoped, tag = 'scoped memory for tpu_custom_call.1']
    #allocation15 [shape = 'u8[2048]{0}', space=vmem, size = 0x800, scoped, tag = 'output window, operand 2, single buffered']
    %16 = vsyncpa [#allocation5], 0
    %s17 = scalar_lea.sflag [#allocation5], 1
    %18 = vsyncpa %s17, 0
    %19 = vsyncpa [#allocation8], 0
    %s20 = scalar_lea.sflag [#allocation8], 1
    %21 = vsyncpa %s20, 0
    %22 = vsyncpa [#allocation11], 0
    %23 = vsyncpa [#allocation6], 0
    %s24 = scalar_lea.sflag [#allocation6], 1
    %25 = vsyncpa %s24, 0
    %26 = vsyncpa [#allocation14], 0
    %s27 = scalar_lea.sflag [#allocation14], 1
    %28 = vsyncpa %s27, 0
    loop: start=0, step=1, limit=4
    $region2: #{tpu_custom_call.1} parent=1 // loop_pre_header
      _
    $region3: #{tpu_custom_call.1} parent=1 // loop_header
      %s30 = sphi 0, %s34
      %p31 = scmp.ge.s32.totalorder %s30, 4
      %s40 = sphi 0, %s42
      %s43 = sphi 0, %s40
      %s44 = sphi 0, %s43
      %s60 = sphi 0, %s44
      %s68 = sphi 0, %s70
      %s71 = sphi 0, %s68
      %s72 = sphi 0, %s71
      %s88 = sphi 0, %s72
      %s92 = sphi 0, %s92
      %s94 = sphi 0, %s92
      %s95 = sphi 0, %s94
      %s109 = sphi 0, %s95
      %s113 = sphi 0, %s113
      %s115 = sphi 0, %s113
      %s116 = sphi 0, %s115
      %s130 = sphi 0, %s116
      %s134 = sphi 0, %s134
      %s136 = sphi 0, %s134
      %s137 = sphi 0, %s136
      %s151 = sphi 0, %s137
      %s155 = sphi 0, %s155
      %s157 = sphi 0, %s155
      %s158 = sphi 0, %s157
      %s172 = sphi 0, %s158
      %s176 = sphi 0, %s176
      %s178 = sphi 0, %s176
      %s179 = sphi 0, %s178
      %s193 = sphi 0, %s179
      %s197 = sphi 0, %s197
      %s199 = sphi 0, %s197
      %s200 = sphi 0, %s199
      %s214 = sphi 0, %s200
      %s220 = sphi 0, %s222
      %s223 = sphi 0, %s220
      %s224 = sphi 0, %s223
      %s240 = sphi 0, %s224
      %s248 = sphi 0, %s250
      %s251 = sphi 0, %s248
      %s252 = sphi 0, %s251
      %s268 = sphi 0, %s252
      %s272 = sphi 0, %s272
      %s274 = sphi 0, %s272
      %s275 = sphi 0, %s274
      %s289 = sphi 0, %s275
    $region4: #{tpu_custom_call.1} parent=1 // loop_header_branch
      %33 = sbr.rel (%p31) target = $region8
    $region5: #{tpu_custom_call.1} parent=1 // loop_body
      %s35 = ssub.s32 %s30, 1
      %s36 = ssub.s32 %s30, 2
      %s37 = sadd.s32 %s30, 1
      %s38 = ssub.s32 %s30, %s37
      %p39 = scmp.eq.s32.totalorder %s38, 0
      %s41 = sadd.s32 %s40, 1
      %s42 = scalar_select %p39, %s40, %s41
      %p45 = pneg %p39
      %p46 = scmp.eq.s32.totalorder %s30, 1
      %p47 = por %p45, %p46
      %p48 = scmp.ne.s32.totalorder %s40, %s43
      %p49 = scmp.eq.s32.totalorder %s30, 0
      %p50 = por %p48, %p49
      %p51 = scmp.ne.s32.totalorder %s40, %s43
      %p52 = scmp.eq.s32.totalorder %s35, 1
      %p53 = por %p51, %p52
      %p54 = scmp.ne.s32.totalorder %s43, %s44
      %p55 = scmp.eq.s32.totalorder %s35, 0
      %p56 = por %p54, %p55
      %p57 = scmp.ne.s32.totalorder %s43, %s44
      %p58 = scmp.eq.s32.totalorder %s36, 1
      %p59 = por %p57, %p58
      %p61 = scmp.ne.s32.totalorder %s44, %s60
      %p62 = scmp.eq.s32.totalorder %s36, 0
      %p63 = por %p61, %p62
      %s64 = ssub.s32 1, %s30
      %s65 = ssub.s32 1, %s37
      %s66 = ssub.s32 %s64, %s65
      %p67 = scmp.eq.s32.totalorder %s66, 0
      %s69 = sadd.s32 %s68, 1
      %s70 = scalar_select %p67, %s68, %s69
      %p73 = pneg %p67
      %p74 = scmp.eq.s32.totalorder %s30, 1
      %p75 = por %p73, %p74
      %p76 = scmp.ne.s32.totalorder %s68, %s71
      %p77 = scmp.eq.s32.totalorder %s30, 0
      %p78 = por %p76, %p77
      %p79 = scmp.ne.s32.totalorder %s68, %s71
      %p80 = scmp.eq.s32.totalorder %s35, 1
      %p81 = por %p79, %p80
      %p82 = scmp.ne.s32.totalorder %s71, %s72
      %p83 = scmp.eq.s32.totalorder %s35, 0
      %p84 = por %p82, %p83
      %p85 = scmp.ne.s32.totalorder %s71, %s72
      %p86 = scmp.eq.s32.totalorder %s36, 1
      %p87 = por %p85, %p86
      %p89 = scmp.ne.s32.totalorder %s72, %s88
      %p90 = scmp.eq.s32.totalorder %s36, 0
      %p91 = por %p89, %p90
      %s93 = sadd.s32 %s92, 1
      %p96 = scmp.eq.s32.totalorder %s30, 1
      %p97 = scmp.ne.s32.totalorder %s92, %s94
      %p98 = scmp.eq.s32.totalorder %s30, 0
      %p99 = por %p97, %p98
      %p100 = scmp.ne.s32.totalorder %s92, %s94
      %p101 = scmp.eq.s32.totalorder %s35, 1
      %p102 = por %p100, %p101
      %p103 = scmp.ne.s32.totalorder %s94, %s95
      %p104 = scmp.eq.s32.totalorder %s35, 0
      %p105 = por %p103, %p104
      %p106 = scmp.ne.s32.totalorder %s94, %s95
      %p107 = scmp.eq.s32.totalorder %s36, 1
      %p108 = por %p106, %p107
      %p110 = scmp.ne.s32.totalorder %s95, %s109
      %p111 = scmp.eq.s32.totalorder %s36, 0
      %p112 = por %p110, %p111
      %s114 = sadd.s32 %s113, 1
      %p117 = scmp.eq.s32.totalorder %s30, 1
      %p118 = scmp.ne.s32.totalorder %s113, %s115
      %p119 = scmp.eq.s32.totalorder %s30, 0
      %p120 = por %p118, %p119
      %p121 = scmp.ne.s32.totalorder %s113, %s115
      %p122 = scmp.eq.s32.totalorder %s35, 1
      %p123 = por %p121, %p122
      %p124 = scmp.ne.s32.totalorder %s115, %s116
      %p125 = scmp.eq.s32.totalorder %s35, 0
      %p126 = por %p124, %p125
      %p127 = scmp.ne.s32.totalorder %s115, %s116
      %p128 = scmp.eq.s32.totalorder %s36, 1
      %p129 = por %p127, %p128
      %p131 = scmp.ne.s32.totalorder %s116, %s130
      %p132 = scmp.eq.s32.totalorder %s36, 0
      %p133 = por %p131, %p132
      %s135 = sadd.s32 %s134, 1
      %p138 = scmp.eq.s32.totalorder %s30, 1
      %p139 = scmp.ne.s32.totalorder %s134, %s136
      %p140 = scmp.eq.s32.totalorder %s30, 0
      %p141 = por %p139, %p140
      %p142 = scmp.ne.s32.totalorder %s134, %s136
      %p143 = scmp.eq.s32.totalorder %s35, 1
      %p144 = por %p142, %p143
      %p145 = scmp.ne.s32.totalorder %s136, %s137
      %p146 = scmp.eq.s32.totalorder %s35, 0
      %p147 = por %p145, %p146
      %p148 = scmp.ne.s32.totalorder %s136, %s137
      %p149 = scmp.eq.s32.totalorder %s36, 1
      %p150 = por %p148, %p149
      %p152 = scmp.ne.s32.totalorder %s137, %s151
      %p153 = scmp.eq.s32.totalorder %s36, 0
      %p154 = por %p152, %p153
      %s156 = sadd.s32 %s155, 1
      %p159 = scmp.eq.s32.totalorder %s30, 1
      %p160 = scmp.ne.s32.totalorder %s155, %s157
      %p161 = scmp.eq.s32.totalorder %s30, 0
      %p162 = por %p160, %p161
      %p163 = scmp.ne.s32.totalorder %s155, %s157
      %p164 = scmp.eq.s32.totalorder %s35, 1
      %p165 = por %p163, %p164
      %p166 = scmp.ne.s32.totalorder %s157, %s158
      %p167 = scmp.eq.s32.totalorder %s35, 0
      %p168 = por %p166, %p167
      %p169 = scmp.ne.s32.totalorder %s157, %s158
      %p170 = scmp.eq.s32.totalorder %s36, 1
      %p171 = por %p169, %p170
      %p173 = scmp.ne.s32.totalorder %s158, %s172
      %p174 = scmp.eq.s32.totalorder %s36, 0
      %p175 = por %p173, %p174
      %s177 = sadd.s32 %s176, 1
      %p180 = scmp.eq.s32.totalorder %s30, 1
      %p181 = scmp.ne.s32.totalorder %s176, %s178
      %p182 = scmp.eq.s32.totalorder %s30, 0
      %p183 = por %p181, %p182
      %p184 = scmp.ne.s32.totalorder %s176, %s178
      %p185 = scmp.eq.s32.totalorder %s35, 1
      %p186 = por %p184, %p185
      %p187 = scmp.ne.s32.totalorder %s178, %s179
      %p188 = scmp.eq.s32.totalorder %s35, 0
      %p189 = por %p187, %p188
      %p190 = scmp.ne.s32.totalorder %s178, %s179
      %p191 = scmp.eq.s32.totalorder %s36, 1
      %p192 = por %p190, %p191
      %p194 = scmp.ne.s32.totalorder %s179, %s193
      %p195 = scmp.eq.s32.totalorder %s36, 0
      %p196 = por %p194, %p195
      %s198 = sadd.s32 %s197, 1
      %p201 = scmp.eq.s32.totalorder %s30, 1
      %p202 = scmp.ne.s32.totalorder %s197, %s199
      %p203 = scmp.eq.s32.totalorder %s30, 0
      %p204 = por %p202, %p203
      %p205 = scmp.ne.s32.totalorder %s197, %s199
      %p206 = scmp.eq.s32.totalorder %s35, 1
      %p207 = por %p205, %p206
      %p208 = scmp.ne.s32.totalorder %s199, %s200
      %p209 = scmp.eq.s32.totalorder %s35, 0
      %p210 = por %p208, %p209
      %p211 = scmp.ne.s32.totalorder %s199, %s200
      %p212 = scmp.eq.s32.totalorder %s36, 1
      %p213 = por %p211, %p212
      %p215 = scmp.ne.s32.totalorder %s200, %s214
      %p216 = scmp.eq.s32.totalorder %s36, 0
      %p217 = por %p215, %p216
      %s218 = ssub.s32 %s30, %s37
      %p219 = scmp.eq.s32.totalorder %s218, 0
      %s221 = sadd.s32 %s220, 1
      %s222 = scalar_select %p219, %s220, %s221
      %p225 = pneg %p219
      %p226 = scmp.eq.s32.totalorder %s30, 1
      %p227 = por %p225, %p226
      %p228 = scmp.ne.s32.totalorder %s220, %s223
      %p229 = scmp.eq.s32.totalorder %s30, 0
      %p230 = por %p228, %p229
      %p231 = scmp.ne.s32.totalorder %s220, %s223
      %p232 = scmp.eq.s32.totalorder %s35, 1
      %p233 = por %p231, %p232
      %p234 = scmp.ne.s32.totalorder %s223, %s224
      %p235 = scmp.eq.s32.totalorder %s35, 0
      %p236 = por %p234, %p235
      %p237 = scmp.ne.s32.totalorder %s223, %s224
      %p238 = scmp.eq.s32.totalorder %s36, 1
      %p239 = por %p237, %p238
      %p241 = scmp.ne.s32.totalorder %s224, %s240
      %p242 = scmp.eq.s32.totalorder %s36, 0
      %p243 = por %p241, %p242
      %s244 = ssub.s32 1, %s30
      %s245 = ssub.s32 1, %s37
      %s246 = ssub.s32 %s244, %s245
      %p247 = scmp.eq.s32.totalorder %s246, 0
      %s249 = sadd.s32 %s248, 1
      %s250 = scalar_select %p247, %s248, %s249
      %p253 = pneg %p247
      %p254 = scmp.eq.s32.totalorder %s30, 1
      %p255 = por %p253, %p254
      %p256 = scmp.ne.s32.totalorder %s248, %s251
      %p257 = scmp.eq.s32.totalorder %s30, 0
      %p258 = por %p256, %p257
      %p259 = scmp.ne.s32.totalorder %s248, %s251
      %p260 = scmp.eq.s32.totalorder %s35, 1
      %p261 = por %p259, %p260
      %p262 = scmp.ne.s32.totalorder %s251, %s252
      %p263 = scmp.eq.s32.totalorder %s35, 0
      %p264 = por %p262, %p263
      %p265 = scmp.ne.s32.totalorder %s251, %s252
      %p266 = scmp.eq.s32.totalorder %s36, 1
      %p267 = por %p265, %p266
      %p269 = scmp.ne.s32.totalorder %s252, %s268
      %p270 = scmp.eq.s32.totalorder %s36, 0
      %p271 = por %p269, %p270
      %s273 = sadd.s32 %s272, 1
      %p276 = scmp.eq.s32.totalorder %s30, 1
      %p277 = scmp.ne.s32.totalorder %s272, %s274
      %p278 = scmp.eq.s32.totalorder %s30, 0
      %p279 = por %p277, %p278
      %p280 = scmp.ne.s32.totalorder %s272, %s274
      %p281 = scmp.eq.s32.totalorder %s35, 1
      %p282 = por %p280, %p281
      %p283 = scmp.ne.s32.totalorder %s274, %s275
      %p284 = scmp.eq.s32.totalorder %s35, 0
      %p285 = por %p283, %p284
      %p286 = scmp.ne.s32.totalorder %s274, %s275
      %p287 = scmp.eq.s32.totalorder %s36, 1
      %p288 = por %p286, %p287
      %p290 = scmp.ne.s32.totalorder %s275, %s289
      %p291 = scmp.eq.s32.totalorder %s36, 0
      %p292 = por %p290, %p291
      %p293 = scmp.le.s32.totalorder 1, %s30
      %p294 = scmp.lt.s32.totalorder %s30, 3
      %p295 = pnand %p293, %p294
      %p296 = pneg %p295
      // Predicated region
      $region9: #{tpu_custom_call.1} parent=5 // pred_check
        _
      $region10: #{tpu_custom_call.1} parent=5 // pred_check_branch
        %298 = sbr.rel (%p295) target = $region12
      $region11: #{tpu_custom_call.1} parent=5 // pred_region
        %s299 = ssub.s32 %s30, 1
        // Predicated region
        $region13: #{tpu_custom_call.1} parent=11 // pred_check
          %p300 = pneg %p105
        $region14: #{tpu_custom_call.1} parent=11 // pred_check_branch
          %302 = sbr.rel (%p300) target = $region16
        $region15: #{tpu_custom_call.1} parent=11 // pred_region
          _
        $region16: #{tpu_custom_call.1} parent=11 // pred_fallthru
          _
        // Predicated region
        $region17: #{tpu_custom_call.1} parent=11 // pred_check
          %p303 = pneg %p126
        $region18: #{tpu_custom_call.1} parent=11 // pred_check_branch
          %305 = sbr.rel (%p303) target = $region20
        $region19: #{tpu_custom_call.1} parent=11 // pred_region
          _
        $region20: #{tpu_custom_call.1} parent=11 // pred_fallthru
          _
        // Predicated region
        $region21: #{tpu_custom_call.1} parent=11 // pred_check
          %p306 = pneg %p147
        $region22: #{tpu_custom_call.1} parent=11 // pred_check_branch
          %308 = sbr.rel (%p306) target = $region24
        $region23: #{tpu_custom_call.1} parent=11 // pred_region
          %s310 = ssub.s32 1536, 1536
          %311 = vsyncadd [#allocation8], %s310
          %s312 = sshll.u32 [#allocation9], 4
          %s313 = int_to_ptr.vmem [resolvable:$true] %s312
          %318 = dma.hbm_to_vmem [thread:$0]  %s4, 1536, %s313, [#allocation8], 128, 128, 8
        $region24: #{tpu_custom_call.1} parent=11 // pred_fallthru
          _
        // Predicated region
        $region25: #{tpu_custom_call.1} parent=11 // pred_check
          %p319 = pneg %p168
        $region26: #{tpu_custom_call.1} parent=11 // pred_check_branch
          %321 = sbr.rel (%p319) target = $region28
        $region27: #{tpu_custom_call.1} parent=11 // pred_region
          %s323 = ssub.s32 1536, 1536
          %324 = vsyncadd [#allocation11], %s323
          %s325 = sshll.u32 [#allocation10], 4
          %s326 = int_to_ptr.vmem [resolvable:$true] %s325
          %331 = dma.hbm_to_vmem [thread:$0]  %s5, 1536, %s326, [#allocation11], 128, 128, 8
        $region28: #{tpu_custom_call.1} parent=11 // pred_fallthru
          _
        // Predicated region
        $region29: #{tpu_custom_call.1} parent=11 // pred_check
          %p332 = pneg %p189
        $region30: #{tpu_custom_call.1} parent=11 // pred_check_branch
          %334 = sbr.rel (%p332) target = $region32
        $region31: #{tpu_custom_call.1} parent=11 // pred_region
          _
        $region32: #{tpu_custom_call.1} parent=11 // pred_fallthru
          _
        // Predicated region
        $region33: #{tpu_custom_call.1} parent=11 // pred_check
          %p335 = pneg %p210
        $region34: #{tpu_custom_call.1} parent=11 // pred_check_branch
          %337 = sbr.rel (%p335) target = $region36
        $region35: #{tpu_custom_call.1} parent=11 // pred_region
          _
        $region36: #{tpu_custom_call.1} parent=11 // pred_fallthru
          _
      $region12: #{tpu_custom_call.1} parent=5 // pred_fallthru
        _
      %p338 = scmp.lt.s32.totalorder %s30, 2
      // Predicated region
      $region37: #{tpu_custom_call.1} parent=5 // pred_check
        %p339 = pneg %p338
      $region38: #{tpu_custom_call.1} parent=5 // pred_check_branch
        %341 = sbr.rel (%p339) target = $region40
      $region39: #{tpu_custom_call.1} parent=5 // pred_region
        // Predicated region
        $region41: #{tpu_custom_call.1} parent=39 // pred_check
          %p342 = pneg %p50
        $region42: #{tpu_custom_call.1} parent=39 // pred_check_branch
          %344 = sbr.rel (%p342) target = $region44
        $region43: #{tpu_custom_call.1} parent=39 // pred_region
          %s345 = sand.u32 %s40, 1
          %s346 = scalar_lea.sflag [#allocation5], %s345
          %s347 = sand.u32 %s40, 1
          %s348 = smul.addr %s347, 24
          %s349 = scalar_lea.vmem [#allocation4], %s348
          %s350 = smul.u32 4, %s30
          %s352 = ssub.s32 384, 384
          %353 = vsyncadd %s346, %s352
          %s354 = smul.addr %s350, 3
          %s355 = smul.addr %s354, 32
          %s356 = scalar_lea.hbm %s0, %s355
          %s357 = sshll.u32 %s349, 4
          %s358 = int_to_ptr.vmem [resolvable:$true] %s357
          %363 = dma.hbm_to_vmem [thread:$0]  %s356, 384, %s358, %s346, 32, 32, 2
        $region44: #{tpu_custom_call.1} parent=39 // pred_fallthru
          _
        // Predicated region
        $region45: #{tpu_custom_call.1} parent=39 // pred_check
          %p364 = pneg %p78
        $region46: #{tpu_custom_call.1} parent=39 // pred_check_branch
          %366 = sbr.rel (%p364) target = $region48
        $region47: #{tpu_custom_call.1} parent=39 // pred_region
          %s367 = sand.u32 %s30, 1
          %s368 = scalar_lea.sflag [#allocation8], %s367
          %s369 = sand.u32 %s68, 1
          %s370 = smul.addr %s369, 24
          %s371 = scalar_lea.vmem [#allocation7], %s370
          %s372 = ssub.s32 1, %s30
          %s373 = smul.u32 4, %s372
          %s375 = ssub.s32 384, 384
          %376 = vsyncadd %s368, %s375
          %s377 = smul.addr %s373, 3
          %s378 = smul.addr %s377, 32
          %s379 = scalar_lea.hbm %s1, %s378
          %s380 = sshll.u32 %s371, 4
          %s381 = int_to_ptr.vmem [resolvable:$true] %s380
          %386 = dma.hbm_to_vmem [thread:$0]  %s379, 384, %s381, %s368, 32, 32, 2
        $region48: #{tpu_custom_call.1} parent=39 // pred_fallthru
          _
      $region40: #{tpu_custom_call.1} parent=5 // pred_fallthru
        _
      %p387 = scmp.le.s32.totalorder 1, %s30
      %p388 = scmp.lt.s32.totalorder %s30, 3
      %p389 = pnand %p387, %p388
      %p390 = pneg %p389
      // Predicated region
      $region49: #{tpu_custom_call.1} parent=5 // pred_check
        _
      $region50: #{tpu_custom_call.1} parent=5 // pred_check_branch
        %392 = sbr.rel (%p389) target = $region52
      $region51: #{tpu_custom_call.1} parent=5 // pred_region
        %s393 = ssub.s32 %s30, 1
        %s394 = sand.u32 %s43, 1
        %s395 = scalar_lea.sflag [#allocation5], %s394
        %s396 = sand.u32 %s43, 1
        %s397 = smul.addr %s396, 24
        %s398 = scalar_lea.vmem [#allocation4], %s397
        // Predicated region
        $region53: #{tpu_custom_call.1} parent=51 // pred_check
          %p399 = pneg %p56
        $region54: #{tpu_custom_call.1} parent=51 // pred_check_branch
          %401 = sbr.rel (%p399) target = $region56
        $region55: #{tpu_custom_call.1} parent=51 // pred_region
          %402 = dma.done %s395, 384
        $region56: #{tpu_custom_call.1} parent=51 // pred_fallthru
          _
        %s403 = sand.u32 %s35, 1
        %s404 = scalar_lea.sflag [#allocation8], %s403
        %s405 = sand.u32 %s71, 1
        %s406 = smul.addr %s405, 24
        %s407 = scalar_lea.vmem [#allocation7], %s406
        // Predicated region
        $region57: #{tpu_custom_call.1} parent=51 // pred_check
          %p408 = pneg %p84
        $region58: #{tpu_custom_call.1} parent=51 // pred_check_branch
          %410 = sbr.rel (%p408) target = $region60
        $region59: #{tpu_custom_call.1} parent=51 // pred_region
          %411 = dma.done %s404, 384
        $region60: #{tpu_custom_call.1} parent=51 // pred_fallthru
          _
        // Predicated region
        $region61: #{tpu_custom_call.1} parent=51 // pred_check
          %p412 = pneg %p147
        $region62: #{tpu_custom_call.1} parent=51 // pred_check_branch
          %414 = sbr.rel (%p412) target = $region64
        $region63: #{tpu_custom_call.1} parent=51 // pred_region
          %415 = dma.done [#allocation8], 1536
        $region64: #{tpu_custom_call.1} parent=51 // pred_fallthru
          _
        // Predicated region
        $region65: #{tpu_custom_call.1} parent=51 // pred_check
          %p416 = pneg %p168
        $region66: #{tpu_custom_call.1} parent=51 // pred_check_branch
          %418 = sbr.rel (%p416) target = $region68
        $region67: #{tpu_custom_call.1} parent=51 // pred_region
          %419 = dma.done [#allocation11], 1536
        $region68: #{tpu_custom_call.1} parent=51 // pred_fallthru
          _
        %s420 = sand.u32 %s43, 1
        %s421 = scalar_lea.sflag [#allocation5], %s420
        %s422 = sand.u32 %s43, 1
        %s423 = smul.addr %s422, 24
        %s424 = scalar_lea.vmem [#allocation4], %s423
        %p425 = pneg %p56
        %p426 = pneg %p53
        %s427 = sand.u32 %s35, 1
        %s428 = scalar_lea.sflag [#allocation8], %s427
        %s429 = sand.u32 %s71, 1
        %s430 = smul.addr %s429, 24
        %s431 = scalar_lea.vmem [#allocation7], %s430
        %p432 = pneg %p84
        %p433 = pneg %p81
        %p434 = pneg %p105
        %p435 = pneg %p102
        %p436 = pneg %p126
        %p437 = pneg %p123
        %p438 = pneg %p147
        %p439 = pneg %p144
        %p440 = pneg %p168
        %p441 = pneg %p165
        %p442 = pneg %p189
        %p443 = pneg %p186
        %p444 = pneg %p210
        %p445 = pneg %p207
        %p446 = pneg %p236
        %p447 = pneg %p233
        %s448 = sand.u32 %s223, 1
        %s449 = scalar_lea.sflag [#allocation6], %s448
        %s450 = sand.u32 %s223, 1
        %s451 = smul.addr %s450, 8
        %s452 = scalar_lea.vmem [#allocation12], %s451
        %p453 = pneg %p264
        %p454 = pneg %p261
        %s455 = sand.u32 %s35, 1
        %s456 = scalar_lea.sflag [#allocation14], %s455
        %s457 = sand.u32 %s251, 1
        %s458 = smul.addr %s457, 8
        %s459 = scalar_lea.vmem [#allocation13], %s458
        %p460 = pneg %p285
        %p461 = pneg %p282
        %s462 = smul.u32 4, %s35
        %s463 = ssub.s32 1, %s35
        %s464 = smul.u32 4, %s463
        %s465 = smul.u32 4, %s35
        %s466 = ssub.s32 1, %s35
        %s467 = smul.u32 4, %s466
        %p468 = scmp.eq.s32.totalorder %s35, 0
        // Predicated region
        $region69: #{tpu_custom_call.1} parent=51 // pred_check
          %p469 = pneg %p468
        $region70: #{tpu_custom_call.1} parent=51 // pred_check_branch
          %471 = sbr.rel (%p469) target = $region72
        $region71: #{tpu_custom_call.1} parent=51 // pred_region
          %v472 = vld [vmem:[%s3] sm:$0x3]
          %vm473 = vcmask 254976
          %474 = vst.msk [vmem:[#allocation2] sm:$0x3] %vm473, %v472
          %s475 = scalar_lea.vmem %s3, 2
          %v476 = vld [vmem:[%s475] sm:$0x3]
          %477 = vst.msk [vmem:[#allocation3] sm:$0x3] %vm473, %v476
        $region72: #{tpu_custom_call.1} parent=51 // pred_fallthru
          _
        %v478 = vld [vmem:[%s2] sm:$0x3]
        %v479 = vld [vmem:[%s6] sm:$0x1]
        %v480 = vld [vmem:[%s7] sm:$0x1]
        %s481 = smul.u32 %s35, 4
        %s482 = ssub.s32 1, %s35
        %s483 = smul.u32 %s482, 4
        %v484 = vstv %s481
        %vm485 = vcmp.lt.s32.totalorder %v484, %v478
        %v486 = vld [vmem:[#allocation2] sm:$0x3]
        %v487 = vld [vmem:[%s398] sm:$0x3]
        %v488 = vld [vmem:[%s398 + $0x2] sm:$0x3]
        %v489 = vld [vmem:[%s398 + $0x4] sm:$0x3]
        %v490 = vld [vmem:[#allocation9] sm:$0xff]
        %v491 = vld [vmem:[#allocation9 + $0x8] sm:$0xff]
        %v492 = vld [vmem:[#allocation9 + $0x10] sm:$0xff]
        %v493 = vld [vmem:[#allocation9 + $0x18] sm:$0xff]
        %vm494 = vcmask 261120
        %v496 = vsel %vm494, %v486, 0
        %498 = vmatprep.subr.mxu0 0.0
        %499 = vmatpush1.msra.mxu0 0.0
        %500 = vmatprep.subr.mxu0 0.0
        %501 = vmatpush1.msra.mxu0 0.0
        %502 = vmatprep.subr.mxu0 0.0
        %503 = vmatpush1.msra.mxu0 0.0
        %504 = vmatprep.subr.mxu0 0.0
        %505 = vmatpush1.msra.mxu0 0.0
        %506 = vmatprep.subr.mxu0 0.0
        %507 = vmatpush1.msra.mxu0 0.0
        %508 = vmatprep.subr.mxu0 0.0
        %509 = vmatpush1.msra.mxu0 0.0
        %510 = vmatprep.subr.mxu0 0.0
        %511 = vmatpush1.msra.mxu0 0.0
        %512 = vmatprep.subr.mxu0 0.0
        %513 = vmatpush1.msra.mxu0 0.0
        %514 = vmatprep.subr.mxu0 0.0
        %515 = vmatpush1.msra.mxu0 0.0
        %516 = vmatprep.subr.mxu0 0.0
        %517 = vmatpush1.msra.mxu0 0.0
        %518 = vmatprep.subr.mxu0 0.0
        %519 = vmatpush1.msra.mxu0 0.0
        %520 = vmatprep.subr.mxu0 0.0
        %521 = vmatpush1.msra.mxu0 0.0
        %522 = vmatprep.subr.mxu0 0.0
        %523 = vmatpush1.msra.mxu0 %v493
        %524 = vmatprep.subr.mxu0 0.0
        %525 = vmatpush1.msra.mxu0 %v492
        %526 = vmatprep.subr.mxu0 0.0
        %527 = vmatpush1.msra.mxu0 %v491
        %528 = vmatprep.subr.mxu0 0.0
        %529 = vmatpush1.msra.mxu0 %v490
        %530 = vmatprep.subr.mxu0 0.0
        %531 = vmatpush2.msra.mxu0 0.0
        %532 = vmatprep.subr.mxu0 0.0
        %533 = vmatpush2.msra.mxu0 0.0
        %534 = vmatprep.subr.mxu0 0.0
        %535 = vmatpush2.msra.mxu0 0.0
        %536 = vmatprep.subr.mxu0 0.0
        %537 = vmatpush2.msra.mxu0 0.0
        %538 = vmatprep.subr.mxu0 0.0
        %539 = vmatpush2.msra.mxu0 0.0
        %540 = vmatprep.subr.mxu0 0.0
        %541 = vmatpush2.msra.mxu0 0.0
        %542 = vmatprep.subr.mxu0 0.0
        %543 = vmatpush2.msra.mxu0 0.0
        %544 = vmatprep.subr.mxu0 0.0
        %545 = vmatpush2.msra.mxu0 0.0
        %546 = vmatprep.subr.mxu0 0.0
        %547 = vmatpush2.msra.mxu0 0.0
        %548 = vmatprep.subr.mxu0 0.0
        %549 = vmatpush2.msra.mxu0 0.0
        %550 = vmatprep.subr.mxu0 0.0
        %551 = vmatpush2.msra.mxu0 0.0
        %552 = vmatprep.subr.mxu0 0.0
        %553 = vmatpush2.msra.mxu0 0.0
        %554 = vmatprep.subr.mxu0 0.0
        %555 = vmatpush2.msra.mxu0 0.0
        %556 = vmatprep.subr.mxu0 0.0
        %557 = vmatpush2.msra.mxu0 0.0
        %558 = vmatprep.subr.mxu0 0.0
        %559 = vmatpush2.msra.mxu0 0.0
        %560 = vmatprep.subr.mxu0 0.0
        %561 = vmatpush2.msra.mxu0 0.0
        %562 = vmatprep.mubr.f32.mxu0 0.0
        %563 = vmatmul.mubr.f32.gmra.mxu0 %v496
        %v564 = vpop.f32.mrf.mxu0
        %v565 = vadd.f32 0.0, %v564
        %v566 = vpop.f32.mrf.mxu0
        %567 = vdwg.mxu0
        %s568 = scalar_lea.vmem [#allocation9], 32
        %v569 = vld [vmem:[%s568] sm:$0xff]
        %v570 = vld [vmem:[%s568 + $0x8] sm:$0xff]
        %v571 = vld [vmem:[%s568 + $0x10] sm:$0xff]
        %v572 = vld [vmem:[%s568 + $0x18] sm:$0xff]
        %573 = vmatprep.subr.mxu0 0.0
        %574 = vmatpush1.msra.mxu0 0.0
        %575 = vmatprep.subr.mxu0 0.0
        %576 = vmatpush1.msra.mxu0 0.0
        %577 = vmatprep.subr.mxu0 0.0
        %578 = vmatpush1.msra.mxu0 0.0
        %579 = vmatprep.subr.mxu0 0.0
        %580 = vmatpush1.msra.mxu0 0.0
        %581 = vmatprep.subr.mxu0 0.0
        %582 = vmatpush1.msra.mxu0 0.0
        %583 = vmatprep.subr.mxu0 0.0
        %584 = vmatpush1.msra.mxu0 0.0
        %585 = vmatprep.subr.mxu0 0.0
        %586 = vmatpush1.msra.mxu0 0.0
        %587 = vmatprep.subr.mxu0 0.0
        %588 = vmatpush1.msra.mxu0 0.0
        %589 = vmatprep.subr.mxu0 0.0
        %590 = vmatpush1.msra.mxu0 0.0
        %591 = vmatprep.subr.mxu0 0.0
        %592 = vmatpush1.msra.mxu0 0.0
        %593 = vmatprep.subr.mxu0 0.0
        %594 = vmatpush1.msra.mxu0 0.0
        %595 = vmatprep.subr.mxu0 0.0
        %596 = vmatpush1.msra.mxu0 0.0
        %597 = vmatprep.subr.mxu0 0.0
        %598 = vmatpush1.msra.mxu0 %v572
        %599 = vmatprep.subr.mxu0 0.0
        %600 = vmatpush1.msra.mxu0 %v571
        %601 = vmatprep.subr.mxu0 0.0
        %602 = vmatpush1.msra.mxu0 %v570
        %603 = vmatprep.subr.mxu0 0.0
        %604 = vmatpush1.msra.mxu0 %v569
        %605 = vmatprep.subr.mxu0 0.0
        %606 = vmatpush2.msra.mxu0 0.0
        %607 = vmatprep.subr.mxu0 0.0
        %608 = vmatpush2.msra.mxu0 0.0
        %609 = vmatprep.subr.mxu0 0.0
        %610 = vmatpush2.msra.mxu0 0.0
        %611 = vmatprep.subr.mxu0 0.0
        %612 = vmatpush2.msra.mxu0 0.0
        %613 = vmatprep.subr.mxu0 0.0
        %614 = vmatpush2.msra.mxu0 0.0
        %615 = vmatprep.subr.mxu0 0.0
        %616 = vmatpush2.msra.mxu0 0.0
        %617 = vmatprep.subr.mxu0 0.0
        %618 = vmatpush2.msra.mxu0 0.0
        %619 = vmatprep.subr.mxu0 0.0
        %620 = vmatpush2.msra.mxu0 0.0
        %621 = vmatprep.subr.mxu0 0.0
        %622 = vmatpush2.msra.mxu0 0.0
        %623 = vmatprep.subr.mxu0 0.0
        %624 = vmatpush2.msra.mxu0 0.0
        %625 = vmatprep.subr.mxu0 0.0
        %626 = vmatpush2.msra.mxu0 0.0
        %627 = vmatprep.subr.mxu0 0.0
        %628 = vmatpush2.msra.mxu0 0.0
        %629 = vmatprep.subr.mxu0 0.0
        %630 = vmatpush2.msra.mxu0 0.0
        %631 = vmatprep.subr.mxu0 0.0
        %632 = vmatpush2.msra.mxu0 0.0
        %633 = vmatprep.subr.mxu0 0.0
        %634 = vmatpush2.msra.mxu0 0.0
        %635 = vmatprep.subr.mxu0 0.0
        %636 = vmatpush2.msra.mxu0 0.0
        %637 = vmatprep.mubr.f32.mxu0 0.0
        %638 = vmatmul.mubr.f32.gmra.mxu0 %v496
        %v639 = vpop.f32.mrf.mxu0
        %v640 = vadd.f32 0.0, %v639
        %v641 = vpop.f32.mrf.mxu0
        %642 = vdwg.mxu0
        %s643 = scalar_lea.vmem [#allocation9], 64
        %v644 = vld [vmem:[%s643] sm:$0xff]
        %v645 = vld [vmem:[%s643 + $0x8] sm:$0xff]
        %v646 = vld [vmem:[%s643 + $0x10] sm:$0xff]
        %v647 = vld [vmem:[%s643 + $0x18] sm:$0xff]
        %v649 = vlaneseq
        %v650 = vshrl.u32 %v649, 7
        %v651 = vsub.s32 0, %v650
        %v652 = vrot.slane %v479, %v651
        %654 = vmatprep.subr.mxu0 0.0
        %655 = vmatpush1.msra.mxu0 0.0
        %656 = vmatprep.subr.mxu0 0.0
        %657 = vmatpush1.msra.mxu0 0.0
        %658 = vmatprep.subr.mxu0 0.0
        %659 = vmatpush1.msra.mxu0 0.0
        %660 = vmatprep.subr.mxu0 0.0
        %661 = vmatpush1.msra.mxu0 0.0
        %662 = vmatprep.subr.mxu0 0.0
        %663 = vmatpush1.msra.mxu0 0.0
        %664 = vmatprep.subr.mxu0 0.0
        %665 = vmatpush1.msra.mxu0 0.0
        %666 = vmatprep.subr.mxu0 0.0
        %667 = vmatpush1.msra.mxu0 0.0
        %668 = vmatprep.subr.mxu0 0.0
        %669 = vmatpush1.msra.mxu0 0.0
        %670 = vmatprep.subr.mxu0 0.0
        %671 = vmatpush1.msra.mxu0 0.0
        %672 = vmatprep.subr.mxu0 0.0
        %673 = vmatpush1.msra.mxu0 0.0
        %674 = vmatprep.subr.mxu0 0.0
        %675 = vmatpush1.msra.mxu0 0.0
        %676 = vmatprep.subr.mxu0 0.0
        %677 = vmatpush1.msra.mxu0 0.0
        %678 = vmatprep.subr.mxu0 0.0
        %679 = vmatpush1.msra.mxu0 %v647
        %680 = vmatprep.subr.mxu0 0.0
        %681 = vmatpush1.msra.mxu0 %v646
        %682 = vmatprep.subr.mxu0 0.0
        %683 = vmatpush1.msra.mxu0 %v645
        %684 = vmatprep.subr.mxu0 0.0
        %685 = vmatpush1.msra.mxu0 %v644
        %686 = vmatprep.subr.mxu0 0.0
        %687 = vmatpush2.msra.mxu0 0.0
        %688 = vmatprep.subr.mxu0 0.0
        %689 = vmatpush2.msra.mxu0 0.0
        %690 = vmatprep.subr.mxu0 0.0
        %691 = vmatpush2.msra.mxu0 0.0
        %692 = vmatprep.subr.mxu0 0.0
        %693 = vmatpush2.msra.mxu0 0.0
        %694 = vmatprep.subr.mxu0 0.0
        %695 = vmatpush2.msra.mxu0 0.0
        %696 = vmatprep.subr.mxu0 0.0
        %697 = vmatpush2.msra.mxu0 0.0
        %698 = vmatprep.subr.mxu0 0.0
        %699 = vmatpush2.msra.mxu0 0.0
        %700 = vmatprep.subr.mxu0 0.0
        %701 = vmatpush2.msra.mxu0 0.0
        %702 = vmatprep.subr.mxu0 0.0
        %703 = vmatpush2.msra.mxu0 0.0
        %704 = vmatprep.subr.mxu0 0.0
        %705 = vmatpush2.msra.mxu0 0.0
        %706 = vmatprep.subr.mxu0 0.0
        %707 = vmatpush2.msra.mxu0 0.0
        %708 = vmatprep.subr.mxu0 0.0
        %709 = vmatpush2.msra.mxu0 0.0
        %710 = vmatprep.subr.mxu0 0.0
        %711 = vmatpush2.msra.mxu0 0.0
        %712 = vmatprep.subr.mxu0 0.0
        %713 = vmatpush2.msra.mxu0 0.0
        %714 = vmatprep.subr.mxu0 0.0
        %715 = vmatpush2.msra.mxu0 0.0
        %716 = vmatprep.subr.mxu0 0.0
        %717 = vmatpush2.msra.mxu0 0.0
        %718 = vmatprep.mubr.f32.mxu0 0.0
        %719 = vmatmul.mubr.f32.gmra.mxu0 %v496
        %v720 = vpop.f32.mrf.mxu0
        %v721 = vadd.f32 %v652, %v720
        %v722 = vpop.f32.mrf.mxu0
        %723 = vdwg.mxu0
        %v724 = vadd.f32 %v487, %v565
        %v725 = vxor.u32 %v724, 2147483648
        %v726 = vmul.f32 %v725, 1.442695
        %v727 = vpow.pop %v726
        %v728 = vadd.f32 %v727, 1.0
        %v729 = vrcp.pop %v728
        %v730 = vmul.f32 1.0, %v729
        %v731 = vadd.f32 %v488, %v640
        %v732 = vxor.u32 %v731, 2147483648
        %v733 = vmul.f32 %v732, 1.442695
        %v734 = vpow.pop %v733
        %v735 = vadd.f32 %v734, 1.0
        %v736 = vrcp.pop %v735
        %v737 = vmul.f32 1.0, %v736
        %v738 = vmul.f32 %v730, %v721
        %v739 = vadd.f32 %v489, %v738
        %v740 = vtanh.pop %v739
        %v741 = vsub.f32 1.0, %v737
        %v742 = vmul.f32 %v741, %v740
        %v743 = vmul.f32 %v737, %v486
        %v744 = vadd.f32 %v742, %v743
        %v745 = vsel %vm485, 1, 0
        %746 = vset.pattern.permute.xlu0 0
        %747 = vperm.xlu0 %746, %v745
        %v748 = vpop.permute.xlu0 %747
        %vm749 = vcmp.eq.s32.totalorder %v748, 1
        %v750 = vsel %vm749, %v744, %v486
        %vm751 = vcmask 254976
        %752 = vst.msk [vmem:[#allocation2] sm:$0x3] %vm751, %v750
        %v753 = vsel %vm749, %v744, 0.0
        %754 = vst.msk [vmem:[%s452] sm:$0x3] %vm751, %v753
        %s755 = sadd.s32 %s483, 3
        %v756 = vstv %s755
        %vm757 = vcmp.lt.s32.totalorder %v756, %v478
        %v758 = vld [vmem:[#allocation3] sm:$0x3]
        %s759 = scalar_lea.vmem %s407, 18 [#allocation7]
        %v760 = vld [vmem:[%s759] sm:$0x3]
        %v761 = vld [vmem:[%s759 + $0x2] sm:$0x3]
        %v762 = vld [vmem:[%s759 + $0x4] sm:$0x3]
        %v763 = vld [vmem:[#allocation10] sm:$0xff]
        %v764 = vld [vmem:[#allocation10 + $0x8] sm:$0xff]
        %v765 = vld [vmem:[#allocation10 + $0x10] sm:$0xff]
        %v766 = vld [vmem:[#allocation10 + $0x18] sm:$0xff]
        %v768 = vsel %vm494, %v758, 0
        %770 = vmatprep.subr.mxu0 0.0
        %771 = vmatpush1.msra.mxu0 0.0
        %772 = vmatprep.subr.mxu0 0.0
        %773 = vmatpush1.msra.mxu0 0.0
        %774 = vmatprep.subr.mxu0 0.0
        %775 = vmatpush1.msra.mxu0 0.0
        %776 = vmatprep.subr.mxu0 0.0
        %777 = vmatpush1.msra.mxu0 0.0
        %778 = vmatprep.subr.mxu0 0.0
        %779 = vmatpush1.msra.mxu0 0.0
        %780 = vmatprep.subr.mxu0 0.0
        %781 = vmatpush1.msra.mxu0 0.0
        %782 = vmatprep.subr.mxu0 0.0
        %783 = vmatpush1.msra.mxu0 0.0
        %784 = vmatprep.subr.mxu0 0.0
        %785 = vmatpush1.msra.mxu0 0.0
        %786 = vmatprep.subr.mxu0 0.0
        %787 = vmatpush1.msra.mxu0 0.0
        %788 = vmatprep.subr.mxu0 0.0
        %789 = vmatpush1.msra.mxu0 0.0
        %790 = vmatprep.subr.mxu0 0.0
        %791 = vmatpush1.msra.mxu0 0.0
        %792 = vmatprep.subr.mxu0 0.0
        %793 = vmatpush1.msra.mxu0 0.0
        %794 = vmatprep.subr.mxu0 0.0
        %795 = vmatpush1.msra.mxu0 %v766
        %796 = vmatprep.subr.mxu0 0.0
        %797 = vmatpush1.msra.mxu0 %v765
        %798 = vmatprep.subr.mxu0 0.0
        %799 = vmatpush1.msra.mxu0 %v764
        %800 = vmatprep.subr.mxu0 0.0
        %801 = vmatpush1.msra.mxu0 %v763
        %802 = vmatprep.subr.mxu0 0.0
        %803 = vmatpush2.msra.mxu0 0.0
        %804 = vmatprep.subr.mxu0 0.0
        %805 = vmatpush2.msra.mxu0 0.0
        %806 = vmatprep.subr.mxu0 0.0
        %807 = vmatpush2.msra.mxu0 0.0
        %808 = vmatprep.subr.mxu0 0.0
        %809 = vmatpush2.msra.mxu0 0.0
        %810 = vmatprep.subr.mxu0 0.0
        %811 = vmatpush2.msra.mxu0 0.0
        %812 = vmatprep.subr.mxu0 0.0
        %813 = vmatpush2.msra.mxu0 0.0
        %814 = vmatprep.subr.mxu0 0.0
        %815 = vmatpush2.msra.mxu0 0.0
        %816 = vmatprep.subr.mxu0 0.0
        %817 = vmatpush2.msra.mxu0 0.0
        %818 = vmatprep.subr.mxu0 0.0
        %819 = vmatpush2.msra.mxu0 0.0
        %820 = vmatprep.subr.mxu0 0.0
        %821 = vmatpush2.msra.mxu0 0.0
        %822 = vmatprep.subr.mxu0 0.0
        %823 = vmatpush2.msra.mxu0 0.0
        %824 = vmatprep.subr.mxu0 0.0
        %825 = vmatpush2.msra.mxu0 0.0
        %826 = vmatprep.subr.mxu0 0.0
        %827 = vmatpush2.msra.mxu0 0.0
        %828 = vmatprep.subr.mxu0 0.0
        %829 = vmatpush2.msra.mxu0 0.0
        %830 = vmatprep.subr.mxu0 0.0
        %831 = vmatpush2.msra.mxu0 0.0
        %832 = vmatprep.subr.mxu0 0.0
        %833 = vmatpush2.msra.mxu0 0.0
        %834 = vmatprep.mubr.f32.mxu0 0.0
        %835 = vmatmul.mubr.f32.gmra.mxu0 %v768
        %v836 = vpop.f32.mrf.mxu0
        %v837 = vadd.f32 0.0, %v836
        %v838 = vpop.f32.mrf.mxu0
        %839 = vdwg.mxu0
        %s840 = scalar_lea.vmem [#allocation10], 32
        %v841 = vld [vmem:[%s840] sm:$0xff]
        %v842 = vld [vmem:[%s840 + $0x8] sm:$0xff]
        %v843 = vld [vmem:[%s840 + $0x10] sm:$0xff]
        %v844 = vld [vmem:[%s840 + $0x18] sm:$0xff]
        %845 = vmatprep.subr.mxu0 0.0
        %846 = vmatpush1.msra.mxu0 0.0
        %847 = vmatprep.subr.mxu0 0.0
        %848 = vmatpush1.msra.mxu0 0.0
        %849 = vmatprep.subr.mxu0 0.0
        %850 = vmatpush1.msra.mxu0 0.0
        %851 = vmatprep.subr.mxu0 0.0
        %852 = vmatpush1.msra.mxu0 0.0
        %853 = vmatprep.subr.mxu0 0.0
        %854 = vmatpush1.msra.mxu0 0.0
        %855 = vmatprep.subr.mxu0 0.0
        %856 = vmatpush1.msra.mxu0 0.0
        %857 = vmatprep.subr.mxu0 0.0
        %858 = vmatpush1.msra.mxu0 0.0
        %859 = vmatprep.subr.mxu0 0.0
        %860 = vmatpush1.msra.mxu0 0.0
        %861 = vmatprep.subr.mxu0 0.0
        %862 = vmatpush1.msra.mxu0 0.0
        %863 = vmatprep.subr.mxu0 0.0
        %864 = vmatpush1.msra.mxu0 0.0
        %865 = vmatprep.subr.mxu0 0.0
        %866 = vmatpush1.msra.mxu0 0.0
        %867 = vmatprep.subr.mxu0 0.0
        %868 = vmatpush1.msra.mxu0 0.0
        %869 = vmatprep.subr.mxu0 0.0
        %870 = vmatpush1.msra.mxu0 %v844
        %871 = vmatprep.subr.mxu0 0.0
        %872 = vmatpush1.msra.mxu0 %v843
        %873 = vmatprep.subr.mxu0 0.0
        %874 = vmatpush1.msra.mxu0 %v842
        %875 = vmatprep.subr.mxu0 0.0
        %876 = vmatpush1.msra.mxu0 %v841
        %877 = vmatprep.subr.mxu0 0.0
        %878 = vmatpush2.msra.mxu0 0.0
        %879 = vmatprep.subr.mxu0 0.0
        %880 = vmatpush2.msra.mxu0 0.0
        %881 = vmatprep.subr.mxu0 0.0
        %882 = vmatpush2.msra.mxu0 0.0
        %883 = vmatprep.subr.mxu0 0.0
        %884 = vmatpush2.msra.mxu0 0.0
        %885 = vmatprep.subr.mxu0 0.0
        %886 = vmatpush2.msra.mxu0 0.0
        %887 = vmatprep.subr.mxu0 0.0
        %888 = vmatpush2.msra.mxu0 0.0
        %889 = vmatprep.subr.mxu0 0.0
        %890 = vmatpush2.msra.mxu0 0.0
        %891 = vmatprep.subr.mxu0 0.0
        %892 = vmatpush2.msra.mxu0 0.0
        %893 = vmatprep.subr.mxu0 0.0
        %894 = vmatpush2.msra.mxu0 0.0
        %895 = vmatprep.subr.mxu0 0.0
        %896 = vmatpush2.msra.mxu0 0.0
        %897 = vmatprep.subr.mxu0 0.0
        %898 = vmatpush2.msra.mxu0 0.0
        %899 = vmatprep.subr.mxu0 0.0
        %900 = vmatpush2.msra.mxu0 0.0
        %901 = vmatprep.subr.mxu0 0.0
        %902 = vmatpush2.msra.mxu0 0.0
        %903 = vmatprep.subr.mxu0 0.0
        %904 = vmatpush2.msra.mxu0 0.0
        %905 = vmatprep.subr.mxu0 0.0
        %906 = vmatpush2.msra.mxu0 0.0
        %907 = vmatprep.subr.mxu0 0.0
        %908 = vmatpush2.msra.mxu0 0.0
        %909 = vmatprep.mubr.f32.mxu0 0.0
        %910 = vmatmul.mubr.f32.gmra.mxu0 %v768
        %v911 = vpop.f32.mrf.mxu0
        %v912 = vadd.f32 0.0, %v911
        %v913 = vpop.f32.mrf.mxu0
        %914 = vdwg.mxu0
        %s915 = scalar_lea.vmem [#allocation10], 64
        %v916 = vld [vmem:[%s915] sm:$0xff]
        %v917 = vld [vmem:[%s915 + $0x8] sm:$0xff]
        %v918 = vld [vmem:[%s915 + $0x10] sm:$0xff]
        %v919 = vld [vmem:[%s915 + $0x18] sm:$0xff]
        %v921 = vlaneseq
        %v922 = vshrl.u32 %v921, 7
        %v923 = vsub.s32 0, %v922
        %v924 = vrot.slane %v480, %v923
        %926 = vmatprep.subr.mxu0 0.0
        %927 = vmatpush1.msra.mxu0 0.0
        %928 = vmatprep.subr.mxu0 0.0
        %929 = vmatpush1.msra.mxu0 0.0
        %930 = vmatprep.subr.mxu0 0.0
        %931 = vmatpush1.msra.mxu0 0.0
        %932 = vmatprep.subr.mxu0 0.0
        %933 = vmatpush1.msra.mxu0 0.0
        %934 = vmatprep.subr.mxu0 0.0
        %935 = vmatpush1.msra.mxu0 0.0
        %936 = vmatprep.subr.mxu0 0.0
        %937 = vmatpush1.msra.mxu0 0.0
        %938 = vmatprep.subr.mxu0 0.0
        %939 = vmatpush1.msra.mxu0 0.0
        %940 = vmatprep.subr.mxu0 0.0
        %941 = vmatpush1.msra.mxu0 0.0
        %942 = vmatprep.subr.mxu0 0.0
        %943 = vmatpush1.msra.mxu0 0.0
        %944 = vmatprep.subr.mxu0 0.0
        %945 = vmatpush1.msra.mxu0 0.0
        %946 = vmatprep.subr.mxu0 0.0
        %947 = vmatpush1.msra.mxu0 0.0
        %948 = vmatprep.subr.mxu0 0.0
        %949 = vmatpush1.msra.mxu0 0.0
        %950 = vmatprep.subr.mxu0 0.0
        %951 = vmatpush1.msra.mxu0 %v919
        %952 = vmatprep.subr.mxu0 0.0
        %953 = vmatpush1.msra.mxu0 %v918
        %954 = vmatprep.subr.mxu0 0.0
        %955 = vmatpush1.msra.mxu0 %v917
        %956 = vmatprep.subr.mxu0 0.0
        %957 = vmatpush1.msra.mxu0 %v916
        %958 = vmatprep.subr.mxu0 0.0
        %959 = vmatpush2.msra.mxu0 0.0
        %960 = vmatprep.subr.mxu0 0.0
        %961 = vmatpush2.msra.mxu0 0.0
        %962 = vmatprep.subr.mxu0 0.0
        %963 = vmatpush2.msra.mxu0 0.0
        %964 = vmatprep.subr.mxu0 0.0
        %965 = vmatpush2.msra.mxu0 0.0
        %966 = vmatprep.subr.mxu0 0.0
        %967 = vmatpush2.msra.mxu0 0.0
        %968 = vmatprep.subr.mxu0 0.0
        %969 = vmatpush2.msra.mxu0 0.0
        %970 = vmatprep.subr.mxu0 0.0
        %971 = vmatpush2.msra.mxu0 0.0
        %972 = vmatprep.subr.mxu0 0.0
        %973 = vmatpush2.msra.mxu0 0.0
        %974 = vmatprep.subr.mxu0 0.0
        %975 = vmatpush2.msra.mxu0 0.0
        %976 = vmatprep.subr.mxu0 0.0
        %977 = vmatpush2.msra.mxu0 0.0
        %978 = vmatprep.subr.mxu0 0.0
        %979 = vmatpush2.msra.mxu0 0.0
        %980 = vmatprep.subr.mxu0 0.0
        %981 = vmatpush2.msra.mxu0 0.0
        %982 = vmatprep.subr.mxu0 0.0
        %983 = vmatpush2.msra.mxu0 0.0
        %984 = vmatprep.subr.mxu0 0.0
        %985 = vmatpush2.msra.mxu0 0.0
        %986 = vmatprep.subr.mxu0 0.0
        %987 = vmatpush2.msra.mxu0 0.0
        %988 = vmatprep.subr.mxu0 0.0
        %989 = vmatpush2.msra.mxu0 0.0
        %990 = vmatprep.mubr.f32.mxu0 0.0
        %991 = vmatmul.mubr.f32.gmra.mxu0 %v768
        %v992 = vpop.f32.mrf.mxu0
        %v993 = vadd.f32 %v924, %v992
        %v994 = vpop.f32.mrf.mxu0
        %995 = vdwg.mxu0
        %v996 = vadd.f32 %v760, %v837
        %v997 = vxor.u32 %v996, 2147483648
        %v998 = vmul.f32 %v997, 1.442695
        %v999 = vpow.pop %v998
        %v1000 = vadd.f32 %v999, 1.0
        %v1001 = vrcp.pop %v1000
        %v1002 = vmul.f32 1.0, %v1001
        %v1003 = vadd.f32 %v761, %v912
        %v1004 = vxor.u32 %v1003, 2147483648
        %v1005 = vmul.f32 %v1004, 1.442695
        %v1006 = vpow.pop %v1005
        %v1007 = vadd.f32 %v1006, 1.0
        %v1008 = vrcp.pop %v1007
        %v1009 = vmul.f32 1.0, %v1008
        %v1010 = vmul.f32 %v1002, %v993
        %v1011 = vadd.f32 %v762, %v1010
        %v1012 = vtanh.pop %v1011
        %v1013 = vsub.f32 1.0, %v1009
        %v1014 = vmul.f32 %v1013, %v1012
        %v1015 = vmul.f32 %v1009, %v758
        %v1016 = vadd.f32 %v1014, %v1015
        %v1017 = vsel %vm757, 1, 0
        %1018 = vset.pattern.permute.xlu0 0
        %1019 = vperm.xlu0 %1018, %v1017
        %v1020 = vpop.permute.xlu0 %1019
        %vm1021 = vcmp.eq.s32.totalorder %v1020, 1
        %v1022 = vsel %vm1021, %v1016, %v758
        %1023 = vst.msk [vmem:[#allocation3] sm:$0x3] %vm751, %v1022
        %v1024 = vsel %vm1021, %v1016, 0.0
        %s1025 = scalar_lea.vmem %s459, 6 [#allocation13]
        %1026 = vst.msk [vmem:[%s1025] sm:$0x3] %vm751, %v1024
        %s1027 = sadd.s32 %s481, 1
        %v1028 = vstv %s1027
        %vm1029 = vcmp.lt.s32.totalorder %v1028, %v478
        %v1030 = vld [vmem:[#allocation2] sm:$0x3]
        %s1031 = scalar_lea.vmem %s398, 6 [#allocation4]
        %v1032 = vld [vmem:[%s1031] sm:$0x3]
        %v1033 = vld [vmem:[%s1031 + $0x2] sm:$0x3]
        %v1034 = vld [vmem:[%s1031 + $0x4] sm:$0x3]
        %v1035 = vld [vmem:[#allocation9] sm:$0xff]
        %v1036 = vld [vmem:[#allocation9 + $0x8] sm:$0xff]
        %v1037 = vld [vmem:[#allocation9 + $0x10] sm:$0xff]
        %v1038 = vld [vmem:[#allocation9 + $0x18] sm:$0xff]
        %v1040 = vsel %vm494, %v1030, 0
        %1042 = vmatprep.subr.mxu0 0.0
        %1043 = vmatpush1.msra.mxu0 0.0
        %1044 = vmatprep.subr.mxu0 0.0
        %1045 = vmatpush1.msra.mxu0 0.0
        %1046 = vmatprep.subr.mxu0 0.0
        %1047 = vmatpush1.msra.mxu0 0.0
        %1048 = vmatprep.subr.mxu0 0.0
        %1049 = vmatpush1.msra.mxu0 0.0
        %1050 = vmatprep.subr.mxu0 0.0
        %1051 = vmatpush1.msra.mxu0 0.0
        %1052 = vmatprep.subr.mxu0 0.0
        %1053 = vmatpush1.msra.mxu0 0.0
        %1054 = vmatprep.subr.mxu0 0.0
        %1055 = vmatpush1.msra.mxu0 0.0
        %1056 = vmatprep.subr.mxu0 0.0
        %1057 = vmatpush1.msra.mxu0 0.0
        %1058 = vmatprep.subr.mxu0 0.0
        %1059 = vmatpush1.msra.mxu0 0.0
        %1060 = vmatprep.subr.mxu0 0.0
        %1061 = vmatpush1.msra.mxu0 0.0
        %1062 = vmatprep.subr.mxu0 0.0
        %1063 = vmatpush1.msra.mxu0 0.0
        %1064 = vmatprep.subr.mxu0 0.0
        %1065 = vmatpush1.msra.mxu0 0.0
        %1066 = vmatprep.subr.mxu0 0.0
        %1067 = vmatpush1.msra.mxu0 %v1038
        %1068 = vmatprep.subr.mxu0 0.0
        %1069 = vmatpush1.msra.mxu0 %v1037
        %1070 = vmatprep.subr.mxu0 0.0
        %1071 = vmatpush1.msra.mxu0 %v1036
        %1072 = vmatprep.subr.mxu0 0.0
        %1073 = vmatpush1.msra.mxu0 %v1035
        %1074 = vmatprep.subr.mxu0 0.0
        %1075 = vmatpush2.msra.mxu0 0.0
        %1076 = vmatprep.subr.mxu0 0.0
        %1077 = vmatpush2.msra.mxu0 0.0
        %1078 = vmatprep.subr.mxu0 0.0
        %1079 = vmatpush2.msra.mxu0 0.0
        %1080 = vmatprep.subr.mxu0 0.0
        %1081 = vmatpush2.msra.mxu0 0.0
        %1082 = vmatprep.subr.mxu0 0.0
        %1083 = vmatpush2.msra.mxu0 0.0
        %1084 = vmatprep.subr.mxu0 0.0
        %1085 = vmatpush2.msra.mxu0 0.0
        %1086 = vmatprep.subr.mxu0 0.0
        %1087 = vmatpush2.msra.mxu0 0.0
        %1088 = vmatprep.subr.mxu0 0.0
        %1089 = vmatpush2.msra.mxu0 0.0
        %1090 = vmatprep.subr.mxu0 0.0
        %1091 = vmatpush2.msra.mxu0 0.0
        %1092 = vmatprep.subr.mxu0 0.0
        %1093 = vmatpush2.msra.mxu0 0.0
        %1094 = vmatprep.subr.mxu0 0.0
        %1095 = vmatpush2.msra.mxu0 0.0
        %1096 = vmatprep.subr.mxu0 0.0
        %1097 = vmatpush2.msra.mxu0 0.0
        %1098 = vmatprep.subr.mxu0 0.0
        %1099 = vmatpush2.msra.mxu0 0.0
        %1100 = vmatprep.subr.mxu0 0.0
        %1101 = vmatpush2.msra.mxu0 0.0
        %1102 = vmatprep.subr.mxu0 0.0
        %1103 = vmatpush2.msra.mxu0 0.0
        %1104 = vmatprep.subr.mxu0 0.0
        %1105 = vmatpush2.msra.mxu0 0.0
        %1106 = vmatprep.mubr.f32.mxu0 0.0
        %1107 = vmatmul.mubr.f32.gmra.mxu0 %v1040
        %v1108 = vpop.f32.mrf.mxu0
        %v1109 = vadd.f32 0.0, %v1108
        %v1110 = vpop.f32.mrf.mxu0
        %1111 = vdwg.mxu0
        %v1112 = vld [vmem:[%s568] sm:$0xff]
        %v1113 = vld [vmem:[%s568 + $0x8] sm:$0xff]
        %v1114 = vld [vmem:[%s568 + $0x10] sm:$0xff]
        %v1115 = vld [vmem:[%s568 + $0x18] sm:$0xff]
        %1116 = vmatprep.subr.mxu0 0.0
        %1117 = vmatpush1.msra.mxu0 0.0
        %1118 = vmatprep.subr.mxu0 0.0
        %1119 = vmatpush1.msra.mxu0 0.0
        %1120 = vmatprep.subr.mxu0 0.0
        %1121 = vmatpush1.msra.mxu0 0.0
        %1122 = vmatprep.subr.mxu0 0.0
        %1123 = vmatpush1.msra.mxu0 0.0
        %1124 = vmatprep.subr.mxu0 0.0
        %1125 = vmatpush1.msra.mxu0 0.0
        %1126 = vmatprep.subr.mxu0 0.0
        %1127 = vmatpush1.msra.mxu0 0.0
        %1128 = vmatprep.subr.mxu0 0.0
        %1129 = vmatpush1.msra.mxu0 0.0
        %1130 = vmatprep.subr.mxu0 0.0
        %1131 = vmatpush1.msra.mxu0 0.0
        %1132 = vmatprep.subr.mxu0 0.0
        %1133 = vmatpush1.msra.mxu0 0.0
        %1134 = vmatprep.subr.mxu0 0.0
        %1135 = vmatpush1.msra.mxu0 0.0
        %1136 = vmatprep.subr.mxu0 0.0
        %1137 = vmatpush1.msra.mxu0 0.0
        %1138 = vmatprep.subr.mxu0 0.0
        %1139 = vmatpush1.msra.mxu0 0.0
        %1140 = vmatprep.subr.mxu0 0.0
        %1141 = vmatpush1.msra.mxu0 %v1115
        %1142 = vmatprep.subr.mxu0 0.0
        %1143 = vmatpush1.msra.mxu0 %v1114
        %1144 = vmatprep.subr.mxu0 0.0
        %1145 = vmatpush1.msra.mxu0 %v1113
        %1146 = vmatprep.subr.mxu0 0.0
        %1147 = vmatpush1.msra.mxu0 %v1112
        %1148 = vmatprep.subr.mxu0 0.0
        %1149 = vmatpush2.msra.mxu0 0.0
        %1150 = vmatprep.subr.mxu0 0.0
        %1151 = vmatpush2.msra.mxu0 0.0
        %1152 = vmatprep.subr.mxu0 0.0
        %1153 = vmatpush2.msra.mxu0 0.0
        %1154 = vmatprep.subr.mxu0 0.0
        %1155 = vmatpush2.msra.mxu0 0.0
        %1156 = vmatprep.subr.mxu0 0.0
        %1157 = vmatpush2.msra.mxu0 0.0
        %1158 = vmatprep.subr.mxu0 0.0
        %1159 = vmatpush2.msra.mxu0 0.0
        %1160 = vmatprep.subr.mxu0 0.0
        %1161 = vmatpush2.msra.mxu0 0.0
        %1162 = vmatprep.subr.mxu0 0.0
        %1163 = vmatpush2.msra.mxu0 0.0
        %1164 = vmatprep.subr.mxu0 0.0
        %1165 = vmatpush2.msra.mxu0 0.0
        %1166 = vmatprep.subr.mxu0 0.0
        %1167 = vmatpush2.msra.mxu0 0.0
        %1168 = vmatprep.subr.mxu0 0.0
        %1169 = vmatpush2.msra.mxu0 0.0
        %1170 = vmatprep.subr.mxu0 0.0
        %1171 = vmatpush2.msra.mxu0 0.0
        %1172 = vmatprep.subr.mxu0 0.0
        %1173 = vmatpush2.msra.mxu0 0.0
        %1174 = vmatprep.subr.mxu0 0.0
        %1175 = vmatpush2.msra.mxu0 0.0
        %1176 = vmatprep.subr.mxu0 0.0
        %1177 = vmatpush2.msra.mxu0 0.0
        %1178 = vmatprep.subr.mxu0 0.0
        %1179 = vmatpush2.msra.mxu0 0.0
        %1180 = vmatprep.mubr.f32.mxu0 0.0
        %1181 = vmatmul.mubr.f32.gmra.mxu0 %v1040
        %v1182 = vpop.f32.mrf.mxu0
        %v1183 = vadd.f32 0.0, %v1182
        %v1184 = vpop.f32.mrf.mxu0
        %1185 = vdwg.mxu0
        %v1186 = vld [vmem:[%s643] sm:$0xff]
        %v1187 = vld [vmem:[%s643 + $0x8] sm:$0xff]
        %v1188 = vld [vmem:[%s643 + $0x10] sm:$0xff]
        %v1189 = vld [vmem:[%s643 + $0x18] sm:$0xff]
        %1190 = vmatprep.subr.mxu0 0.0
        %1191 = vmatpush1.msra.mxu0 0.0
        %1192 = vmatprep.subr.mxu0 0.0
        %1193 = vmatpush1.msra.mxu0 0.0
        %1194 = vmatprep.subr.mxu0 0.0
        %1195 = vmatpush1.msra.mxu0 0.0
        %1196 = vmatprep.subr.mxu0 0.0
        %1197 = vmatpush1.msra.mxu0 0.0
        %1198 = vmatprep.subr.mxu0 0.0
        %1199 = vmatpush1.msra.mxu0 0.0
        %1200 = vmatprep.subr.mxu0 0.0
        %1201 = vmatpush1.msra.mxu0 0.0
        %1202 = vmatprep.subr.mxu0 0.0
        %1203 = vmatpush1.msra.mxu0 0.0
        %1204 = vmatprep.subr.mxu0 0.0
        %1205 = vmatpush1.msra.mxu0 0.0
        %1206 = vmatprep.subr.mxu0 0.0
        %1207 = vmatpush1.msra.mxu0 0.0
        %1208 = vmatprep.subr.mxu0 0.0
        %1209 = vmatpush1.msra.mxu0 0.0
        %1210 = vmatprep.subr.mxu0 0.0
        %1211 = vmatpush1.msra.mxu0 0.0
        %1212 = vmatprep.subr.mxu0 0.0
        %1213 = vmatpush1.msra.mxu0 0.0
        %1214 = vmatprep.subr.mxu0 0.0
        %1215 = vmatpush1.msra.mxu0 %v1189
        %1216 = vmatprep.subr.mxu0 0.0
        %1217 = vmatpush1.msra.mxu0 %v1188
        %1218 = vmatprep.subr.mxu0 0.0
        %1219 = vmatpush1.msra.mxu0 %v1187
        %1220 = vmatprep.subr.mxu0 0.0
        %1221 = vmatpush1.msra.mxu0 %v1186
        %1222 = vmatprep.subr.mxu0 0.0
        %1223 = vmatpush2.msra.mxu0 0.0
        %1224 = vmatprep.subr.mxu0 0.0
        %1225 = vmatpush2.msra.mxu0 0.0
        %1226 = vmatprep.subr.mxu0 0.0
        %1227 = vmatpush2.msra.mxu0 0.0
        %1228 = vmatprep.subr.mxu0 0.0
        %1229 = vmatpush2.msra.mxu0 0.0
        %1230 = vmatprep.subr.mxu0 0.0
        %1231 = vmatpush2.msra.mxu0 0.0
        %1232 = vmatprep.subr.mxu0 0.0
        %1233 = vmatpush2.msra.mxu0 0.0
        %1234 = vmatprep.subr.mxu0 0.0
        %1235 = vmatpush2.msra.mxu0 0.0
        %1236 = vmatprep.subr.mxu0 0.0
        %1237 = vmatpush2.msra.mxu0 0.0
        %1238 = vmatprep.subr.mxu0 0.0
        %1239 = vmatpush2.msra.mxu0 0.0
        %1240 = vmatprep.subr.mxu0 0.0
        %1241 = vmatpush2.msra.mxu0 0.0
        %1242 = vmatprep.subr.mxu0 0.0
        %1243 = vmatpush2.msra.mxu0 0.0
        %1244 = vmatprep.subr.mxu0 0.0
        %1245 = vmatpush2.msra.mxu0 0.0
        %1246 = vmatprep.subr.mxu0 0.0
        %1247 = vmatpush2.msra.mxu0 0.0
        %1248 = vmatprep.subr.mxu0 0.0
        %1249 = vmatpush2.msra.mxu0 0.0
        %1250 = vmatprep.subr.mxu0 0.0
        %1251 = vmatpush2.msra.mxu0 0.0
        %1252 = vmatprep.subr.mxu0 0.0
        %1253 = vmatpush2.msra.mxu0 0.0
        %1254 = vmatprep.mubr.f32.mxu0 0.0
        %1255 = vmatmul.mubr.f32.gmra.mxu0 %v1040
        %v1256 = vpop.f32.mrf.mxu0
        %v1257 = vadd.f32 %v652, %v1256
        %v1258 = vpop.f32.mrf.mxu0
        %1259 = vdwg.mxu0
        %v1260 = vadd.f32 %v1032, %v1109
        %v1261 = vxor.u32 %v1260, 2147483648
        %v1262 = vmul.f32 %v1261, 1.442695
        %v1263 = vpow.pop %v1262
        %v1264 = vadd.f32 %v1263, 1.0
        %v1265 = vrcp.pop %v1264
        %v1266 = vmul.f32 1.0, %v1265
        %v1267 = vadd.f32 %v1033, %v1183
        %v1268 = vxor.u32 %v1267, 2147483648
        %v1269 = vmul.f32 %v1268, 1.442695
        %v1270 = vpow.pop %v1269
        %v1271 = vadd.f32 %v1270, 1.0
        %v1272 = vrcp.pop %v1271
        %v1273 = vmul.f32 1.0, %v1272
        %v1274 = vmul.f32 %v1266, %v1257
        %v1275 = vadd.f32 %v1034, %v1274
        %v1276 = vtanh.pop %v1275
        %v1277 = vsub.f32 1.0, %v1273
        %v1278 = vmul.f32 %v1277, %v1276
        %v1279 = vmul.f32 %v1273, %v1030
        %v1280 = vadd.f32 %v1278, %v1279
        %v1281 = vsel %vm1029, 1, 0
        %1282 = vset.pattern.permute.xlu0 0
        %1283 = vperm.xlu0 %1282, %v1281
        %v1284 = vpop.permute.xlu0 %1283
        %vm1285 = vcmp.eq.s32.totalorder %v1284, 1
        %v1286 = vsel %vm1285, %v1280, %v1030
        %1287 = vst.msk [vmem:[#allocation2] sm:$0x3] %vm751, %v1286
        %v1288 = vsel %vm1285, %v1280, 0.0
        %s1289 = scalar_lea.vmem %s452, 2 [#allocation12]
        %1290 = vst.msk [vmem:[%s1289] sm:$0x3] %vm751, %v1288
        %s1291 = sadd.s32 %s483, 2
        %v1292 = vstv %s1291
        %vm1293 = vcmp.lt.s32.totalorder %v1292, %v478
        %v1294 = vld [vmem:[#allocation3] sm:$0x3]
        %s1295 = scalar_lea.vmem %s407, 12 [#allocation7]
        %v1296 = vld [vmem:[%s1295] sm:$0x3]
        %v1297 = vld [vmem:[%s1295 + $0x2] sm:$0x3]
        %v1298 = vld [vmem:[%s1295 + $0x4] sm:$0x3]
        %v1299 = vld [vmem:[#allocation10] sm:$0xff]
        %v1300 = vld [vmem:[#allocation10 + $0x8] sm:$0xff]
        %v1301 = vld [vmem:[#allocation10 + $0x10] sm:$0xff]
        %v1302 = vld [vmem:[#allocation10 + $0x18] sm:$0xff]
        %v1304 = vsel %vm494, %v1294, 0
        %1306 = vmatprep.subr.mxu0 0.0
        %1307 = vmatpush1.msra.mxu0 0.0
        %1308 = vmatprep.subr.mxu0 0.0
        %1309 = vmatpush1.msra.mxu0 0.0
        %1310 = vmatprep.subr.mxu0 0.0
        %1311 = vmatpush1.msra.mxu0 0.0
        %1312 = vmatprep.subr.mxu0 0.0
        %1313 = vmatpush1.msra.mxu0 0.0
        %1314 = vmatprep.subr.mxu0 0.0
        %1315 = vmatpush1.msra.mxu0 0.0
        %1316 = vmatprep.subr.mxu0 0.0
        %1317 = vmatpush1.msra.mxu0 0.0
        %1318 = vmatprep.subr.mxu0 0.0
        %1319 = vmatpush1.msra.mxu0 0.0
        %1320 = vmatprep.subr.mxu0 0.0
        %1321 = vmatpush1.msra.mxu0 0.0
        %1322 = vmatprep.subr.mxu0 0.0
        %1323 = vmatpush1.msra.mxu0 0.0
        %1324 = vmatprep.subr.mxu0 0.0
        %1325 = vmatpush1.msra.mxu0 0.0
        %1326 = vmatprep.subr.mxu0 0.0
        %1327 = vmatpush1.msra.mxu0 0.0
        %1328 = vmatprep.subr.mxu0 0.0
        %1329 = vmatpush1.msra.mxu0 0.0
        %1330 = vmatprep.subr.mxu0 0.0
        %1331 = vmatpush1.msra.mxu0 %v1302
        %1332 = vmatprep.subr.mxu0 0.0
        %1333 = vmatpush1.msra.mxu0 %v1301
        %1334 = vmatprep.subr.mxu0 0.0
        %1335 = vmatpush1.msra.mxu0 %v1300
        %1336 = vmatprep.subr.mxu0 0.0
        %1337 = vmatpush1.msra.mxu0 %v1299
        %1338 = vmatprep.subr.mxu0 0.0
        %1339 = vmatpush2.msra.mxu0 0.0
        %1340 = vmatprep.subr.mxu0 0.0
        %1341 = vmatpush2.msra.mxu0 0.0
        %1342 = vmatprep.subr.mxu0 0.0
        %1343 = vmatpush2.msra.mxu0 0.0
        %1344 = vmatprep.subr.mxu0 0.0
        %1345 = vmatpush2.msra.mxu0 0.0
        %1346 = vmatprep.subr.mxu0 0.0
        %1347 = vmatpush2.msra.mxu0 0.0
        %1348 = vmatprep.subr.mxu0 0.0
        %1349 = vmatpush2.msra.mxu0 0.0
        %1350 = vmatprep.subr.mxu0 0.0
        %1351 = vmatpush2.msra.mxu0 0.0
        %1352 = vmatprep.subr.mxu0 0.0
        %1353 = vmatpush2.msra.mxu0 0.0
        %1354 = vmatprep.subr.mxu0 0.0
        %1355 = vmatpush2.msra.mxu0 0.0
        %1356 = vmatprep.subr.mxu0 0.0
        %1357 = vmatpush2.msra.mxu0 0.0
        %1358 = vmatprep.subr.mxu0 0.0
        %1359 = vmatpush2.msra.mxu0 0.0
        %1360 = vmatprep.subr.mxu0 0.0
        %1361 = vmatpush2.msra.mxu0 0.0
        %1362 = vmatprep.subr.mxu0 0.0
        %1363 = vmatpush2.msra.mxu0 0.0
        %1364 = vmatprep.subr.mxu0 0.0
        %1365 = vmatpush2.msra.mxu0 0.0
        %1366 = vmatprep.subr.mxu0 0.0
        %1367 = vmatpush2.msra.mxu0 0.0
        %1368 = vmatprep.subr.mxu0 0.0
        %1369 = vmatpush2.msra.mxu0 0.0
        %1370 = vmatprep.mubr.f32.mxu0 0.0
        %1371 = vmatmul.mubr.f32.gmra.mxu0 %v1304
        %v1372 = vpop.f32.mrf.mxu0
        %v1373 = vadd.f32 0.0, %v1372
        %v1374 = vpop.f32.mrf.mxu0
        %1375 = vdwg.mxu0
        %v1376 = vld [vmem:[%s840] sm:$0xff]
        %v1377 = vld [vmem:[%s840 + $0x8] sm:$0xff]
        %v1378 = vld [vmem:[%s840 + $0x10] sm:$0xff]
        %v1379 = vld [vmem:[%s840 + $0x18] sm:$0xff]
        %1380 = vmatprep.subr.mxu0 0.0
        %1381 = vmatpush1.msra.mxu0 0.0
        %1382 = vmatprep.subr.mxu0 0.0
        %1383 = vmatpush1.msra.mxu0 0.0
        %1384 = vmatprep.subr.mxu0 0.0
        %1385 = vmatpush1.msra.mxu0 0.0
        %1386 = vmatprep.subr.mxu0 0.0
        %1387 = vmatpush1.msra.mxu0 0.0
        %1388 = vmatprep.subr.mxu0 0.0
        %1389 = vmatpush1.msra.mxu0 0.0
        %1390 = vmatprep.subr.mxu0 0.0
        %1391 = vmatpush1.msra.mxu0 0.0
        %1392 = vmatprep.subr.mxu0 0.0
        %1393 = vmatpush1.msra.mxu0 0.0
        %1394 = vmatprep.subr.mxu0 0.0
        %1395 = vmatpush1.msra.mxu0 0.0
        %1396 = vmatprep.subr.mxu0 0.0
        %1397 = vmatpush1.msra.mxu0 0.0
        %1398 = vmatprep.subr.mxu0 0.0
        %1399 = vmatpush1.msra.mxu0 0.0
        %1400 = vmatprep.subr.mxu0 0.0
        %1401 = vmatpush1.msra.mxu0 0.0
        %1402 = vmatprep.subr.mxu0 0.0
        %1403 = vmatpush1.msra.mxu0 0.0
        %1404 = vmatprep.subr.mxu0 0.0
        %1405 = vmatpush1.msra.mxu0 %v1379
        %1406 = vmatprep.subr.mxu0 0.0
        %1407 = vmatpush1.msra.mxu0 %v1378
        %1408 = vmatprep.subr.mxu0 0.0
        %1409 = vmatpush1.msra.mxu0 %v1377
        %1410 = vmatprep.subr.mxu0 0.0
        %1411 = vmatpush1.msra.mxu0 %v1376
        %1412 = vmatprep.subr.mxu0 0.0
        %1413 = vmatpush2.msra.mxu0 0.0
        %1414 = vmatprep.subr.mxu0 0.0
        %1415 = vmatpush2.msra.mxu0 0.0
        %1416 = vmatprep.subr.mxu0 0.0
        %1417 = vmatpush2.msra.mxu0 0.0
        %1418 = vmatprep.subr.mxu0 0.0
        %1419 = vmatpush2.msra.mxu0 0.0
        %1420 = vmatprep.subr.mxu0 0.0
        %1421 = vmatpush2.msra.mxu0 0.0
        %1422 = vmatprep.subr.mxu0 0.0
        %1423 = vmatpush2.msra.mxu0 0.0
        %1424 = vmatprep.subr.mxu0 0.0
        %1425 = vmatpush2.msra.mxu0 0.0
        %1426 = vmatprep.subr.mxu0 0.0
        %1427 = vmatpush2.msra.mxu0 0.0
        %1428 = vmatprep.subr.mxu0 0.0
        %1429 = vmatpush2.msra.mxu0 0.0
        %1430 = vmatprep.subr.mxu0 0.0
        %1431 = vmatpush2.msra.mxu0 0.0
        %1432 = vmatprep.subr.mxu0 0.0
        %1433 = vmatpush2.msra.mxu0 0.0
        %1434 = vmatprep.subr.mxu0 0.0
        %1435 = vmatpush2.msra.mxu0 0.0
        %1436 = vmatprep.subr.mxu0 0.0
        %1437 = vmatpush2.msra.mxu0 0.0
        %1438 = vmatprep.subr.mxu0 0.0
        %1439 = vmatpush2.msra.mxu0 0.0
        %1440 = vmatprep.subr.mxu0 0.0
        %1441 = vmatpush2.msra.mxu0 0.0
        %1442 = vmatprep.subr.mxu0 0.0
        %1443 = vmatpush2.msra.mxu0 0.0
        %1444 = vmatprep.mubr.f32.mxu0 0.0
        %1445 = vmatmul.mubr.f32.gmra.mxu0 %v1304
        %v1446 = vpop.f32.mrf.mxu0
        %v1447 = vadd.f32 0.0, %v1446
        %v1448 = vpop.f32.mrf.mxu0
        %1449 = vdwg.mxu0
        %v1450 = vld [vmem:[%s915] sm:$0xff]
        %v1451 = vld [vmem:[%s915 + $0x8] sm:$0xff]
        %v1452 = vld [vmem:[%s915 + $0x10] sm:$0xff]
        %v1453 = vld [vmem:[%s915 + $0x18] sm:$0xff]
        %1454 = vmatprep.subr.mxu0 0.0
        %1455 = vmatpush1.msra.mxu0 0.0
        %1456 = vmatprep.subr.mxu0 0.0
        %1457 = vmatpush1.msra.mxu0 0.0
        %1458 = vmatprep.subr.mxu0 0.0
        %1459 = vmatpush1.msra.mxu0 0.0
        %1460 = vmatprep.subr.mxu0 0.0
        %1461 = vmatpush1.msra.mxu0 0.0
        %1462 = vmatprep.subr.mxu0 0.0
        %1463 = vmatpush1.msra.mxu0 0.0
        %1464 = vmatprep.subr.mxu0 0.0
        %1465 = vmatpush1.msra.mxu0 0.0
        %1466 = vmatprep.subr.mxu0 0.0
        %1467 = vmatpush1.msra.mxu0 0.0
        %1468 = vmatprep.subr.mxu0 0.0
        %1469 = vmatpush1.msra.mxu0 0.0
        %1470 = vmatprep.subr.mxu0 0.0
        %1471 = vmatpush1.msra.mxu0 0.0
        %1472 = vmatprep.subr.mxu0 0.0
        %1473 = vmatpush1.msra.mxu0 0.0
        %1474 = vmatprep.subr.mxu0 0.0
        %1475 = vmatpush1.msra.mxu0 0.0
        %1476 = vmatprep.subr.mxu0 0.0
        %1477 = vmatpush1.msra.mxu0 0.0
        %1478 = vmatprep.subr.mxu0 0.0
        %1479 = vmatpush1.msra.mxu0 %v1453
        %1480 = vmatprep.subr.mxu0 0.0
        %1481 = vmatpush1.msra.mxu0 %v1452
        %1482 = vmatprep.subr.mxu0 0.0
        %1483 = vmatpush1.msra.mxu0 %v1451
        %1484 = vmatprep.subr.mxu0 0.0
        %1485 = vmatpush1.msra.mxu0 %v1450
        %1486 = vmatprep.subr.mxu0 0.0
        %1487 = vmatpush2.msra.mxu0 0.0
        %1488 = vmatprep.subr.mxu0 0.0
        %1489 = vmatpush2.msra.mxu0 0.0
        %1490 = vmatprep.subr.mxu0 0.0
        %1491 = vmatpush2.msra.mxu0 0.0
        %1492 = vmatprep.subr.mxu0 0.0
        %1493 = vmatpush2.msra.mxu0 0.0
        %1494 = vmatprep.subr.mxu0 0.0
        %1495 = vmatpush2.msra.mxu0 0.0
        %1496 = vmatprep.subr.mxu0 0.0
        %1497 = vmatpush2.msra.mxu0 0.0
        %1498 = vmatprep.subr.mxu0 0.0
        %1499 = vmatpush2.msra.mxu0 0.0
        %1500 = vmatprep.subr.mxu0 0.0
        %1501 = vmatpush2.msra.mxu0 0.0
        %1502 = vmatprep.subr.mxu0 0.0
        %1503 = vmatpush2.msra.mxu0 0.0
        %1504 = vmatprep.subr.mxu0 0.0
        %1505 = vmatpush2.msra.mxu0 0.0
        %1506 = vmatprep.subr.mxu0 0.0
        %1507 = vmatpush2.msra.mxu0 0.0
        %1508 = vmatprep.subr.mxu0 0.0
        %1509 = vmatpush2.msra.mxu0 0.0
        %1510 = vmatprep.subr.mxu0 0.0
        %1511 = vmatpush2.msra.mxu0 0.0
        %1512 = vmatprep.subr.mxu0 0.0
        %1513 = vmatpush2.msra.mxu0 0.0
        %1514 = vmatprep.subr.mxu0 0.0
        %1515 = vmatpush2.msra.mxu0 0.0
        %1516 = vmatprep.subr.mxu0 0.0
        %1517 = vmatpush2.msra.mxu0 0.0
        %1518 = vmatprep.mubr.f32.mxu0 0.0
        %1519 = vmatmul.mubr.f32.gmra.mxu0 %v1304
        %v1520 = vpop.f32.mrf.mxu0
        %v1521 = vadd.f32 %v924, %v1520
        %v1522 = vpop.f32.mrf.mxu0
        %1523 = vdwg.mxu0
        %v1524 = vadd.f32 %v1296, %v1373
        %v1525 = vxor.u32 %v1524, 2147483648
        %v1526 = vmul.f32 %v1525, 1.442695
        %v1527 = vpow.pop %v1526
        %v1528 = vadd.f32 %v1527, 1.0
        %v1529 = vrcp.pop %v1528
        %v1530 = vmul.f32 1.0, %v1529
        %v1531 = vadd.f32 %v1297, %v1447
        %v1532 = vxor.u32 %v1531, 2147483648
        %v1533 = vmul.f32 %v1532, 1.442695
        %v1534 = vpow.pop %v1533
        %v1535 = vadd.f32 %v1534, 1.0
        %v1536 = vrcp.pop %v1535
        %v1537 = vmul.f32 1.0, %v1536
        %v1538 = vmul.f32 %v1530, %v1521
        %v1539 = vadd.f32 %v1298, %v1538
        %v1540 = vtanh.pop %v1539
        %v1541 = vsub.f32 1.0, %v1537
        %v1542 = vmul.f32 %v1541, %v1540
        %v1543 = vmul.f32 %v1537, %v1294
        %v1544 = vadd.f32 %v1542, %v1543
        %v1545 = vsel %vm1293, 1, 0
        %1546 = vset.pattern.permute.xlu0 0
        %1547 = vperm.xlu0 %1546, %v1545
        %v1548 = vpop.permute.xlu0 %1547
        %vm1549 = vcmp.eq.s32.totalorder %v1548, 1
        %v1550 = vsel %vm1549, %v1544, %v1294
        %1551 = vst.msk [vmem:[#allocation3] sm:$0x3] %vm751, %v1550
        %v1552 = vsel %vm1549, %v1544, 0.0
        %s1553 = scalar_lea.vmem %s459, 4 [#allocation13]
        %1554 = vst.msk [vmem:[%s1553] sm:$0x3] %vm751, %v1552
        %s1555 = sadd.s32 %s481, 2
        %v1556 = vstv %s1555
        %vm1557 = vcmp.lt.s32.totalorder %v1556, %v478
        %v1558 = vld [vmem:[#allocation2] sm:$0x3]
        %s1559 = scalar_lea.vmem %s398, 12 [#allocation4]
        %v1560 = vld [vmem:[%s1559] sm:$0x3]
        %v1561 = vld [vmem:[%s1559 + $0x2] sm:$0x3]
        %v1562 = vld [vmem:[%s1559 + $0x4] sm:$0x3]
        %v1563 = vld [vmem:[#allocation9] sm:$0xff]
        %v1564 = vld [vmem:[#allocation9 + $0x8] sm:$0xff]
        %v1565 = vld [vmem:[#allocation9 + $0x10] sm:$0xff]
        %v1566 = vld [vmem:[#allocation9 + $0x18] sm:$0xff]
        %v1568 = vsel %vm494, %v1558, 0
        %1570 = vmatprep.subr.mxu0 0.0
        %1571 = vmatpush1.msra.mxu0 0.0
        %1572 = vmatprep.subr.mxu0 0.0
        %1573 = vmatpush1.msra.mxu0 0.0
        %1574 = vmatprep.subr.mxu0 0.0
        %1575 = vmatpush1.msra.mxu0 0.0
        %1576 = vmatprep.subr.mxu0 0.0
        %1577 = vmatpush1.msra.mxu0 0.0
        %1578 = vmatprep.subr.mxu0 0.0
        %1579 = vmatpush1.msra.mxu0 0.0
        %1580 = vmatprep.subr.mxu0 0.0
        %1581 = vmatpush1.msra.mxu0 0.0
        %1582 = vmatprep.subr.mxu0 0.0
        %1583 = vmatpush1.msra.mxu0 0.0
        %1584 = vmatprep.subr.mxu0 0.0
        %1585 = vmatpush1.msra.mxu0 0.0
        %1586 = vmatprep.subr.mxu0 0.0
        %1587 = vmatpush1.msra.mxu0 0.0
        %1588 = vmatprep.subr.mxu0 0.0
        %1589 = vmatpush1.msra.mxu0 0.0
        %1590 = vmatprep.subr.mxu0 0.0
        %1591 = vmatpush1.msra.mxu0 0.0
        %1592 = vmatprep.subr.mxu0 0.0
        %1593 = vmatpush1.msra.mxu0 0.0
        %1594 = vmatprep.subr.mxu0 0.0
        %1595 = vmatpush1.msra.mxu0 %v1566
        %1596 = vmatprep.subr.mxu0 0.0
        %1597 = vmatpush1.msra.mxu0 %v1565
        %1598 = vmatprep.subr.mxu0 0.0
        %1599 = vmatpush1.msra.mxu0 %v1564
        %1600 = vmatprep.subr.mxu0 0.0
        %1601 = vmatpush1.msra.mxu0 %v1563
        %1602 = vmatprep.subr.mxu0 0.0
        %1603 = vmatpush2.msra.mxu0 0.0
        %1604 = vmatprep.subr.mxu0 0.0
        %1605 = vmatpush2.msra.mxu0 0.0
        %1606 = vmatprep.subr.mxu0 0.0
        %1607 = vmatpush2.msra.mxu0 0.0
        %1608 = vmatprep.subr.mxu0 0.0
        %1609 = vmatpush2.msra.mxu0 0.0
        %1610 = vmatprep.subr.mxu0 0.0
        %1611 = vmatpush2.msra.mxu0 0.0
        %1612 = vmatprep.subr.mxu0 0.0
        %1613 = vmatpush2.msra.mxu0 0.0
        %1614 = vmatprep.subr.mxu0 0.0
        %1615 = vmatpush2.msra.mxu0 0.0
        %1616 = vmatprep.subr.mxu0 0.0
        %1617 = vmatpush2.msra.mxu0 0.0
        %1618 = vmatprep.subr.mxu0 0.0
        %1619 = vmatpush2.msra.mxu0 0.0
        %1620 = vmatprep.subr.mxu0 0.0
        %1621 = vmatpush2.msra.mxu0 0.0
        %1622 = vmatprep.subr.mxu0 0.0
        %1623 = vmatpush2.msra.mxu0 0.0
        %1624 = vmatprep.subr.mxu0 0.0
        %1625 = vmatpush2.msra.mxu0 0.0
        %1626 = vmatprep.subr.mxu0 0.0
        %1627 = vmatpush2.msra.mxu0 0.0
        %1628 = vmatprep.subr.mxu0 0.0
        %1629 = vmatpush2.msra.mxu0 0.0
        %1630 = vmatprep.subr.mxu0 0.0
        %1631 = vmatpush2.msra.mxu0 0.0
        %1632 = vmatprep.subr.mxu0 0.0
        %1633 = vmatpush2.msra.mxu0 0.0
        %1634 = vmatprep.mubr.f32.mxu0 0.0
        %1635 = vmatmul.mubr.f32.gmra.mxu0 %v1568
        %v1636 = vpop.f32.mrf.mxu0
        %v1637 = vadd.f32 0.0, %v1636
        %v1638 = vpop.f32.mrf.mxu0
        %1639 = vdwg.mxu0
        %v1640 = vld [vmem:[%s568] sm:$0xff]
        %v1641 = vld [vmem:[%s568 + $0x8] sm:$0xff]
        %v1642 = vld [vmem:[%s568 + $0x10] sm:$0xff]
        %v1643 = vld [vmem:[%s568 + $0x18] sm:$0xff]
        %1644 = vmatprep.subr.mxu0 0.0
        %1645 = vmatpush1.msra.mxu0 0.0
        %1646 = vmatprep.subr.mxu0 0.0
        %1647 = vmatpush1.msra.mxu0 0.0
        %1648 = vmatprep.subr.mxu0 0.0
        %1649 = vmatpush1.msra.mxu0 0.0
        %1650 = vmatprep.subr.mxu0 0.0
        %1651 = vmatpush1.msra.mxu0 0.0
        %1652 = vmatprep.subr.mxu0 0.0
        %1653 = vmatpush1.msra.mxu0 0.0
        %1654 = vmatprep.subr.mxu0 0.0
        %1655 = vmatpush1.msra.mxu0 0.0
        %1656 = vmatprep.subr.mxu0 0.0
        %1657 = vmatpush1.msra.mxu0 0.0
        %1658 = vmatprep.subr.mxu0 0.0
        %1659 = vmatpush1.msra.mxu0 0.0
        %1660 = vmatprep.subr.mxu0 0.0
        %1661 = vmatpush1.msra.mxu0 0.0
        %1662 = vmatprep.subr.mxu0 0.0
        %1663 = vmatpush1.msra.mxu0 0.0
        %1664 = vmatprep.subr.mxu0 0.0
        %1665 = vmatpush1.msra.mxu0 0.0
        %1666 = vmatprep.subr.mxu0 0.0
        %1667 = vmatpush1.msra.mxu0 0.0
        %1668 = vmatprep.subr.mxu0 0.0
        %1669 = vmatpush1.msra.mxu0 %v1643
        %1670 = vmatprep.subr.mxu0 0.0
        %1671 = vmatpush1.msra.mxu0 %v1642
        %1672 = vmatprep.subr.mxu0 0.0
        %1673 = vmatpush1.msra.mxu0 %v1641
        %1674 = vmatprep.subr.mxu0 0.0
        %1675 = vmatpush1.msra.mxu0 %v1640
        %1676 = vmatprep.subr.mxu0 0.0
        %1677 = vmatpush2.msra.mxu0 0.0
        %1678 = vmatprep.subr.mxu0 0.0
        %1679 = vmatpush2.msra.mxu0 0.0
        %1680 = vmatprep.subr.mxu0 0.0
        %1681 = vmatpush2.msra.mxu0 0.0
        %1682 = vmatprep.subr.mxu0 0.0
        %1683 = vmatpush2.msra.mxu0 0.0
        %1684 = vmatprep.subr.mxu0 0.0
        %1685 = vmatpush2.msra.mxu0 0.0
        %1686 = vmatprep.subr.mxu0 0.0
        %1687 = vmatpush2.msra.mxu0 0.0
        %1688 = vmatprep.subr.mxu0 0.0
        %1689 = vmatpush2.msra.mxu0 0.0
        %1690 = vmatprep.subr.mxu0 0.0
        %1691 = vmatpush2.msra.mxu0 0.0
        %1692 = vmatprep.subr.mxu0 0.0
        %1693 = vmatpush2.msra.mxu0 0.0
        %1694 = vmatprep.subr.mxu0 0.0
        %1695 = vmatpush2.msra.mxu0 0.0
        %1696 = vmatprep.subr.mxu0 0.0
        %1697 = vmatpush2.msra.mxu0 0.0
        %1698 = vmatprep.subr.mxu0 0.0
        %1699 = vmatpush2.msra.mxu0 0.0
        %1700 = vmatprep.subr.mxu0 0.0
        %1701 = vmatpush2.msra.mxu0 0.0
        %1702 = vmatprep.subr.mxu0 0.0
        %1703 = vmatpush2.msra.mxu0 0.0
        %1704 = vmatprep.subr.mxu0 0.0
        %1705 = vmatpush2.msra.mxu0 0.0
        %1706 = vmatprep.subr.mxu0 0.0
        %1707 = vmatpush2.msra.mxu0 0.0
        %1708 = vmatprep.mubr.f32.mxu0 0.0
        %1709 = vmatmul.mubr.f32.gmra.mxu0 %v1568
        %v1710 = vpop.f32.mrf.mxu0
        %v1711 = vadd.f32 0.0, %v1710
        %v1712 = vpop.f32.mrf.mxu0
        %1713 = vdwg.mxu0
        %v1714 = vld [vmem:[%s643] sm:$0xff]
        %v1715 = vld [vmem:[%s643 + $0x8] sm:$0xff]
        %v1716 = vld [vmem:[%s643 + $0x10] sm:$0xff]
        %v1717 = vld [vmem:[%s643 + $0x18] sm:$0xff]
        %1718 = vmatprep.subr.mxu0 0.0
        %1719 = vmatpush1.msra.mxu0 0.0
        %1720 = vmatprep.subr.mxu0 0.0
        %1721 = vmatpush1.msra.mxu0 0.0
        %1722 = vmatprep.subr.mxu0 0.0
        %1723 = vmatpush1.msra.mxu0 0.0
        %1724 = vmatprep.subr.mxu0 0.0
        %1725 = vmatpush1.msra.mxu0 0.0
        %1726 = vmatprep.subr.mxu0 0.0
        %1727 = vmatpush1.msra.mxu0 0.0
        %1728 = vmatprep.subr.mxu0 0.0
        %1729 = vmatpush1.msra.mxu0 0.0
        %1730 = vmatprep.subr.mxu0 0.0
        %1731 = vmatpush1.msra.mxu0 0.0
        %1732 = vmatprep.subr.mxu0 0.0
        %1733 = vmatpush1.msra.mxu0 0.0
        %1734 = vmatprep.subr.mxu0 0.0
        %1735 = vmatpush1.msra.mxu0 0.0
        %1736 = vmatprep.subr.mxu0 0.0
        %1737 = vmatpush1.msra.mxu0 0.0
        %1738 = vmatprep.subr.mxu0 0.0
        %1739 = vmatpush1.msra.mxu0 0.0
        %1740 = vmatprep.subr.mxu0 0.0
        %1741 = vmatpush1.msra.mxu0 0.0
        %1742 = vmatprep.subr.mxu0 0.0
        %1743 = vmatpush1.msra.mxu0 %v1717
        %1744 = vmatprep.subr.mxu0 0.0
        %1745 = vmatpush1.msra.mxu0 %v1716
        %1746 = vmatprep.subr.mxu0 0.0
        %1747 = vmatpush1.msra.mxu0 %v1715
        %1748 = vmatprep.subr.mxu0 0.0
        %1749 = vmatpush1.msra.mxu0 %v1714
        %1750 = vmatprep.subr.mxu0 0.0
        %1751 = vmatpush2.msra.mxu0 0.0
        %1752 = vmatprep.subr.mxu0 0.0
        %1753 = vmatpush2.msra.mxu0 0.0
        %1754 = vmatprep.subr.mxu0 0.0
        %1755 = vmatpush2.msra.mxu0 0.0
        %1756 = vmatprep.subr.mxu0 0.0
        %1757 = vmatpush2.msra.mxu0 0.0
        %1758 = vmatprep.subr.mxu0 0.0
        %1759 = vmatpush2.msra.mxu0 0.0
        %1760 = vmatprep.subr.mxu0 0.0
        %1761 = vmatpush2.msra.mxu0 0.0
        %1762 = vmatprep.subr.mxu0 0.0
        %1763 = vmatpush2.msra.mxu0 0.0
        %1764 = vmatprep.subr.mxu0 0.0
        %1765 = vmatpush2.msra.mxu0 0.0
        %1766 = vmatprep.subr.mxu0 0.0
        %1767 = vmatpush2.msra.mxu0 0.0
        %1768 = vmatprep.subr.mxu0 0.0
        %1769 = vmatpush2.msra.mxu0 0.0
        %1770 = vmatprep.subr.mxu0 0.0
        %1771 = vmatpush2.msra.mxu0 0.0
        %1772 = vmatprep.subr.mxu0 0.0
        %1773 = vmatpush2.msra.mxu0 0.0
        %1774 = vmatprep.subr.mxu0 0.0
        %1775 = vmatpush2.msra.mxu0 0.0
        %1776 = vmatprep.subr.mxu0 0.0
        %1777 = vmatpush2.msra.mxu0 0.0
        %1778 = vmatprep.subr.mxu0 0.0
        %1779 = vmatpush2.msra.mxu0 0.0
        %1780 = vmatprep.subr.mxu0 0.0
        %1781 = vmatpush2.msra.mxu0 0.0
        %1782 = vmatprep.mubr.f32.mxu0 0.0
        %1783 = vmatmul.mubr.f32.gmra.mxu0 %v1568
        %v1784 = vpop.f32.mrf.mxu0
        %v1785 = vadd.f32 %v652, %v1784
        %v1786 = vpop.f32.mrf.mxu0
        %1787 = vdwg.mxu0
        %v1788 = vadd.f32 %v1560, %v1637
        %v1789 = vxor.u32 %v1788, 2147483648
        %v1790 = vmul.f32 %v1789, 1.442695
        %v1791 = vpow.pop %v1790
        %v1792 = vadd.f32 %v1791, 1.0
        %v1793 = vrcp.pop %v1792
        %v1794 = vmul.f32 1.0, %v1793
        %v1795 = vadd.f32 %v1561, %v1711
        %v1796 = vxor.u32 %v1795, 2147483648
        %v1797 = vmul.f32 %v1796, 1.442695
        %v1798 = vpow.pop %v1797
        %v1799 = vadd.f32 %v1798, 1.0
        %v1800 = vrcp.pop %v1799
        %v1801 = vmul.f32 1.0, %v1800
        %v1802 = vmul.f32 %v1794, %v1785
        %v1803 = vadd.f32 %v1562, %v1802
        %v1804 = vtanh.pop %v1803
        %v1805 = vsub.f32 1.0, %v1801
        %v1806 = vmul.f32 %v1805, %v1804
        %v1807 = vmul.f32 %v1801, %v1558
        %v1808 = vadd.f32 %v1806, %v1807
        %v1809 = vsel %vm1557, 1, 0
        %1810 = vset.pattern.permute.xlu0 0
        %1811 = vperm.xlu0 %1810, %v1809
        %v1812 = vpop.permute.xlu0 %1811
        %vm1813 = vcmp.eq.s32.totalorder %v1812, 1
        %v1814 = vsel %vm1813, %v1808, %v1558
        %1815 = vst.msk [vmem:[#allocation2] sm:$0x3] %vm751, %v1814
        %v1816 = vsel %vm1813, %v1808, 0.0
        %s1817 = scalar_lea.vmem %s452, 4 [#allocation12]
        %1818 = vst.msk [vmem:[%s1817] sm:$0x3] %vm751, %v1816
        %s1819 = sadd.s32 %s483, 1
        %v1820 = vstv %s1819
        %vm1821 = vcmp.lt.s32.totalorder %v1820, %v478
        %v1822 = vld [vmem:[#allocation3] sm:$0x3]
        %s1823 = scalar_lea.vmem %s407, 6 [#allocation7]
        %v1824 = vld [vmem:[%s1823] sm:$0x3]
        %v1825 = vld [vmem:[%s1823 + $0x2] sm:$0x3]
        %v1826 = vld [vmem:[%s1823 + $0x4] sm:$0x3]
        %v1827 = vld [vmem:[#allocation10] sm:$0xff]
        %v1828 = vld [vmem:[#allocation10 + $0x8] sm:$0xff]
        %v1829 = vld [vmem:[#allocation10 + $0x10] sm:$0xff]
        %v1830 = vld [vmem:[#allocation10 + $0x18] sm:$0xff]
        %v1832 = vsel %vm494, %v1822, 0
        %1834 = vmatprep.subr.mxu0 0.0
        %1835 = vmatpush1.msra.mxu0 0.0
        %1836 = vmatprep.subr.mxu0 0.0
        %1837 = vmatpush1.msra.mxu0 0.0
        %1838 = vmatprep.subr.mxu0 0.0
        %1839 = vmatpush1.msra.mxu0 0.0
        %1840 = vmatprep.subr.mxu0 0.0
        %1841 = vmatpush1.msra.mxu0 0.0
        %1842 = vmatprep.subr.mxu0 0.0
        %1843 = vmatpush1.msra.mxu0 0.0
        %1844 = vmatprep.subr.mxu0 0.0
        %1845 = vmatpush1.msra.mxu0 0.0
        %1846 = vmatprep.subr.mxu0 0.0
        %1847 = vmatpush1.msra.mxu0 0.0
        %1848 = vmatprep.subr.mxu0 0.0
        %1849 = vmatpush1.msra.mxu0 0.0
        %1850 = vmatprep.subr.mxu0 0.0
        %1851 = vmatpush1.msra.mxu0 0.0
        %1852 = vmatprep.subr.mxu0 0.0
        %1853 = vmatpush1.msra.mxu0 0.0
        %1854 = vmatprep.subr.mxu0 0.0
        %1855 = vmatpush1.msra.mxu0 0.0
        %1856 = vmatprep.subr.mxu0 0.0
        %1857 = vmatpush1.msra.mxu0 0.0
        %1858 = vmatprep.subr.mxu0 0.0
        %1859 = vmatpush1.msra.mxu0 %v1830
        %1860 = vmatprep.subr.mxu0 0.0
        %1861 = vmatpush1.msra.mxu0 %v1829
        %1862 = vmatprep.subr.mxu0 0.0
        %1863 = vmatpush1.msra.mxu0 %v1828
        %1864 = vmatprep.subr.mxu0 0.0
        %1865 = vmatpush1.msra.mxu0 %v1827
        %1866 = vmatprep.subr.mxu0 0.0
        %1867 = vmatpush2.msra.mxu0 0.0
        %1868 = vmatprep.subr.mxu0 0.0
        %1869 = vmatpush2.msra.mxu0 0.0
        %1870 = vmatprep.subr.mxu0 0.0
        %1871 = vmatpush2.msra.mxu0 0.0
        %1872 = vmatprep.subr.mxu0 0.0
        %1873 = vmatpush2.msra.mxu0 0.0
        %1874 = vmatprep.subr.mxu0 0.0
        %1875 = vmatpush2.msra.mxu0 0.0
        %1876 = vmatprep.subr.mxu0 0.0
        %1877 = vmatpush2.msra.mxu0 0.0
        %1878 = vmatprep.subr.mxu0 0.0
        %1879 = vmatpush2.msra.mxu0 0.0
        %1880 = vmatprep.subr.mxu0 0.0
        %1881 = vmatpush2.msra.mxu0 0.0
        %1882 = vmatprep.subr.mxu0 0.0
        %1883 = vmatpush2.msra.mxu0 0.0
        %1884 = vmatprep.subr.mxu0 0.0
        %1885 = vmatpush2.msra.mxu0 0.0
        %1886 = vmatprep.subr.mxu0 0.0
        %1887 = vmatpush2.msra.mxu0 0.0
        %1888 = vmatprep.subr.mxu0 0.0
        %1889 = vmatpush2.msra.mxu0 0.0
        %1890 = vmatprep.subr.mxu0 0.0
        %1891 = vmatpush2.msra.mxu0 0.0
        %1892 = vmatprep.subr.mxu0 0.0
        %1893 = vmatpush2.msra.mxu0 0.0
        %1894 = vmatprep.subr.mxu0 0.0
        %1895 = vmatpush2.msra.mxu0 0.0
        %1896 = vmatprep.subr.mxu0 0.0
        %1897 = vmatpush2.msra.mxu0 0.0
        %1898 = vmatprep.mubr.f32.mxu0 0.0
        %1899 = vmatmul.mubr.f32.gmra.mxu0 %v1832
        %v1900 = vpop.f32.mrf.mxu0
        %v1901 = vadd.f32 0.0, %v1900
        %v1902 = vpop.f32.mrf.mxu0
        %1903 = vdwg.mxu0
        %v1904 = vld [vmem:[%s840] sm:$0xff]
        %v1905 = vld [vmem:[%s840 + $0x8] sm:$0xff]
        %v1906 = vld [vmem:[%s840 + $0x10] sm:$0xff]
        %v1907 = vld [vmem:[%s840 + $0x18] sm:$0xff]
        %1908 = vmatprep.subr.mxu0 0.0
        %1909 = vmatpush1.msra.mxu0 0.0
        %1910 = vmatprep.subr.mxu0 0.0
        %1911 = vmatpush1.msra.mxu0 0.0
        %1912 = vmatprep.subr.mxu0 0.0
        %1913 = vmatpush1.msra.mxu0 0.0
        %1914 = vmatprep.subr.mxu0 0.0
        %1915 = vmatpush1.msra.mxu0 0.0
        %1916 = vmatprep.subr.mxu0 0.0
        %1917 = vmatpush1.msra.mxu0 0.0
        %1918 = vmatprep.subr.mxu0 0.0
        %1919 = vmatpush1.msra.mxu0 0.0
        %1920 = vmatprep.subr.mxu0 0.0
        %1921 = vmatpush1.msra.mxu0 0.0
        %1922 = vmatprep.subr.mxu0 0.0
        %1923 = vmatpush1.msra.mxu0 0.0
        %1924 = vmatprep.subr.mxu0 0.0
        %1925 = vmatpush1.msra.mxu0 0.0
        %1926 = vmatprep.subr.mxu0 0.0
        %1927 = vmatpush1.msra.mxu0 0.0
        %1928 = vmatprep.subr.mxu0 0.0
        %1929 = vmatpush1.msra.mxu0 0.0
        %1930 = vmatprep.subr.mxu0 0.0
        %1931 = vmatpush1.msra.mxu0 0.0
        %1932 = vmatprep.subr.mxu0 0.0
        %1933 = vmatpush1.msra.mxu0 %v1907
        %1934 = vmatprep.subr.mxu0 0.0
        %1935 = vmatpush1.msra.mxu0 %v1906
        %1936 = vmatprep.subr.mxu0 0.0
        %1937 = vmatpush1.msra.mxu0 %v1905
        %1938 = vmatprep.subr.mxu0 0.0
        %1939 = vmatpush1.msra.mxu0 %v1904
        %1940 = vmatprep.subr.mxu0 0.0
        %1941 = vmatpush2.msra.mxu0 0.0
        %1942 = vmatprep.subr.mxu0 0.0
        %1943 = vmatpush2.msra.mxu0 0.0
        %1944 = vmatprep.subr.mxu0 0.0
        %1945 = vmatpush2.msra.mxu0 0.0
        %1946 = vmatprep.subr.mxu0 0.0
        %1947 = vmatpush2.msra.mxu0 0.0
        %1948 = vmatprep.subr.mxu0 0.0
        %1949 = vmatpush2.msra.mxu0 0.0
        %1950 = vmatprep.subr.mxu0 0.0
        %1951 = vmatpush2.msra.mxu0 0.0
        %1952 = vmatprep.subr.mxu0 0.0
        %1953 = vmatpush2.msra.mxu0 0.0
        %1954 = vmatprep.subr.mxu0 0.0
        %1955 = vmatpush2.msra.mxu0 0.0
        %1956 = vmatprep.subr.mxu0 0.0
        %1957 = vmatpush2.msra.mxu0 0.0
        %1958 = vmatprep.subr.mxu0 0.0
        %1959 = vmatpush2.msra.mxu0 0.0
        %1960 = vmatprep.subr.mxu0 0.0
        %1961 = vmatpush2.msra.mxu0 0.0
        %1962 = vmatprep.subr.mxu0 0.0
        %1963 = vmatpush2.msra.mxu0 0.0
        %1964 = vmatprep.subr.mxu0 0.0
        %1965 = vmatpush2.msra.mxu0 0.0
        %1966 = vmatprep.subr.mxu0 0.0
        %1967 = vmatpush2.msra.mxu0 0.0
        %1968 = vmatprep.subr.mxu0 0.0
        %1969 = vmatpush2.msra.mxu0 0.0
        %1970 = vmatprep.subr.mxu0 0.0
        %1971 = vmatpush2.msra.mxu0 0.0
        %1972 = vmatprep.mubr.f32.mxu0 0.0
        %1973 = vmatmul.mubr.f32.gmra.mxu0 %v1832
        %v1974 = vpop.f32.mrf.mxu0
        %v1975 = vadd.f32 0.0, %v1974
        %v1976 = vpop.f32.mrf.mxu0
        %1977 = vdwg.mxu0
        %v1978 = vld [vmem:[%s915] sm:$0xff]
        %v1979 = vld [vmem:[%s915 + $0x8] sm:$0xff]
        %v1980 = vld [vmem:[%s915 + $0x10] sm:$0xff]
        %v1981 = vld [vmem:[%s915 + $0x18] sm:$0xff]
        %1982 = vmatprep.subr.mxu0 0.0
        %1983 = vmatpush1.msra.mxu0 0.0
        %1984 = vmatprep.subr.mxu0 0.0
        %1985 = vmatpush1.msra.mxu0 0.0
        %1986 = vmatprep.subr.mxu0 0.0
        %1987 = vmatpush1.msra.mxu0 0.0
        %1988 = vmatprep.subr.mxu0 0.0
        %1989 = vmatpush1.msra.mxu0 0.0
        %1990 = vmatprep.subr.mxu0 0.0
        %1991 = vmatpush1.msra.mxu0 0.0
        %1992 = vmatprep.subr.mxu0 0.0
        %1993 = vmatpush1.msra.mxu0 0.0
        %1994 = vmatprep.subr.mxu0 0.0
        %1995 = vmatpush1.msra.mxu0 0.0
        %1996 = vmatprep.subr.mxu0 0.0
        %1997 = vmatpush1.msra.mxu0 0.0
        %1998 = vmatprep.subr.mxu0 0.0
        %1999 = vmatpush1.msra.mxu0 0.0
        %2000 = vmatprep.subr.mxu0 0.0
        %2001 = vmatpush1.msra.mxu0 0.0
        %2002 = vmatprep.subr.mxu0 0.0
        %2003 = vmatpush1.msra.mxu0 0.0
        %2004 = vmatprep.subr.mxu0 0.0
        %2005 = vmatpush1.msra.mxu0 0.0
        %2006 = vmatprep.subr.mxu0 0.0
        %2007 = vmatpush1.msra.mxu0 %v1981
        %2008 = vmatprep.subr.mxu0 0.0
        %2009 = vmatpush1.msra.mxu0 %v1980
        %2010 = vmatprep.subr.mxu0 0.0
        %2011 = vmatpush1.msra.mxu0 %v1979
        %2012 = vmatprep.subr.mxu0 0.0
        %2013 = vmatpush1.msra.mxu0 %v1978
        %2014 = vmatprep.subr.mxu0 0.0
        %2015 = vmatpush2.msra.mxu0 0.0
        %2016 = vmatprep.subr.mxu0 0.0
        %2017 = vmatpush2.msra.mxu0 0.0
        %2018 = vmatprep.subr.mxu0 0.0
        %2019 = vmatpush2.msra.mxu0 0.0
        %2020 = vmatprep.subr.mxu0 0.0
        %2021 = vmatpush2.msra.mxu0 0.0
        %2022 = vmatprep.subr.mxu0 0.0
        %2023 = vmatpush2.msra.mxu0 0.0
        %2024 = vmatprep.subr.mxu0 0.0
        %2025 = vmatpush2.msra.mxu0 0.0
        %2026 = vmatprep.subr.mxu0 0.0
        %2027 = vmatpush2.msra.mxu0 0.0
        %2028 = vmatprep.subr.mxu0 0.0
        %2029 = vmatpush2.msra.mxu0 0.0
        %2030 = vmatprep.subr.mxu0 0.0
        %2031 = vmatpush2.msra.mxu0 0.0
        %2032 = vmatprep.subr.mxu0 0.0
        %2033 = vmatpush2.msra.mxu0 0.0
        %2034 = vmatprep.subr.mxu0 0.0
        %2035 = vmatpush2.msra.mxu0 0.0
        %2036 = vmatprep.subr.mxu0 0.0
        %2037 = vmatpush2.msra.mxu0 0.0
        %2038 = vmatprep.subr.mxu0 0.0
        %2039 = vmatpush2.msra.mxu0 0.0
        %2040 = vmatprep.subr.mxu0 0.0
        %2041 = vmatpush2.msra.mxu0 0.0
        %2042 = vmatprep.subr.mxu0 0.0
        %2043 = vmatpush2.msra.mxu0 0.0
        %2044 = vmatprep.subr.mxu0 0.0
        %2045 = vmatpush2.msra.mxu0 0.0
        %2046 = vmatprep.mubr.f32.mxu0 0.0
        %2047 = vmatmul.mubr.f32.gmra.mxu0 %v1832
        %v2048 = vpop.f32.mrf.mxu0
        %v2049 = vadd.f32 %v924, %v2048
        %v2050 = vpop.f32.mrf.mxu0
        %2051 = vdwg.mxu0
        %v2052 = vadd.f32 %v1824, %v1901
        %v2053 = vxor.u32 %v2052, 2147483648
        %v2054 = vmul.f32 %v2053, 1.442695
        %v2055 = vpow.pop %v2054
        %v2056 = vadd.f32 %v2055, 1.0
        %v2057 = vrcp.pop %v2056
        %v2058 = vmul.f32 1.0, %v2057
        %v2059 = vadd.f32 %v1825, %v1975
        %v2060 = vxor.u32 %v2059, 2147483648
        %v2061 = vmul.f32 %v2060, 1.442695
        %v2062 = vpow.pop %v2061
        %v2063 = vadd.f32 %v2062, 1.0
        %v2064 = vrcp.pop %v2063
        %v2065 = vmul.f32 1.0, %v2064
        %v2066 = vmul.f32 %v2058, %v2049
        %v2067 = vadd.f32 %v1826, %v2066
        %v2068 = vtanh.pop %v2067
        %v2069 = vsub.f32 1.0, %v2065
        %v2070 = vmul.f32 %v2069, %v2068
        %v2071 = vmul.f32 %v2065, %v1822
        %v2072 = vadd.f32 %v2070, %v2071
        %v2073 = vsel %vm1821, 1, 0
        %2074 = vset.pattern.permute.xlu0 0
        %2075 = vperm.xlu0 %2074, %v2073
        %v2076 = vpop.permute.xlu0 %2075
        %vm2077 = vcmp.eq.s32.totalorder %v2076, 1
        %v2078 = vsel %vm2077, %v2072, %v1822
        %2079 = vst.msk [vmem:[#allocation3] sm:$0x3] %vm751, %v2078
        %v2080 = vsel %vm2077, %v2072, 0.0
        %s2081 = scalar_lea.vmem %s459, 2 [#allocation13]
        %2082 = vst.msk [vmem:[%s2081] sm:$0x3] %vm751, %v2080
        %s2083 = sadd.s32 %s481, 3
        %v2084 = vstv %s2083
        %vm2085 = vcmp.lt.s32.totalorder %v2084, %v478
        %v2086 = vld [vmem:[#allocation2] sm:$0x3]
        %s2087 = scalar_lea.vmem %s398, 18 [#allocation4]
        %v2088 = vld [vmem:[%s2087] sm:$0x3]
        %v2089 = vld [vmem:[%s2087 + $0x2] sm:$0x3]
        %v2090 = vld [vmem:[%s2087 + $0x4] sm:$0x3]
        %v2091 = vld [vmem:[#allocation9] sm:$0xff]
        %v2092 = vld [vmem:[#allocation9 + $0x8] sm:$0xff]
        %v2093 = vld [vmem:[#allocation9 + $0x10] sm:$0xff]
        %v2094 = vld [vmem:[#allocation9 + $0x18] sm:$0xff]
        %v2096 = vsel %vm494, %v2086, 0
        %2098 = vmatprep.subr.mxu0 0.0
        %2099 = vmatpush1.msra.mxu0 0.0
        %2100 = vmatprep.subr.mxu0 0.0
        %2101 = vmatpush1.msra.mxu0 0.0
        %2102 = vmatprep.subr.mxu0 0.0
        %2103 = vmatpush1.msra.mxu0 0.0
        %2104 = vmatprep.subr.mxu0 0.0
        %2105 = vmatpush1.msra.mxu0 0.0
        %2106 = vmatprep.subr.mxu0 0.0
        %2107 = vmatpush1.msra.mxu0 0.0
        %2108 = vmatprep.subr.mxu0 0.0
        %2109 = vmatpush1.msra.mxu0 0.0
        %2110 = vmatprep.subr.mxu0 0.0
        %2111 = vmatpush1.msra.mxu0 0.0
        %2112 = vmatprep.subr.mxu0 0.0
        %2113 = vmatpush1.msra.mxu0 0.0
        %2114 = vmatprep.subr.mxu0 0.0
        %2115 = vmatpush1.msra.mxu0 0.0
        %2116 = vmatprep.subr.mxu0 0.0
        %2117 = vmatpush1.msra.mxu0 0.0
        %2118 = vmatprep.subr.mxu0 0.0
        %2119 = vmatpush1.msra.mxu0 0.0
        %2120 = vmatprep.subr.mxu0 0.0
        %2121 = vmatpush1.msra.mxu0 0.0
        %2122 = vmatprep.subr.mxu0 0.0
        %2123 = vmatpush1.msra.mxu0 %v2094
        %2124 = vmatprep.subr.mxu0 0.0
        %2125 = vmatpush1.msra.mxu0 %v2093
        %2126 = vmatprep.subr.mxu0 0.0
        %2127 = vmatpush1.msra.mxu0 %v2092
        %2128 = vmatprep.subr.mxu0 0.0
        %2129 = vmatpush1.msra.mxu0 %v2091
        %2130 = vmatprep.subr.mxu0 0.0
        %2131 = vmatpush2.msra.mxu0 0.0
        %2132 = vmatprep.subr.mxu0 0.0
        %2133 = vmatpush2.msra.mxu0 0.0
        %2134 = vmatprep.subr.mxu0 0.0
        %2135 = vmatpush2.msra.mxu0 0.0
        %2136 = vmatprep.subr.mxu0 0.0
        %2137 = vmatpush2.msra.mxu0 0.0
        %2138 = vmatprep.subr.mxu0 0.0
        %2139 = vmatpush2.msra.mxu0 0.0
        %2140 = vmatprep.subr.mxu0 0.0
        %2141 = vmatpush2.msra.mxu0 0.0
        %2142 = vmatprep.subr.mxu0 0.0
        %2143 = vmatpush2.msra.mxu0 0.0
        %2144 = vmatprep.subr.mxu0 0.0
        %2145 = vmatpush2.msra.mxu0 0.0
        %2146 = vmatprep.subr.mxu0 0.0
        %2147 = vmatpush2.msra.mxu0 0.0
        %2148 = vmatprep.subr.mxu0 0.0
        %2149 = vmatpush2.msra.mxu0 0.0
        %2150 = vmatprep.subr.mxu0 0.0
        %2151 = vmatpush2.msra.mxu0 0.0
        %2152 = vmatprep.subr.mxu0 0.0
        %2153 = vmatpush2.msra.mxu0 0.0
        %2154 = vmatprep.subr.mxu0 0.0
        %2155 = vmatpush2.msra.mxu0 0.0
        %2156 = vmatprep.subr.mxu0 0.0
        %2157 = vmatpush2.msra.mxu0 0.0
        %2158 = vmatprep.subr.mxu0 0.0
        %2159 = vmatpush2.msra.mxu0 0.0
        %2160 = vmatprep.subr.mxu0 0.0
        %2161 = vmatpush2.msra.mxu0 0.0
        %2162 = vmatprep.mubr.f32.mxu0 0.0
        %2163 = vmatmul.mubr.f32.gmra.mxu0 %v2096
        %v2164 = vpop.f32.mrf.mxu0
        %v2165 = vadd.f32 0.0, %v2164
        %v2166 = vpop.f32.mrf.mxu0
        %2167 = vdwg.mxu0
        %v2168 = vld [vmem:[%s568] sm:$0xff]
        %v2169 = vld [vmem:[%s568 + $0x8] sm:$0xff]
        %v2170 = vld [vmem:[%s568 + $0x10] sm:$0xff]
        %v2171 = vld [vmem:[%s568 + $0x18] sm:$0xff]
        %2172 = vmatprep.subr.mxu0 0.0
        %2173 = vmatpush1.msra.mxu0 0.0
        %2174 = vmatprep.subr.mxu0 0.0
        %2175 = vmatpush1.msra.mxu0 0.0
        %2176 = vmatprep.subr.mxu0 0.0
        %2177 = vmatpush1.msra.mxu0 0.0
        %2178 = vmatprep.subr.mxu0 0.0
        %2179 = vmatpush1.msra.mxu0 0.0
        %2180 = vmatprep.subr.mxu0 0.0
        %2181 = vmatpush1.msra.mxu0 0.0
        %2182 = vmatprep.subr.mxu0 0.0
        %2183 = vmatpush1.msra.mxu0 0.0
        %2184 = vmatprep.subr.mxu0 0.0
        %2185 = vmatpush1.msra.mxu0 0.0
        %2186 = vmatprep.subr.mxu0 0.0
        %2187 = vmatpush1.msra.mxu0 0.0
        %2188 = vmatprep.subr.mxu0 0.0
        %2189 = vmatpush1.msra.mxu0 0.0
        %2190 = vmatprep.subr.mxu0 0.0
        %2191 = vmatpush1.msra.mxu0 0.0
        %2192 = vmatprep.subr.mxu0 0.0
        %2193 = vmatpush1.msra.mxu0 0.0
        %2194 = vmatprep.subr.mxu0 0.0
        %2195 = vmatpush1.msra.mxu0 0.0
        %2196 = vmatprep.subr.mxu0 0.0
        %2197 = vmatpush1.msra.mxu0 %v2171
        %2198 = vmatprep.subr.mxu0 0.0
        %2199 = vmatpush1.msra.mxu0 %v2170
        %2200 = vmatprep.subr.mxu0 0.0
        %2201 = vmatpush1.msra.mxu0 %v2169
        %2202 = vmatprep.subr.mxu0 0.0
        %2203 = vmatpush1.msra.mxu0 %v2168
        %2204 = vmatprep.subr.mxu0 0.0
        %2205 = vmatpush2.msra.mxu0 0.0
        %2206 = vmatprep.subr.mxu0 0.0
        %2207 = vmatpush2.msra.mxu0 0.0
        %2208 = vmatprep.subr.mxu0 0.0
        %2209 = vmatpush2.msra.mxu0 0.0
        %2210 = vmatprep.subr.mxu0 0.0
        %2211 = vmatpush2.msra.mxu0 0.0
        %2212 = vmatprep.subr.mxu0 0.0
        %2213 = vmatpush2.msra.mxu0 0.0
        %2214 = vmatprep.subr.mxu0 0.0
        %2215 = vmatpush2.msra.mxu0 0.0
        %2216 = vmatprep.subr.mxu0 0.0
        %2217 = vmatpush2.msra.mxu0 0.0
        %2218 = vmatprep.subr.mxu0 0.0
        %2219 = vmatpush2.msra.mxu0 0.0
        %2220 = vmatprep.subr.mxu0 0.0
        %2221 = vmatpush2.msra.mxu0 0.0
        %2222 = vmatprep.subr.mxu0 0.0
        %2223 = vmatpush2.msra.mxu0 0.0
        %2224 = vmatprep.subr.mxu0 0.0
        %2225 = vmatpush2.msra.mxu0 0.0
        %2226 = vmatprep.subr.mxu0 0.0
        %2227 = vmatpush2.msra.mxu0 0.0
        %2228 = vmatprep.subr.mxu0 0.0
        %2229 = vmatpush2.msra.mxu0 0.0
        %2230 = vmatprep.subr.mxu0 0.0
        %2231 = vmatpush2.msra.mxu0 0.0
        %2232 = vmatprep.subr.mxu0 0.0
        %2233 = vmatpush2.msra.mxu0 0.0
        %2234 = vmatprep.subr.mxu0 0.0
        %2235 = vmatpush2.msra.mxu0 0.0
        %2236 = vmatprep.mubr.f32.mxu0 0.0
        %2237 = vmatmul.mubr.f32.gmra.mxu0 %v2096
        %v2238 = vpop.f32.mrf.mxu0
        %v2239 = vadd.f32 0.0, %v2238
        %v2240 = vpop.f32.mrf.mxu0
        %2241 = vdwg.mxu0
        %v2242 = vld [vmem:[%s643] sm:$0xff]
        %v2243 = vld [vmem:[%s643 + $0x8] sm:$0xff]
        %v2244 = vld [vmem:[%s643 + $0x10] sm:$0xff]
        %v2245 = vld [vmem:[%s643 + $0x18] sm:$0xff]
        %2246 = vmatprep.subr.mxu0 0.0
        %2247 = vmatpush1.msra.mxu0 0.0
        %2248 = vmatprep.subr.mxu0 0.0
        %2249 = vmatpush1.msra.mxu0 0.0
        %2250 = vmatprep.subr.mxu0 0.0
        %2251 = vmatpush1.msra.mxu0 0.0
        %2252 = vmatprep.subr.mxu0 0.0
        %2253 = vmatpush1.msra.mxu0 0.0
        %2254 = vmatprep.subr.mxu0 0.0
        %2255 = vmatpush1.msra.mxu0 0.0
        %2256 = vmatprep.subr.mxu0 0.0
        %2257 = vmatpush1.msra.mxu0 0.0
        %2258 = vmatprep.subr.mxu0 0.0
        %2259 = vmatpush1.msra.mxu0 0.0
        %2260 = vmatprep.subr.mxu0 0.0
        %2261 = vmatpush1.msra.mxu0 0.0
        %2262 = vmatprep.subr.mxu0 0.0
        %2263 = vmatpush1.msra.mxu0 0.0
        %2264 = vmatprep.subr.mxu0 0.0
        %2265 = vmatpush1.msra.mxu0 0.0
        %2266 = vmatprep.subr.mxu0 0.0
        %2267 = vmatpush1.msra.mxu0 0.0
        %2268 = vmatprep.subr.mxu0 0.0
        %2269 = vmatpush1.msra.mxu0 0.0
        %2270 = vmatprep.subr.mxu0 0.0
        %2271 = vmatpush1.msra.mxu0 %v2245
        %2272 = vmatprep.subr.mxu0 0.0
        %2273 = vmatpush1.msra.mxu0 %v2244
        %2274 = vmatprep.subr.mxu0 0.0
        %2275 = vmatpush1.msra.mxu0 %v2243
        %2276 = vmatprep.subr.mxu0 0.0
        %2277 = vmatpush1.msra.mxu0 %v2242
        %2278 = vmatprep.subr.mxu0 0.0
        %2279 = vmatpush2.msra.mxu0 0.0
        %2280 = vmatprep.subr.mxu0 0.0
        %2281 = vmatpush2.msra.mxu0 0.0
        %2282 = vmatprep.subr.mxu0 0.0
        %2283 = vmatpush2.msra.mxu0 0.0
        %2284 = vmatprep.subr.mxu0 0.0
        %2285 = vmatpush2.msra.mxu0 0.0
        %2286 = vmatprep.subr.mxu0 0.0
        %2287 = vmatpush2.msra.mxu0 0.0
        %2288 = vmatprep.subr.mxu0 0.0
        %2289 = vmatpush2.msra.mxu0 0.0
        %2290 = vmatprep.subr.mxu0 0.0
        %2291 = vmatpush2.msra.mxu0 0.0
        %2292 = vmatprep.subr.mxu0 0.0
        %2293 = vmatpush2.msra.mxu0 0.0
        %2294 = vmatprep.subr.mxu0 0.0
        %2295 = vmatpush2.msra.mxu0 0.0
        %2296 = vmatprep.subr.mxu0 0.0
        %2297 = vmatpush2.msra.mxu0 0.0
        %2298 = vmatprep.subr.mxu0 0.0
        %2299 = vmatpush2.msra.mxu0 0.0
        %2300 = vmatprep.subr.mxu0 0.0
        %2301 = vmatpush2.msra.mxu0 0.0
        %2302 = vmatprep.subr.mxu0 0.0
        %2303 = vmatpush2.msra.mxu0 0.0
        %2304 = vmatprep.subr.mxu0 0.0
        %2305 = vmatpush2.msra.mxu0 0.0
        %2306 = vmatprep.subr.mxu0 0.0
        %2307 = vmatpush2.msra.mxu0 0.0
        %2308 = vmatprep.subr.mxu0 0.0
        %2309 = vmatpush2.msra.mxu0 0.0
        %2310 = vmatprep.mubr.f32.mxu0 0.0
        %2311 = vmatmul.mubr.f32.gmra.mxu0 %v2096
        %v2312 = vpop.f32.mrf.mxu0
        %v2313 = vadd.f32 %v652, %v2312
        %v2314 = vpop.f32.mrf.mxu0
        %2315 = vdwg.mxu0
        %v2316 = vadd.f32 %v2088, %v2165
        %v2317 = vxor.u32 %v2316, 2147483648
        %v2318 = vmul.f32 %v2317, 1.442695
        %v2319 = vpow.pop %v2318
        %v2320 = vadd.f32 %v2319, 1.0
        %v2321 = vrcp.pop %v2320
        %v2322 = vmul.f32 1.0, %v2321
        %v2323 = vadd.f32 %v2089, %v2239
        %v2324 = vxor.u32 %v2323, 2147483648
        %v2325 = vmul.f32 %v2324, 1.442695
        %v2326 = vpow.pop %v2325
        %v2327 = vadd.f32 %v2326, 1.0
        %v2328 = vrcp.pop %v2327
        %v2329 = vmul.f32 1.0, %v2328
        %v2330 = vmul.f32 %v2322, %v2313
        %v2331 = vadd.f32 %v2090, %v2330
        %v2332 = vtanh.pop %v2331
        %v2333 = vsub.f32 1.0, %v2329
        %v2334 = vmul.f32 %v2333, %v2332
        %v2335 = vmul.f32 %v2329, %v2086
        %v2336 = vadd.f32 %v2334, %v2335
        %v2337 = vsel %vm2085, 1, 0
        %2338 = vset.pattern.permute.xlu0 0
        %2339 = vperm.xlu0 %2338, %v2337
        %v2340 = vpop.permute.xlu0 %2339
        %vm2341 = vcmp.eq.s32.totalorder %v2340, 1
        %v2342 = vsel %vm2341, %v2336, %v2086
        %2343 = vst.msk [vmem:[#allocation2] sm:$0x3] %vm751, %v2342
        %v2344 = vsel %vm2341, %v2336, 0.0
        %s2345 = scalar_lea.vmem %s452, 6 [#allocation12]
        %2346 = vst.msk [vmem:[%s2345] sm:$0x3] %vm751, %v2344
        %v2347 = vstv %s483
        %vm2348 = vcmp.lt.s32.totalorder %v2347, %v478
        %v2349 = vld [vmem:[#allocation3] sm:$0x3]
        %v2350 = vld [vmem:[%s407] sm:$0x3]
        %v2351 = vld [vmem:[%s407 + $0x2] sm:$0x3]
        %v2352 = vld [vmem:[%s407 + $0x4] sm:$0x3]
        %v2353 = vld [vmem:[#allocation10] sm:$0xff]
        %v2354 = vld [vmem:[#allocation10 + $0x8] sm:$0xff]
        %v2355 = vld [vmem:[#allocation10 + $0x10] sm:$0xff]
        %v2356 = vld [vmem:[#allocation10 + $0x18] sm:$0xff]
        %v2358 = vsel %vm494, %v2349, 0
        %2360 = vmatprep.subr.mxu0 0.0
        %2361 = vmatpush1.msra.mxu0 0.0
        %2362 = vmatprep.subr.mxu0 0.0
        %2363 = vmatpush1.msra.mxu0 0.0
        %2364 = vmatprep.subr.mxu0 0.0
        %2365 = vmatpush1.msra.mxu0 0.0
        %2366 = vmatprep.subr.mxu0 0.0
        %2367 = vmatpush1.msra.mxu0 0.0
        %2368 = vmatprep.subr.mxu0 0.0
        %2369 = vmatpush1.msra.mxu0 0.0
        %2370 = vmatprep.subr.mxu0 0.0
        %2371 = vmatpush1.msra.mxu0 0.0
        %2372 = vmatprep.subr.mxu0 0.0
        %2373 = vmatpush1.msra.mxu0 0.0
        %2374 = vmatprep.subr.mxu0 0.0
        %2375 = vmatpush1.msra.mxu0 0.0
        %2376 = vmatprep.subr.mxu0 0.0
        %2377 = vmatpush1.msra.mxu0 0.0
        %2378 = vmatprep.subr.mxu0 0.0
        %2379 = vmatpush1.msra.mxu0 0.0
        %2380 = vmatprep.subr.mxu0 0.0
        %2381 = vmatpush1.msra.mxu0 0.0
        %2382 = vmatprep.subr.mxu0 0.0
        %2383 = vmatpush1.msra.mxu0 0.0
        %2384 = vmatprep.subr.mxu0 0.0
        %2385 = vmatpush1.msra.mxu0 %v2356
        %2386 = vmatprep.subr.mxu0 0.0
        %2387 = vmatpush1.msra.mxu0 %v2355
        %2388 = vmatprep.subr.mxu0 0.0
        %2389 = vmatpush1.msra.mxu0 %v2354
        %2390 = vmatprep.subr.mxu0 0.0
        %2391 = vmatpush1.msra.mxu0 %v2353
        %2392 = vmatprep.subr.mxu0 0.0
        %2393 = vmatpush2.msra.mxu0 0.0
        %2394 = vmatprep.subr.mxu0 0.0
        %2395 = vmatpush2.msra.mxu0 0.0
        %2396 = vmatprep.subr.mxu0 0.0
        %2397 = vmatpush2.msra.mxu0 0.0
        %2398 = vmatprep.subr.mxu0 0.0
        %2399 = vmatpush2.msra.mxu0 0.0
        %2400 = vmatprep.subr.mxu0 0.0
        %2401 = vmatpush2.msra.mxu0 0.0
        %2402 = vmatprep.subr.mxu0 0.0
        %2403 = vmatpush2.msra.mxu0 0.0
        %2404 = vmatprep.subr.mxu0 0.0
        %2405 = vmatpush2.msra.mxu0 0.0
        %2406 = vmatprep.subr.mxu0 0.0
        %2407 = vmatpush2.msra.mxu0 0.0
        %2408 = vmatprep.subr.mxu0 0.0
        %2409 = vmatpush2.msra.mxu0 0.0
        %2410 = vmatprep.subr.mxu0 0.0
        %2411 = vmatpush2.msra.mxu0 0.0
        %2412 = vmatprep.subr.mxu0 0.0
        %2413 = vmatpush2.msra.mxu0 0.0
        %2414 = vmatprep.subr.mxu0 0.0
        %2415 = vmatpush2.msra.mxu0 0.0
        %2416 = vmatprep.subr.mxu0 0.0
        %2417 = vmatpush2.msra.mxu0 0.0
        %2418 = vmatprep.subr.mxu0 0.0
        %2419 = vmatpush2.msra.mxu0 0.0
        %2420 = vmatprep.subr.mxu0 0.0
        %2421 = vmatpush2.msra.mxu0 0.0
        %2422 = vmatprep.subr.mxu0 0.0
        %2423 = vmatpush2.msra.mxu0 0.0
        %2424 = vmatprep.mubr.f32.mxu0 0.0
        %2425 = vmatmul.mubr.f32.gmra.mxu0 %v2358
        %v2426 = vpop.f32.mrf.mxu0
        %v2427 = vadd.f32 0.0, %v2426
        %v2428 = vpop.f32.mrf.mxu0
        %2429 = vdwg.mxu0
        %v2430 = vld [vmem:[%s840] sm:$0xff]
        %v2431 = vld [vmem:[%s840 + $0x8] sm:$0xff]
        %v2432 = vld [vmem:[%s840 + $0x10] sm:$0xff]
        %v2433 = vld [vmem:[%s840 + $0x18] sm:$0xff]
        %2434 = vmatprep.subr.mxu0 0.0
        %2435 = vmatpush1.msra.mxu0 0.0
        %2436 = vmatprep.subr.mxu0 0.0
        %2437 = vmatpush1.msra.mxu0 0.0
        %2438 = vmatprep.subr.mxu0 0.0
        %2439 = vmatpush1.msra.mxu0 0.0
        %2440 = vmatprep.subr.mxu0 0.0
        %2441 = vmatpush1.msra.mxu0 0.0
        %2442 = vmatprep.subr.mxu0 0.0
        %2443 = vmatpush1.msra.mxu0 0.0
        %2444 = vmatprep.subr.mxu0 0.0
        %2445 = vmatpush1.msra.mxu0 0.0
        %2446 = vmatprep.subr.mxu0 0.0
        %2447 = vmatpush1.msra.mxu0 0.0
        %2448 = vmatprep.subr.mxu0 0.0
        %2449 = vmatpush1.msra.mxu0 0.0
        %2450 = vmatprep.subr.mxu0 0.0
        %2451 = vmatpush1.msra.mxu0 0.0
        %2452 = vmatprep.subr.mxu0 0.0
        %2453 = vmatpush1.msra.mxu0 0.0
        %2454 = vmatprep.subr.mxu0 0.0
        %2455 = vmatpush1.msra.mxu0 0.0
        %2456 = vmatprep.subr.mxu0 0.0
        %2457 = vmatpush1.msra.mxu0 0.0
        %2458 = vmatprep.subr.mxu0 0.0
        %2459 = vmatpush1.msra.mxu0 %v2433
        %2460 = vmatprep.subr.mxu0 0.0
        %2461 = vmatpush1.msra.mxu0 %v2432
        %2462 = vmatprep.subr.mxu0 0.0
        %2463 = vmatpush1.msra.mxu0 %v2431
        %2464 = vmatprep.subr.mxu0 0.0
        %2465 = vmatpush1.msra.mxu0 %v2430
        %2466 = vmatprep.subr.mxu0 0.0
        %2467 = vmatpush2.msra.mxu0 0.0
        %2468 = vmatprep.subr.mxu0 0.0
        %2469 = vmatpush2.msra.mxu0 0.0
        %2470 = vmatprep.subr.mxu0 0.0
        %2471 = vmatpush2.msra.mxu0 0.0
        %2472 = vmatprep.subr.mxu0 0.0
        %2473 = vmatpush2.msra.mxu0 0.0
        %2474 = vmatprep.subr.mxu0 0.0
        %2475 = vmatpush2.msra.mxu0 0.0
        %2476 = vmatprep.subr.mxu0 0.0
        %2477 = vmatpush2.msra.mxu0 0.0
        %2478 = vmatprep.subr.mxu0 0.0
        %2479 = vmatpush2.msra.mxu0 0.0
        %2480 = vmatprep.subr.mxu0 0.0
        %2481 = vmatpush2.msra.mxu0 0.0
        %2482 = vmatprep.subr.mxu0 0.0
        %2483 = vmatpush2.msra.mxu0 0.0
        %2484 = vmatprep.subr.mxu0 0.0
        %2485 = vmatpush2.msra.mxu0 0.0
        %2486 = vmatprep.subr.mxu0 0.0
        %2487 = vmatpush2.msra.mxu0 0.0
        %2488 = vmatprep.subr.mxu0 0.0
        %2489 = vmatpush2.msra.mxu0 0.0
        %2490 = vmatprep.subr.mxu0 0.0
        %2491 = vmatpush2.msra.mxu0 0.0
        %2492 = vmatprep.subr.mxu0 0.0
        %2493 = vmatpush2.msra.mxu0 0.0
        %2494 = vmatprep.subr.mxu0 0.0
        %2495 = vmatpush2.msra.mxu0 0.0
        %2496 = vmatprep.subr.mxu0 0.0
        %2497 = vmatpush2.msra.mxu0 0.0
        %2498 = vmatprep.mubr.f32.mxu0 0.0
        %2499 = vmatmul.mubr.f32.gmra.mxu0 %v2358
        %v2500 = vpop.f32.mrf.mxu0
        %v2501 = vadd.f32 0.0, %v2500
        %v2502 = vpop.f32.mrf.mxu0
        %2503 = vdwg.mxu0
        %v2504 = vld [vmem:[%s915] sm:$0xff]
        %v2505 = vld [vmem:[%s915 + $0x8] sm:$0xff]
        %v2506 = vld [vmem:[%s915 + $0x10] sm:$0xff]
        %v2507 = vld [vmem:[%s915 + $0x18] sm:$0xff]
        %2508 = vmatprep.subr.mxu0 0.0
        %2509 = vmatpush1.msra.mxu0 0.0
        %2510 = vmatprep.subr.mxu0 0.0
        %2511 = vmatpush1.msra.mxu0 0.0
        %2512 = vmatprep.subr.mxu0 0.0
        %2513 = vmatpush1.msra.mxu0 0.0
        %2514 = vmatprep.subr.mxu0 0.0
        %2515 = vmatpush1.msra.mxu0 0.0
        %2516 = vmatprep.subr.mxu0 0.0
        %2517 = vmatpush1.msra.mxu0 0.0
        %2518 = vmatprep.subr.mxu0 0.0
        %2519 = vmatpush1.msra.mxu0 0.0
        %2520 = vmatprep.subr.mxu0 0.0
        %2521 = vmatpush1.msra.mxu0 0.0
        %2522 = vmatprep.subr.mxu0 0.0
        %2523 = vmatpush1.msra.mxu0 0.0
        %2524 = vmatprep.subr.mxu0 0.0
        %2525 = vmatpush1.msra.mxu0 0.0
        %2526 = vmatprep.subr.mxu0 0.0
        %2527 = vmatpush1.msra.mxu0 0.0
        %2528 = vmatprep.subr.mxu0 0.0
        %2529 = vmatpush1.msra.mxu0 0.0
        %2530 = vmatprep.subr.mxu0 0.0
        %2531 = vmatpush1.msra.mxu0 0.0
        %2532 = vmatprep.subr.mxu0 0.0
        %2533 = vmatpush1.msra.mxu0 %v2507
        %2534 = vmatprep.subr.mxu0 0.0
        %2535 = vmatpush1.msra.mxu0 %v2506
        %2536 = vmatprep.subr.mxu0 0.0
        %2537 = vmatpush1.msra.mxu0 %v2505
        %2538 = vmatprep.subr.mxu0 0.0
        %2539 = vmatpush1.msra.mxu0 %v2504
        %2540 = vmatprep.subr.mxu0 0.0
        %2541 = vmatpush2.msra.mxu0 0.0
        %2542 = vmatprep.subr.mxu0 0.0
        %2543 = vmatpush2.msra.mxu0 0.0
        %2544 = vmatprep.subr.mxu0 0.0
        %2545 = vmatpush2.msra.mxu0 0.0
        %2546 = vmatprep.subr.mxu0 0.0
        %2547 = vmatpush2.msra.mxu0 0.0
        %2548 = vmatprep.subr.mxu0 0.0
        %2549 = vmatpush2.msra.mxu0 0.0
        %2550 = vmatprep.subr.mxu0 0.0
        %2551 = vmatpush2.msra.mxu0 0.0
        %2552 = vmatprep.subr.mxu0 0.0
        %2553 = vmatpush2.msra.mxu0 0.0
        %2554 = vmatprep.subr.mxu0 0.0
        %2555 = vmatpush2.msra.mxu0 0.0
        %2556 = vmatprep.subr.mxu0 0.0
        %2557 = vmatpush2.msra.mxu0 0.0
        %2558 = vmatprep.subr.mxu0 0.0
        %2559 = vmatpush2.msra.mxu0 0.0
        %2560 = vmatprep.subr.mxu0 0.0
        %2561 = vmatpush2.msra.mxu0 0.0
        %2562 = vmatprep.subr.mxu0 0.0
        %2563 = vmatpush2.msra.mxu0 0.0
        %2564 = vmatprep.subr.mxu0 0.0
        %2565 = vmatpush2.msra.mxu0 0.0
        %2566 = vmatprep.subr.mxu0 0.0
        %2567 = vmatpush2.msra.mxu0 0.0
        %2568 = vmatprep.subr.mxu0 0.0
        %2569 = vmatpush2.msra.mxu0 0.0
        %2570 = vmatprep.subr.mxu0 0.0
        %2571 = vmatpush2.msra.mxu0 0.0
        %2572 = vmatprep.mubr.f32.mxu0 0.0
        %2573 = vmatmul.mubr.f32.gmra.mxu0 %v2358
        %v2574 = vpop.f32.mrf.mxu0
        %v2575 = vadd.f32 %v924, %v2574
        %v2576 = vpop.f32.mrf.mxu0
        %2577 = vdwg.mxu0
        %v2578 = vadd.f32 %v2350, %v2427
        %v2579 = vxor.u32 %v2578, 2147483648
        %v2580 = vmul.f32 %v2579, 1.442695
        %v2581 = vpow.pop %v2580
        %v2582 = vadd.f32 %v2581, 1.0
        %v2583 = vrcp.pop %v2582
        %v2584 = vmul.f32 1.0, %v2583
        %v2585 = vadd.f32 %v2351, %v2501
        %v2586 = vxor.u32 %v2585, 2147483648
        %v2587 = vmul.f32 %v2586, 1.442695
        %v2588 = vpow.pop %v2587
        %v2589 = vadd.f32 %v2588, 1.0
        %v2590 = vrcp.pop %v2589
        %v2591 = vmul.f32 1.0, %v2590
        %v2592 = vmul.f32 %v2584, %v2575
        %v2593 = vadd.f32 %v2352, %v2592
        %v2594 = vtanh.pop %v2593
        %v2595 = vsub.f32 1.0, %v2591
        %v2596 = vmul.f32 %v2595, %v2594
        %v2597 = vmul.f32 %v2591, %v2349
        %v2598 = vadd.f32 %v2596, %v2597
        %v2599 = vsel %vm2348, 1, 0
        %2600 = vset.pattern.permute.xlu0 0
        %2601 = vperm.xlu0 %2600, %v2599
        %v2602 = vpop.permute.xlu0 %2601
        %vm2603 = vcmp.eq.s32.totalorder %v2602, 1
        %v2604 = vsel %vm2603, %v2598, %v2349
        %2605 = vst.msk [vmem:[#allocation3] sm:$0x3] %vm751, %v2604
        %v2606 = vsel %vm2603, %v2598, 0.0
        %2607 = vst.msk [vmem:[%s459] sm:$0x3] %vm751, %v2606
        %p2608 = scmp.eq.s32.totalorder %s35, 1
        // Predicated region
        $region73: #{tpu_custom_call.1} parent=51 // pred_check
          %p2609 = pneg %p2608
        $region74: #{tpu_custom_call.1} parent=51 // pred_check_branch
          %2611 = sbr.rel (%p2609) target = $region76
        $region75: #{tpu_custom_call.1} parent=51 // pred_region
          %v2612 = vld [vmem:[#allocation2] sm:$0x3]
          %2613 = vst.msk [vmem:[#allocation15] sm:$0x3] %vm751, %v2612
          %v2614 = vld [vmem:[#allocation3] sm:$0x3]
          %s2615 = scalar_lea.vmem [#allocation15], 2
          %2616 = vst.msk [vmem:[%s2615] sm:$0x3] %vm751, %v2614
        $region76: #{tpu_custom_call.1} parent=51 // pred_fallthru
          _
        %s2617 = sand.u32 %s223, 1
        %s2618 = scalar_lea.sflag [#allocation6], %s2617
        %s2619 = sand.u32 %s223, 1
        %s2620 = smul.addr %s2619, 8
        %s2621 = scalar_lea.vmem [#allocation12], %s2620
        %s2622 = sand.u32 %s35, 1
        %s2623 = scalar_lea.sflag [#allocation14], %s2622
        %s2624 = sand.u32 %s251, 1
        %s2625 = smul.addr %s2624, 8
        %s2626 = scalar_lea.vmem [#allocation13], %s2625
        // Predicated region
        $region77: #{tpu_custom_call.1} parent=51 // pred_check
          %p2627 = pneg %p233
        $region78: #{tpu_custom_call.1} parent=51 // pred_check_branch
          %2629 = sbr.rel (%p2627) target = $region80
        $region79: #{tpu_custom_call.1} parent=51 // pred_region
          %s2630 = smul.u32 4, %s35
          %s2632 = ssub.s32 128, 128
          %2633 = vsyncadd %s2618, %s2632
          %s2634 = smul.addr %s2630, 32
          %s2635 = scalar_lea.hbm %s8, %s2634
          %s2636 = sshll.u32 %s2621, 4
          %s2637 = int_to_ptr.vmem [resolvable:$true] %s2636
          %2642 = dma.vmem_to_hbm [thread:$0]  %s2637, 128, %s2635, %s2618, 32, 32, 2
        $region80: #{tpu_custom_call.1} parent=51 // pred_fallthru
          _
        // Predicated region
        $region81: #{tpu_custom_call.1} parent=51 // pred_check
          %p2643 = pneg %p261
        $region82: #{tpu_custom_call.1} parent=51 // pred_check_branch
          %2645 = sbr.rel (%p2643) target = $region84
        $region83: #{tpu_custom_call.1} parent=51 // pred_region
          %s2646 = ssub.s32 1, %s35
          %s2647 = smul.u32 4, %s2646
          %s2649 = ssub.s32 128, 128
          %2650 = vsyncadd %s2623, %s2649
          %s2651 = smul.addr %s2647, 32
          %s2652 = scalar_lea.hbm %s9, %s2651
          %s2653 = sshll.u32 %s2626, 4
          %s2654 = int_to_ptr.vmem [resolvable:$true] %s2653
          %2659 = dma.vmem_to_hbm [thread:$0]  %s2654, 128, %s2652, %s2623, 32, 32, 2
        $region84: #{tpu_custom_call.1} parent=51 // pred_fallthru
          _
        // Predicated region
        $region85: #{tpu_custom_call.1} parent=51 // pred_check
          %p2660 = pneg %p282
        $region86: #{tpu_custom_call.1} parent=51 // pred_check_branch
          %2662 = sbr.rel (%p2660) target = $region88
        $region87: #{tpu_custom_call.1} parent=51 // pred_region
          %s2664 = ssub.s32 64, 64
          %2665 = vsyncadd [#allocation14], %s2664
          %s2666 = sshll.u32 [#allocation15], 4
          %s2667 = int_to_ptr.vmem [resolvable:$true] %s2666
          %2672 = dma.vmem_to_hbm [thread:$0]  %s2667, 64, %s10, [#allocation14], 32, 32, 2
        $region88: #{tpu_custom_call.1} parent=51 // pred_fallthru
          _
        // Predicated region
        $region89: #{tpu_custom_call.1} parent=51 // pred_check
          %p2673 = pneg %p282
        $region90: #{tpu_custom_call.1} parent=51 // pred_check_branch
          %2675 = sbr.rel (%p2673) target = $region92
        $region91: #{tpu_custom_call.1} parent=51 // pred_region
          %2676 = dma.done [#allocation14], 64
        $region92: #{tpu_custom_call.1} parent=51 // pred_fallthru
          _
      $region52: #{tpu_custom_call.1} parent=5 // pred_fallthru
        _
      %p2677 = scmp.le.s32.totalorder 2, %s30
      // Predicated region
      $region93: #{tpu_custom_call.1} parent=5 // pred_check
        %p2678 = pneg %p2677
      $region94: #{tpu_custom_call.1} parent=5 // pred_check_branch
        %2680 = sbr.rel (%p2678) target = $region96
      $region95: #{tpu_custom_call.1} parent=5 // pred_region
        %s2681 = ssub.s32 %s30, 2
        // Predicated region
        $region97: #{tpu_custom_call.1} parent=95 // pred_check
          %p2682 = pneg %p239
        $region98: #{tpu_custom_call.1} parent=95 // pred_check_branch
          %2684 = sbr.rel (%p2682) target = $region100
        $region99: #{tpu_custom_call.1} parent=95 // pred_region
          %s2685 = sand.u32 %s224, 1
          %s2686 = scalar_lea.sflag [#allocation6], %s2685
          %s2687 = sand.u32 %s224, 1
          %s2688 = smul.addr %s2687, 8
          %s2689 = scalar_lea.vmem [#allocation12], %s2688
          %2690 = dma.done %s2686, 128
        $region100: #{tpu_custom_call.1} parent=95 // pred_fallthru
          _
        // Predicated region
        $region101: #{tpu_custom_call.1} parent=95 // pred_check
          %p2691 = pneg %p267
        $region102: #{tpu_custom_call.1} parent=95 // pred_check_branch
          %2693 = sbr.rel (%p2691) target = $region104
        $region103: #{tpu_custom_call.1} parent=95 // pred_region
          %s2694 = sand.u32 %s36, 1
          %s2695 = scalar_lea.sflag [#allocation14], %s2694
          %s2696 = sand.u32 %s252, 1
          %s2697 = smul.addr %s2696, 8
          %s2698 = scalar_lea.vmem [#allocation13], %s2697
          %2699 = dma.done %s2695, 128
        $region104: #{tpu_custom_call.1} parent=95 // pred_fallthru
          _
      $region96: #{tpu_custom_call.1} parent=5 // pred_fallthru
        _
    $region6: #{tpu_custom_call.1} parent=1 // loop_footer
      %s34 = sadd.s32 1, %s30
    $region7: #{tpu_custom_call.1} parent=1 // loop_footer_branch
      %29 = sbr.rel target = $region3
    $region8: #{tpu_custom_call.1} parent=1 // loop_exit
      _
    %2700 = vsyncpa [#allocation5], 1
    %s2701 = scalar_lea.sflag [#allocation5], 1
    %2702 = vsyncpa %s2701, 1
    %2703 = vsyncpa [#allocation8], 1
    %s2704 = scalar_lea.sflag [#allocation8], 1
    %2705 = vsyncpa %s2704, 1
    %2706 = vsyncpa [#allocation11], 1
    %2707 = vsyncpa [#allocation6], 1
    %s2708 = scalar_lea.sflag [#allocation6], 1
    %2709 = vsyncpa %s2708, 1
    %2710 = vsyncpa [#allocation14], 1
    %s2711 = scalar_lea.sflag [#allocation14], 1
    %2712 = vsyncpa %s2711, 1

</llo_original>
